<compile_context>
chip_gen: v6e
topology: v6e:2x2x1
jax: 0.10.0
libtpu: 0.0.40
codegen_flags: <defaults>
</compile_context>

<pallas_src>
import functools

import jax
import jax.numpy as jnp
from jax.experimental import pallas as pl
from jax.experimental.pallas import tpu as pltpu


def _round_up(x, m):
    return (x + m - 1) // m * m


def _char_cnn_kernel(seq_len, hid_pad,
                     patches_ref, wbig_ref, valid_ref, bias_ref,
                     whw_ref, bhw_ref, out_ref):
    """Fused conv (all widths, one matmul) -> mask -> max -> +bias -> tanh -> Highway."""
    tb = out_ref.shape[0]

    # (1) Conv for every filter width / tap as ONE 2-D MXU matmul:
    #     (TB*L, Kc) @ (Kc, Hp)   with M = TB*L, K = w_max*C, N = Hp = 128.
    z = jnp.dot(patches_ref[...], wbig_ref[...],
                preferred_element_type=jnp.float32)          # (TB*L, Hp)
    # Layout-free reshape: L is a multiple of 8 (sublane tile), Hp = 128 lanes.
    z = z.reshape(tb, seq_len, hid_pad)                      # (TB, L, Hp)

    # (2) Mask invalid time positions (per filter width) with a select, then
    #     max over time (sublane reduce on the XLU -- separate VLIW slot).
    neg = jnp.finfo(jnp.float32).min
    z = jnp.where(valid_ref[...][None] != 0.0, z, neg)
    m = jnp.max(z, axis=1)                                    # (TB, Hp)

    # (3) Conv bias after the max (bias constant over time), tanh after that
    #     (tanh monotone) -> identical to max(tanh(conv + b)).
    feat = jnp.tanh(m + bias_ref[...])                        # (TB, Hp); padded cols stay 0

    # (4) Highway, both matmuls fused: (TB, 128) @ (128, 256) then split.
    hw = jnp.dot(feat, whw_ref[...], preferred_element_type=jnp.float32) + bhw_ref[...]
    t = jax.nn.sigmoid(hw[:, :hid_pad])                       # gate
    h = jnp.maximum(hw[:, hid_pad:], 0.0)                     # relu(fc(x))
    out_ref[...] = (t * h + (1.0 - t) * feat).astype(out_ref.dtype)


def prepare_fused_params(params, filter_num_width, input_dim, seq_len):
    """Build the fused / lane-padded parameters the kernel consumes."""
    widths = list(filter_num_width.keys())
    nks = [filter_num_width[w] for w in widths]
    H = sum(nks)
    Hp = _round_up(H, 128)
    w_max = max(widths)
    C = input_dim
    Kc = w_max * C
    assert seq_len >= w_max, "sequence must be at least as long as the widest filter"

    w_big = jnp.zeros((Kc, Hp), jnp.float32)
    bias = jnp.zeros((1, Hp), jnp.float32)
    # valid[t, col] == 1.0 iff time step t is a valid conv output for col's
    # filter width. Padded columns (col >= H) stay valid so their max is 0.
    valid = jnp.ones((seq_len, Hp), jnp.float32)
    col = 0
    for w, nk in zip(widths, nks):
        # conv_w_{w}: (w, C, nk) -> im2col rows k*C + c (left-aligned taps).
        w_big = w_big.at[:w * C, col:col + nk].set(params[f'conv_w_{w}'].reshape(w * C, nk))
        bias = bias.at[0, col:col + nk].set(params[f'conv_b_{w}'][0])
        lout = seq_len - w + 1
        col_valid = (jnp.arange(seq_len)[:, None] < lout).astype(jnp.float32)
        valid = valid.at[:, col:col + nk].set(jnp.broadcast_to(col_valid, (seq_len, nk)))
        col += nk

    def pad_mat(m):
        return jnp.zeros((Hp, Hp), jnp.float32).at[:H, :H].set(m)

    def pad_vec(v):
        return jnp.zeros((1, Hp), jnp.float32).at[:, :H].set(v)

    # Fused highway weights: [W_gate | W_fc] -> one (Hp, 2*Hp) MXU matmul.
    w_hw = jnp.concatenate([pad_mat(params['wg_t']), pad_mat(params['wf_t'])], axis=1)
    b_hw = jnp.concatenate([pad_vec(params['bg']), pad_vec(params['bf'])], axis=1)

    return {
        'w_big': w_big, 'valid': valid, 'bias': bias,
        'w_hw': w_hw, 'b_hw': b_hw,
        'H': H, 'Hp': Hp, 'w_max': w_max, 'C': C, 'L': seq_len, 'Kc': Kc,
    }


def char_level_cnn_forward(inp, fused, *, num_tiles=1,
                           dimension_semantics=("parallel",),
                           return_padded=False):
    """inp: (1, B, L, C_in) mirroring the PyTorch module's expected input.

    num_tiles=1 (default) = one grid step (best on v5e/v6e, single TensorCore).
    On v7x use num_tiles=2 and dimension_semantics=(pltpu.CORE_PARALLEL,) so the
    batch halves actually shard across the two TensorCores.
    return_padded=True skips the trailing (B, H) slice and hands back the
    lane-dense (B_pad, 128) slab (zero in padded columns/rows).
    """
    x = inp[0]                                       # squeeze(0) -> (B, L, C)
    B, L, C = x.shape
    w_max, H, Hp, Kc = fused['w_max'], fused['H'], fused['Hp'], fused['Kc']
    assert L == fused['L'] and C == fused['C']

    B_pad = _round_up(B, 8 * num_tiles)
    TB = B_pad // num_tiles

    # Wrapper-side im2col: sequence pad + tap windows + reshape fuse into one
    # XLA op producing a 2-D (B_pad*L, Kc) patch slab.  The kernel then does no
    # slicing/concatenation and sees a single large MXU matmul.
    x_seq = jnp.pad(x.astype(jnp.float32),
                    ((0, B_pad - B), (0, w_max - 1), (0, 0)))
    patches = jnp.concatenate([x_seq[:, k:k + L, :] for k in range(w_max)], axis=-1)
    patches = patches.reshape(B_pad * L, Kc)

    kernel = functools.partial(_char_cnn_kernel, L, Hp)
    out = pl.pallas_call(
        kernel,
        out_shape=jax.ShapeDtypeStruct((B_pad, Hp), jnp.float32),
        grid=(num_tiles,),
        in_specs=[
            pl.BlockSpec((TB * L, Kc), lambda i: (i, 0)),       # patches (row-split)
            pl.BlockSpec((Kc, Hp), lambda i: (0, 0)),           # fused conv weight
            pl.BlockSpec((L, Hp), lambda i: (0, 0)),            # valid-time mask
            pl.BlockSpec((1, Hp), lambda i: (0, 0)),            # conv bias
            pl.BlockSpec((Hp, 2 * Hp), lambda i: (0, 0)),       # fused highway weight
            pl.BlockSpec((1, 2 * Hp), lambda i: (0, 0)),        # fused highway bias
        ],
        out_specs=pl.BlockSpec((TB, Hp), lambda i: (i, 0)),
        compiler_params=pltpu.CompilerParams(
            dimension_semantics=dimension_semantics),
    )(patches, fused['w_big'], fused['valid'], fused['bias'],
      fused['w_hw'], fused['b_hw'])

    if return_padded:
        return out
    return out[:B, :H]


def _weight_norm(v):
    # nn.utils.weight_norm(..., dim=None): w = g * v / ||v||_F with g init = ||v||_F.
    # At initialization this is algebraically the identity; kept for clarity.
    g = jnp.sqrt(jnp.sum(v * v))
    return g * v / jnp.sqrt(jnp.sum(v * v))


def init_params(key, input_dim, filter_num_width):
    widths = list(filter_num_width.keys())
    H = sum(filter_num_width.values())
    keys = jax.random.split(key, 2 * len(widths) + 4)
    params = {}
    ki = 0
    for w in widths:
        nk = filter_num_width[w]
        v = 0.1 * jax.random.normal(keys[ki], (nk, input_dim, w), jnp.float32); ki += 1
        w_eff = _weight_norm(v)                                   # PyTorch (O, I, W)
        params[f'conv_w_{w}'] = jnp.transpose(w_eff, (2, 1, 0))   # kernel layout (W, I, O)
        params[f'conv_b_{w}'] = 0.1 * jax.random.normal(keys[ki], (1, nk), jnp.float32); ki += 1
    vg = 0.1 * jax.random.normal(keys[ki], (H, H), jnp.float32); ki += 1
    params['wg_t'] = _weight_norm(vg).T     # pre-transposed so kernel does feat @ W.T
    params['bg'] = 0.1 * jax.random.normal(keys[ki], (1, H), jnp.float32); ki += 1
    vf = 0.1 * jax.random.normal(keys[ki], (H, H), jnp.float32); ki += 1
    params['wf_t'] = _weight_norm(vf).T
    params['bf'] = 0.1 * jax.random.normal(keys[ki], (1, H), jnp.float32); ki += 1
    return params


def reference_forward(inp, params, filter_num_width):
    """Pure-JAX reference reproducing the PyTorch forward (NCL Conv1d path)."""
    x = inp[0]                                  # (B, L, C)
    x_ncl = jnp.transpose(x, (0, 2, 1))         # (B, C, L) == PyTorch transpose(1, 2)
    feats = []
    for w, nk in filter_num_width.items():
        w_oiw = jnp.transpose(params[f'conv_w_{w}'], (2, 1, 0))   # (O, I, W)
        y = jax.lax.conv_general_dilated(
            x_ncl, w_oiw, window_strides=(1,), padding='VALID',
            dimension_numbers=('NCH', 'OIH', 'NCH'))
        y = y + params[f'conv_b_{w}'][0][None, :, None]
        feats.append(jnp.max(jnp.tanh(y), axis=2))
    feat = jnp.concatenate(feats, axis=1)
    t = jax.nn.sigmoid(feat @ params['wg_t'] + params['bg'])
    h = jax.nn.relu(feat @ params['wf_t'] + params['bf'])
    return t * h + (1.0 - t) * feat


if __name__ == "__main__":
    B, L, C = 128, 16, 8                         # batch, seq length, char-embedding dim
    filter_num_width = {2: 16, 3: 16, 5: 32}     # filter_width -> n_kernels (H = 64)

    key = jax.random.PRNGKey(0)
    k_in, k_par = jax.random.split(key)
    inp = jax.random.normal(k_in, (1, B, L, C), jnp.float32)   # (1, B, L, input_dim)
    params = init_params(k_par, C, filter_num_width)
    fused = prepare_fused_params(params, filter_num_width, C, L)

    # Default: one grid step on a single TensorCore (v5e/v6e).  On v7x:
    #   char_level_cnn_forward(inp, fused, num_tiles=2,
    #                          dimension_semantics=(pltpu.CORE_PARALLEL,))
    out = char_level_cnn_forward(inp, fused, num_tiles=1)
    out = jax.block_until_ready(out)

    ref = reference_forward(inp, params, filter_num_width)
    assert out.shape == (B, sum(filter_num_width.values()))
    assert jnp.allclose(out, ref, rtol=1e-5, atol=1e-5), "Pallas kernel mismatch vs JAX reference"

    print("KERNEL_OK")
</pallas_src>

<mosaic_0001>
module attributes {stable_mosaic.version = 11 : i64} {
  func.func @_char_cnn_kernel(%arg0: i32, %arg1: memref<2048x40xf32, #tpu.memory_space<vmem>>, %arg2: memref<40x128xf32, #tpu.memory_space<vmem>>, %arg3: memref<16x128xf32, #tpu.memory_space<vmem>>, %arg4: memref<1x128xf32, #tpu.memory_space<vmem>>, %arg5: memref<128x256xf32, #tpu.memory_space<vmem>>, %arg6: memref<1x256xf32, #tpu.memory_space<vmem>>, %arg7: memref<128x128xf32, #tpu.memory_space<vmem>>) attributes {dimension_semantics = [#tpu.dimension_semantics<parallel>], iteration_bounds = array<i64: 1>, scalar_prefetch = 0 : i64, scratch_operands = 0 : i64, tpu.core_type = #tpu.core_type<tc>, window_params = [{transform_indices = @transform_0, window_bounds = array<i64: 2048, 40>}, {pipeline_mode = #tpu.pipeline_mode<synchronous>, transform_indices = @transform_1, window_bounds = array<i64: 40, 128>}, {pipeline_mode = #tpu.pipeline_mode<synchronous>, transform_indices = @transform_2, window_bounds = array<i64: 16, 128>}, {pipeline_mode = #tpu.pipeline_mode<synchronous>, transform_indices = @transform_3, window_bounds = array<i64: 1, 128>}, {pipeline_mode = #tpu.pipeline_mode<synchronous>, transform_indices = @transform_4, window_bounds = array<i64: 128, 256>}, {pipeline_mode = #tpu.pipeline_mode<synchronous>, transform_indices = @transform_5, window_bounds = array<i64: 1, 256>}, {transform_indices = @transform_6, window_bounds = array<i64: 128, 128>}]} {
    %c0 = arith.constant 0 : index
    %c0_0 = arith.constant 0 : index
    %0 = vector.load %arg1[%c0, %c0_0] : memref<2048x40xf32, #tpu.memory_space<vmem>>, vector<2048x40xf32>
    %c0_1 = arith.constant 0 : index
    %c0_2 = arith.constant 0 : index
    %1 = vector.load %arg2[%c0_1, %c0_2] : memref<40x128xf32, #tpu.memory_space<vmem>>, vector<40x128xf32>
    %cst = arith.constant dense<0.000000e+00> : vector<2048x128xf32>
    %2 = tpu.matmul %0, %1, %cst {dimension_numbers = #tpu.dot_dimension_numbers<[1], [0], [0], [1], [0, 0, 1, 1], [], []>} : vector<2048x40xf32>, vector<40x128xf32>, vector<2048x128xf32> -> vector<2048x128xf32>
    %3 = vector.shape_cast %2 : vector<2048x128xf32> to vector<128x16x128xf32>
    %c0_3 = arith.constant 0 : index
    %c0_4 = arith.constant 0 : index
    %4 = vector.load %arg3[%c0_3, %c0_4] : memref<16x128xf32, #tpu.memory_space<vmem>>, vector<16x128xf32>
    %5 = vector.shape_cast %4 : vector<16x128xf32> to vector<1x16x128xf32>
    %cst_5 = arith.constant 0.000000e+00 : f32
    %6 = vector.broadcast %cst_5 : f32 to vector<1x16x128xf32>
    %7 = arith.cmpf one, %5, %6 : vector<1x16x128xf32>
    %cst_6 = arith.constant -3.40282347E+38 : f32
    %8 = vector.shape_cast %7 : vector<1x16x128xi1> to vector<1x16x128xi1>
    %9 = vector.broadcast %8 : vector<1x16x128xi1> to vector<128x16x128xi1>
    %10 = vector.broadcast %cst_6 : f32 to vector<128x16x128xf32>
    %11 = arith.select %9, %3, %10 : vector<128x16x128xi1>, vector<128x16x128xf32>
    %cst_7 = arith.constant dense<0xFF800000> : vector<128x128xf32>
    %12 = vector.multi_reduction <maximumf>, %11, %cst_7 [1] : vector<128x16x128xf32> to vector<128x128xf32>
    %c0_8 = arith.constant 0 : index
    %c0_9 = arith.constant 0 : index
    %13 = vector.load %arg4[%c0_8, %c0_9] : memref<1x128xf32, #tpu.memory_space<vmem>>, vector<1x128xf32>
    %14 = vector.broadcast %13 : vector<1x128xf32> to vector<128x128xf32>
    %15 = arith.addf %12, %14 : vector<128x128xf32>
    %16 = math.tanh %15 : vector<128x128xf32>
    %c0_10 = arith.constant 0 : index
    %c0_11 = arith.constant 0 : index
    %17 = vector.load %arg5[%c0_10, %c0_11] : memref<128x256xf32, #tpu.memory_space<vmem>>, vector<128x256xf32>
    %cst_12 = arith.constant dense<0.000000e+00> : vector<128x256xf32>
    %18 = tpu.matmul %16, %17, %cst_12 {dimension_numbers = #tpu.dot_dimension_numbers<[1], [0], [0], [1], [0, 0, 1, 1], [], []>} : vector<128x128xf32>, vector<128x256xf32>, vector<128x256xf32> -> vector<128x256xf32>
    %c0_13 = arith.constant 0 : index
    %c0_14 = arith.constant 0 : index
    %19 = vector.load %arg6[%c0_13, %c0_14] : memref<1x256xf32, #tpu.memory_space<vmem>>, vector<1x256xf32>
    %20 = vector.broadcast %19 : vector<1x256xf32> to vector<128x256xf32>
    %21 = arith.addf %18, %20 : vector<128x256xf32>
    %22 = vector.extract_strided_slice %21 {offsets = [0, 0], sizes = [128, 128], strides = [1, 1]} : vector<128x256xf32> to vector<128x128xf32>
    %23 = arith.negf %22 : vector<128x128xf32>
    %24 = math.exp %23 : vector<128x128xf32>
    %cst_15 = arith.constant 1.000000e+00 : f32
    %25 = vector.broadcast %cst_15 : f32 to vector<128x128xf32>
    %26 = arith.addf %25, %24 : vector<128x128xf32>
    %27 = arith.divf %25, %26 : vector<128x128xf32>
    %28 = vector.extract_strided_slice %21 {offsets = [0, 128], sizes = [128, 128], strides = [1, 1]} : vector<128x256xf32> to vector<128x128xf32>
    %cst_16 = arith.constant 0.000000e+00 : f32
    %29 = vector.broadcast %cst_16 : f32 to vector<128x128xf32>
    %30 = arith.maximumf %28, %29 : vector<128x128xf32>
    %31 = arith.mulf %27, %30 : vector<128x128xf32>
    %cst_17 = arith.constant 1.000000e+00 : f32
    %32 = vector.broadcast %cst_17 : f32 to vector<128x128xf32>
    %33 = arith.subf %32, %27 : vector<128x128xf32>
    %34 = arith.mulf %33, %16 : vector<128x128xf32>
    %35 = arith.addf %31, %34 : vector<128x128xf32>
    %c0_18 = arith.constant 0 : index
    %c0_19 = arith.constant 0 : index
    %36 = vector.load %arg7[%c0_18, %c0_19] : memref<128x128xf32, #tpu.memory_space<vmem>>, vector<128x128xf32>
    tpu.vector_store %arg7[%c0_18, %c0_19], %35 {strides = array<i32>} : memref<128x128xf32, #tpu.memory_space<vmem>>, vector<128x128xf32>,
    return
  }
  func.func @transform_0(%arg0: i32) -> (i32, i32) {
    %c0_i32 = arith.constant 0 : i32
    %c0_i32_0 = arith.constant 0 : i32
    return %arg0, %c0_i32 : i32, i32
  }
  func.func @transform_1(%arg0: i32) -> (i32, i32) {
    %c0_i32 = arith.constant 0 : i32
    %c0_i32_0 = arith.constant 0 : i32
    %c0_i32_1 = arith.constant 0 : i32
    return %c0_i32, %c0_i32_0 : i32, i32
  }
  func.func @transform_2(%arg0: i32) -> (i32, i32) {
    %c0_i32 = arith.constant 0 : i32
    %c0_i32_0 = arith.constant 0 : i32
    %c0_i32_1 = arith.constant 0 : i32
    return %c0_i32, %c0_i32_0 : i32, i32
  }
  func.func @transform_3(%arg0: i32) -> (i32, i32) {
    %c0_i32 = arith.constant 0 : i32
    %c0_i32_0 = arith.constant 0 : i32
    %c0_i32_1 = arith.constant 0 : i32
    return %c0_i32, %c0_i32_0 : i32, i32
  }
  func.func @transform_4(%arg0: i32) -> (i32, i32) {
    %c0_i32 = arith.constant 0 : i32
    %c0_i32_0 = arith.constant 0 : i32
    %c0_i32_1 = arith.constant 0 : i32
    return %c0_i32, %c0_i32_0 : i32, i32
  }
  func.func @transform_5(%arg0: i32) -> (i32, i32) {
    %c0_i32 = arith.constant 0 : i32
    %c0_i32_0 = arith.constant 0 : i32
    %c0_i32_1 = arith.constant 0 : i32
    return %c0_i32, %c0_i32_0 : i32, i32
  }
  func.func @transform_6(%arg0: i32) -> (i32, i32) {
    %c0_i32 = arith.constant 0 : i32
    %c0_i32_0 = arith.constant 0 : i32
    return %arg0, %c0_i32 : i32, i32
  }
}

</mosaic_0001>

<llo_original>
// kernel: tpu_custom_call.1
$region0: #{tpu_custom_call.1}
  #allocation0 [shape = 'u32[]', space=smem, size = 0x4, offset = 0x4, fixed_abs, tag = 'smem constant byte address 0x4 - core index']
  #allocation1 [shape = 'u32[144,128]{1,0:T(1,128)}', space=vmem, size = 0x12000, scoped, tag = 'internal scratch']
  %s0 = inlined_call_operand.vmem [shape: f32[2048,40], index: 0, kind: input, shape index: {}]
  %s1 = inlined_call_operand.vmem [shape: f32[40,128], index: 1, kind: input, shape index: {}]
  %s2 = inlined_call_operand.vmem [shape: f32[16,128], index: 2, kind: input, shape index: {}]
  %s3 = inlined_call_operand.vmem [shape: f32[1,128], index: 3, kind: input, shape index: {}]
  %s4 = inlined_call_operand.vmem [shape: f32[128,256], index: 4, kind: input, shape index: {}]
  %s5 = inlined_call_operand.vmem [shape: f32[1,256], index: 5, kind: input, shape index: {}]
  %s6 = inlined_call_operand.hbm [shape: f32[128,128], index: 6, kind: output, shape index: {}]
  %s7 = sld [smem:[#allocation0]]
  $region34: #{tpu_custom_call.1} parent=0
    _
  %s9 = ssub.s32 1, %s7
  %s10 = scalar_select 0, %s9, %s7
  $region1: #{tpu_custom_call.1} parent=0
    #allocation2 [shape = 'u8[65536]{0}', space=vmem, size = 0x10000, scoped, tag = 'output window, operand 0, single buffered']
    #allocation3 [shape = 's32[1]{0}', space=sflag, size = 0x4, scoped, tag = 'scoped memory for tpu_custom_call.1']
    %11 = vsyncpa [#allocation3], 0
    // Predicated region
    $region2: #{tpu_custom_call.1} parent=1 // pred_check
      _
    $region3: #{tpu_custom_call.1} parent=1 // pred_check_branch
      %13 = sbr.rel (0) target = $region5
    $region4: #{tpu_custom_call.1} parent=1 // pred_region
      _
    $region5: #{tpu_custom_call.1} parent=1 // pred_fallthru
      _
    // Predicated region
    $region6: #{tpu_custom_call.1} parent=1 // pred_check
      _
    $region7: #{tpu_custom_call.1} parent=1 // pred_check_branch
      %15 = sbr.rel (0) target = $region9
    $region8: #{tpu_custom_call.1} parent=1 // pred_region
      _
    $region9: #{tpu_custom_call.1} parent=1 // pred_fallthru
      _
    // Predicated region
    $region10: #{tpu_custom_call.1} parent=1 // pred_check
      _
    $region11: #{tpu_custom_call.1} parent=1 // pred_check_branch
      %17 = sbr.rel (0) target = $region13
    $region12: #{tpu_custom_call.1} parent=1 // pred_region
      _
    $region13: #{tpu_custom_call.1} parent=1 // pred_fallthru
      _
    // Predicated region
    $region14: #{tpu_custom_call.1} parent=1 // pred_check
      _
    $region15: #{tpu_custom_call.1} parent=1 // pred_check_branch
      %19 = sbr.rel (0) target = $region17
    $region16: #{tpu_custom_call.1} parent=1 // pred_region
      _
    $region17: #{tpu_custom_call.1} parent=1 // pred_fallthru
      _
    // Predicated region
    $region18: #{tpu_custom_call.1} parent=1 // pred_check
      _
    $region19: #{tpu_custom_call.1} parent=1 // pred_check_branch
      %21 = sbr.rel (0) target = $region21
    $region20: #{tpu_custom_call.1} parent=1 // pred_region
      _
    $region21: #{tpu_custom_call.1} parent=1 // pred_fallthru
      _
    // Predicated region
    $region22: #{tpu_custom_call.1} parent=1 // pred_check
      _
    $region23: #{tpu_custom_call.1} parent=1 // pred_check_branch
      %23 = sbr.rel (0) target = $region25
    $region24: #{tpu_custom_call.1} parent=1 // pred_region
      _
    $region25: #{tpu_custom_call.1} parent=1 // pred_fallthru
      _
    %v24 = vld [vmem:[%s0] sm:$0xff]
    %v25 = vld [vmem:[%s0 + $0x8] sm:$0xff]
    %v26 = vld [vmem:[%s0 + $0x10] sm:$0xff]
    %v27 = vld [vmem:[%s0 + $0x18] sm:$0xff]
    %v28 = vld [vmem:[%s0 + $0x20] sm:$0xff]
    %v29 = vld [vmem:[%s0 + $0x28] sm:$0xff]
    %v30 = vld [vmem:[%s0 + $0x30] sm:$0xff]
    %v31 = vld [vmem:[%s0 + $0x38] sm:$0xff]
    %v32 = vld [vmem:[%s0 + $0x40] sm:$0xff]
    %v33 = vld [vmem:[%s0 + $0x48] sm:$0xff]
    %v34 = vld [vmem:[%s0 + $0x50] sm:$0xff]
    %v35 = vld [vmem:[%s0 + $0x58] sm:$0xff]
    %v36 = vld [vmem:[%s0 + $0x60] sm:$0xff]
    %v37 = vld [vmem:[%s0 + $0x68] sm:$0xff]
    %v38 = vld [vmem:[%s0 + $0x70] sm:$0xff]
    %v39 = vld [vmem:[%s0 + $0x78] sm:$0xff]
    %v40 = vld [vmem:[%s0 + $0x80] sm:$0xff]
    %v41 = vld [vmem:[%s0 + $0x88] sm:$0xff]
    %v42 = vld [vmem:[%s0 + $0x90] sm:$0xff]
    %v43 = vld [vmem:[%s0 + $0x98] sm:$0xff]
    %v44 = vld [vmem:[%s0 + $0xa0] sm:$0xff]
    %v45 = vld [vmem:[%s0 + $0xa8] sm:$0xff]
    %v46 = vld [vmem:[%s0 + $0xb0] sm:$0xff]
    %v47 = vld [vmem:[%s0 + $0xb8] sm:$0xff]
    %v48 = vld [vmem:[%s0 + $0xc0] sm:$0xff]
    %v49 = vld [vmem:[%s0 + $0xc8] sm:$0xff]
    %v50 = vld [vmem:[%s0 + $0xd0] sm:$0xff]
    %v51 = vld [vmem:[%s0 + $0xd8] sm:$0xff]
    %v52 = vld [vmem:[%s0 + $0xe0] sm:$0xff]
    %v53 = vld [vmem:[%s0 + $0xe8] sm:$0xff]
    %v54 = vld [vmem:[%s0 + $0xf0] sm:$0xff]
    %v55 = vld [vmem:[%s0 + $0xf8] sm:$0xff]
    %v56 = vld [vmem:[%s0 + $0x100] sm:$0xff]
    %v57 = vld [vmem:[%s0 + $0x108] sm:$0xff]
    %v58 = vld [vmem:[%s0 + $0x110] sm:$0xff]
    %v59 = vld [vmem:[%s0 + $0x118] sm:$0xff]
    %v60 = vld [vmem:[%s0 + $0x120] sm:$0xff]
    %v61 = vld [vmem:[%s0 + $0x128] sm:$0xff]
    %v62 = vld [vmem:[%s0 + $0x130] sm:$0xff]
    %v63 = vld [vmem:[%s0 + $0x138] sm:$0xff]
    %v64 = vld [vmem:[%s0 + $0x140] sm:$0xff]
    %v65 = vld [vmem:[%s0 + $0x148] sm:$0xff]
    %v66 = vld [vmem:[%s0 + $0x150] sm:$0xff]
    %v67 = vld [vmem:[%s0 + $0x158] sm:$0xff]
    %v68 = vld [vmem:[%s0 + $0x160] sm:$0xff]
    %v69 = vld [vmem:[%s0 + $0x168] sm:$0xff]
    %v70 = vld [vmem:[%s0 + $0x170] sm:$0xff]
    %v71 = vld [vmem:[%s0 + $0x178] sm:$0xff]
    %v72 = vld [vmem:[%s0 + $0x180] sm:$0xff]
    %v73 = vld [vmem:[%s0 + $0x188] sm:$0xff]
    %v74 = vld [vmem:[%s0 + $0x190] sm:$0xff]
    %v75 = vld [vmem:[%s0 + $0x198] sm:$0xff]
    %v76 = vld [vmem:[%s0 + $0x1a0] sm:$0xff]
    %v77 = vld [vmem:[%s0 + $0x1a8] sm:$0xff]
    %v78 = vld [vmem:[%s0 + $0x1b0] sm:$0xff]
    %v79 = vld [vmem:[%s0 + $0x1b8] sm:$0xff]
    %v80 = vld [vmem:[%s0 + $0x1c0] sm:$0xff]
    %v81 = vld [vmem:[%s0 + $0x1c8] sm:$0xff]
    %v82 = vld [vmem:[%s0 + $0x1d0] sm:$0xff]
    %v83 = vld [vmem:[%s0 + $0x1d8] sm:$0xff]
    %v84 = vld [vmem:[%s0 + $0x1e0] sm:$0xff]
    %v85 = vld [vmem:[%s0 + $0x1e8] sm:$0xff]
    %v86 = vld [vmem:[%s0 + $0x1f0] sm:$0xff]
    %v87 = vld [vmem:[%s0 + $0x1f8] sm:$0xff]
    %v88 = vld [vmem:[%s0 + $0x200] sm:$0xff]
    %v89 = vld [vmem:[%s0 + $0x208] sm:$0xff]
    %v90 = vld [vmem:[%s0 + $0x210] sm:$0xff]
    %v91 = vld [vmem:[%s0 + $0x218] sm:$0xff]
    %v92 = vld [vmem:[%s0 + $0x220] sm:$0xff]
    %v93 = vld [vmem:[%s0 + $0x228] sm:$0xff]
    %v94 = vld [vmem:[%s0 + $0x230] sm:$0xff]
    %v95 = vld [vmem:[%s0 + $0x238] sm:$0xff]
    %v96 = vld [vmem:[%s0 + $0x240] sm:$0xff]
    %v97 = vld [vmem:[%s0 + $0x248] sm:$0xff]
    %v98 = vld [vmem:[%s0 + $0x250] sm:$0xff]
    %v99 = vld [vmem:[%s0 + $0x258] sm:$0xff]
    %v100 = vld [vmem:[%s0 + $0x260] sm:$0xff]
    %v101 = vld [vmem:[%s0 + $0x268] sm:$0xff]
    %v102 = vld [vmem:[%s0 + $0x270] sm:$0xff]
    %v103 = vld [vmem:[%s0 + $0x278] sm:$0xff]
    %v104 = vld [vmem:[%s0 + $0x280] sm:$0xff]
    %v105 = vld [vmem:[%s0 + $0x288] sm:$0xff]
    %v106 = vld [vmem:[%s0 + $0x290] sm:$0xff]
    %v107 = vld [vmem:[%s0 + $0x298] sm:$0xff]
    %v108 = vld [vmem:[%s0 + $0x2a0] sm:$0xff]
    %v109 = vld [vmem:[%s0 + $0x2a8] sm:$0xff]
    %v110 = vld [vmem:[%s0 + $0x2b0] sm:$0xff]
    %v111 = vld [vmem:[%s0 + $0x2b8] sm:$0xff]
    %v112 = vld [vmem:[%s0 + $0x2c0] sm:$0xff]
    %v113 = vld [vmem:[%s0 + $0x2c8] sm:$0xff]
    %v114 = vld [vmem:[%s0 + $0x2d0] sm:$0xff]
    %v115 = vld [vmem:[%s0 + $0x2d8] sm:$0xff]
    %v116 = vld [vmem:[%s0 + $0x2e0] sm:$0xff]
    %v117 = vld [vmem:[%s0 + $0x2e8] sm:$0xff]
    %v118 = vld [vmem:[%s0 + $0x2f0] sm:$0xff]
    %v119 = vld [vmem:[%s0 + $0x2f8] sm:$0xff]
    %v120 = vld [vmem:[%s0 + $0x300] sm:$0xff]
    %v121 = vld [vmem:[%s0 + $0x308] sm:$0xff]
    %v122 = vld [vmem:[%s0 + $0x310] sm:$0xff]
    %v123 = vld [vmem:[%s0 + $0x318] sm:$0xff]
    %v124 = vld [vmem:[%s0 + $0x320] sm:$0xff]
    %v125 = vld [vmem:[%s0 + $0x328] sm:$0xff]
    %v126 = vld [vmem:[%s0 + $0x330] sm:$0xff]
    %v127 = vld [vmem:[%s0 + $0x338] sm:$0xff]
    %v128 = vld [vmem:[%s0 + $0x340] sm:$0xff]
    %v129 = vld [vmem:[%s0 + $0x348] sm:$0xff]
    %v130 = vld [vmem:[%s0 + $0x350] sm:$0xff]
    %v131 = vld [vmem:[%s0 + $0x358] sm:$0xff]
    %v132 = vld [vmem:[%s0 + $0x360] sm:$0xff]
    %v133 = vld [vmem:[%s0 + $0x368] sm:$0xff]
    %v134 = vld [vmem:[%s0 + $0x370] sm:$0xff]
    %v135 = vld [vmem:[%s0 + $0x378] sm:$0xff]
    %v136 = vld [vmem:[%s0 + $0x380] sm:$0xff]
    %v137 = vld [vmem:[%s0 + $0x388] sm:$0xff]
    %v138 = vld [vmem:[%s0 + $0x390] sm:$0xff]
    %v139 = vld [vmem:[%s0 + $0x398] sm:$0xff]
    %v140 = vld [vmem:[%s0 + $0x3a0] sm:$0xff]
    %v141 = vld [vmem:[%s0 + $0x3a8] sm:$0xff]
    %v142 = vld [vmem:[%s0 + $0x3b0] sm:$0xff]
    %v143 = vld [vmem:[%s0 + $0x3b8] sm:$0xff]
    %v144 = vld [vmem:[%s0 + $0x3c0] sm:$0xff]
    %v145 = vld [vmem:[%s0 + $0x3c8] sm:$0xff]
    %v146 = vld [vmem:[%s0 + $0x3d0] sm:$0xff]
    %v147 = vld [vmem:[%s0 + $0x3d8] sm:$0xff]
    %v148 = vld [vmem:[%s0 + $0x3e0] sm:$0xff]
    %v149 = vld [vmem:[%s0 + $0x3e8] sm:$0xff]
    %v150 = vld [vmem:[%s0 + $0x3f0] sm:$0xff]
    %v151 = vld [vmem:[%s0 + $0x3f8] sm:$0xff]
    %v152 = vld [vmem:[%s0 + $0x400] sm:$0xff]
    %v153 = vld [vmem:[%s0 + $0x408] sm:$0xff]
    %v154 = vld [vmem:[%s0 + $0x410] sm:$0xff]
    %v155 = vld [vmem:[%s0 + $0x418] sm:$0xff]
    %v156 = vld [vmem:[%s0 + $0x420] sm:$0xff]
    %v157 = vld [vmem:[%s0 + $0x428] sm:$0xff]
    %v158 = vld [vmem:[%s0 + $0x430] sm:$0xff]
    %v159 = vld [vmem:[%s0 + $0x438] sm:$0xff]
    %v160 = vld [vmem:[%s0 + $0x440] sm:$0xff]
    %v161 = vld [vmem:[%s0 + $0x448] sm:$0xff]
    %v162 = vld [vmem:[%s0 + $0x450] sm:$0xff]
    %v163 = vld [vmem:[%s0 + $0x458] sm:$0xff]
    %v164 = vld [vmem:[%s0 + $0x460] sm:$0xff]
    %v165 = vld [vmem:[%s0 + $0x468] sm:$0xff]
    %v166 = vld [vmem:[%s0 + $0x470] sm:$0xff]
    %v167 = vld [vmem:[%s0 + $0x478] sm:$0xff]
    %v168 = vld [vmem:[%s0 + $0x480] sm:$0xff]
    %v169 = vld [vmem:[%s0 + $0x488] sm:$0xff]
    %v170 = vld [vmem:[%s0 + $0x490] sm:$0xff]
    %v171 = vld [vmem:[%s0 + $0x498] sm:$0xff]
    %v172 = vld [vmem:[%s0 + $0x4a0] sm:$0xff]
    %v173 = vld [vmem:[%s0 + $0x4a8] sm:$0xff]
    %v174 = vld [vmem:[%s0 + $0x4b0] sm:$0xff]
    %v175 = vld [vmem:[%s0 + $0x4b8] sm:$0xff]
    %v176 = vld [vmem:[%s0 + $0x4c0] sm:$0xff]
    %v177 = vld [vmem:[%s0 + $0x4c8] sm:$0xff]
    %v178 = vld [vmem:[%s0 + $0x4d0] sm:$0xff]
    %v179 = vld [vmem:[%s0 + $0x4d8] sm:$0xff]
    %v180 = vld [vmem:[%s0 + $0x4e0] sm:$0xff]
    %v181 = vld [vmem:[%s0 + $0x4e8] sm:$0xff]
    %v182 = vld [vmem:[%s0 + $0x4f0] sm:$0xff]
    %v183 = vld [vmem:[%s0 + $0x4f8] sm:$0xff]
    %v184 = vld [vmem:[%s0 + $0x500] sm:$0xff]
    %v185 = vld [vmem:[%s0 + $0x508] sm:$0xff]
    %v186 = vld [vmem:[%s0 + $0x510] sm:$0xff]
    %v187 = vld [vmem:[%s0 + $0x518] sm:$0xff]
    %v188 = vld [vmem:[%s0 + $0x520] sm:$0xff]
    %v189 = vld [vmem:[%s0 + $0x528] sm:$0xff]
    %v190 = vld [vmem:[%s0 + $0x530] sm:$0xff]
    %v191 = vld [vmem:[%s0 + $0x538] sm:$0xff]
    %v192 = vld [vmem:[%s0 + $0x540] sm:$0xff]
    %v193 = vld [vmem:[%s0 + $0x548] sm:$0xff]
    %v194 = vld [vmem:[%s0 + $0x550] sm:$0xff]
    %v195 = vld [vmem:[%s0 + $0x558] sm:$0xff]
    %v196 = vld [vmem:[%s0 + $0x560] sm:$0xff]
    %v197 = vld [vmem:[%s0 + $0x568] sm:$0xff]
    %v198 = vld [vmem:[%s0 + $0x570] sm:$0xff]
    %v199 = vld [vmem:[%s0 + $0x578] sm:$0xff]
    %v200 = vld [vmem:[%s0 + $0x580] sm:$0xff]
    %v201 = vld [vmem:[%s0 + $0x588] sm:$0xff]
    %v202 = vld [vmem:[%s0 + $0x590] sm:$0xff]
    %v203 = vld [vmem:[%s0 + $0x598] sm:$0xff]
    %v204 = vld [vmem:[%s0 + $0x5a0] sm:$0xff]
    %v205 = vld [vmem:[%s0 + $0x5a8] sm:$0xff]
    %v206 = vld [vmem:[%s0 + $0x5b0] sm:$0xff]
    %v207 = vld [vmem:[%s0 + $0x5b8] sm:$0xff]
    %v208 = vld [vmem:[%s0 + $0x5c0] sm:$0xff]
    %v209 = vld [vmem:[%s0 + $0x5c8] sm:$0xff]
    %v210 = vld [vmem:[%s0 + $0x5d0] sm:$0xff]
    %v211 = vld [vmem:[%s0 + $0x5d8] sm:$0xff]
    %v212 = vld [vmem:[%s0 + $0x5e0] sm:$0xff]
    %v213 = vld [vmem:[%s0 + $0x5e8] sm:$0xff]
    %v214 = vld [vmem:[%s0 + $0x5f0] sm:$0xff]
    %v215 = vld [vmem:[%s0 + $0x5f8] sm:$0xff]
    %v216 = vld [vmem:[%s0 + $0x600] sm:$0xff]
    %v217 = vld [vmem:[%s0 + $0x608] sm:$0xff]
    %v218 = vld [vmem:[%s0 + $0x610] sm:$0xff]
    %v219 = vld [vmem:[%s0 + $0x618] sm:$0xff]
    %v220 = vld [vmem:[%s0 + $0x620] sm:$0xff]
    %v221 = vld [vmem:[%s0 + $0x628] sm:$0xff]
    %v222 = vld [vmem:[%s0 + $0x630] sm:$0xff]
    %v223 = vld [vmem:[%s0 + $0x638] sm:$0xff]
    %v224 = vld [vmem:[%s0 + $0x640] sm:$0xff]
    %v225 = vld [vmem:[%s0 + $0x648] sm:$0xff]
    %v226 = vld [vmem:[%s0 + $0x650] sm:$0xff]
    %v227 = vld [vmem:[%s0 + $0x658] sm:$0xff]
    %v228 = vld [vmem:[%s0 + $0x660] sm:$0xff]
    %v229 = vld [vmem:[%s0 + $0x668] sm:$0xff]
    %v230 = vld [vmem:[%s0 + $0x670] sm:$0xff]
    %v231 = vld [vmem:[%s0 + $0x678] sm:$0xff]
    %v232 = vld [vmem:[%s0 + $0x680] sm:$0xff]
    %v233 = vld [vmem:[%s0 + $0x688] sm:$0xff]
    %v234 = vld [vmem:[%s0 + $0x690] sm:$0xff]
    %v235 = vld [vmem:[%s0 + $0x698] sm:$0xff]
    %v236 = vld [vmem:[%s0 + $0x6a0] sm:$0xff]
    %v237 = vld [vmem:[%s0 + $0x6a8] sm:$0xff]
    %v238 = vld [vmem:[%s0 + $0x6b0] sm:$0xff]
    %v239 = vld [vmem:[%s0 + $0x6b8] sm:$0xff]
    %v240 = vld [vmem:[%s0 + $0x6c0] sm:$0xff]
    %v241 = vld [vmem:[%s0 + $0x6c8] sm:$0xff]
    %v242 = vld [vmem:[%s0 + $0x6d0] sm:$0xff]
    %v243 = vld [vmem:[%s0 + $0x6d8] sm:$0xff]
    %v244 = vld [vmem:[%s0 + $0x6e0] sm:$0xff]
    %v245 = vld [vmem:[%s0 + $0x6e8] sm:$0xff]
    %v246 = vld [vmem:[%s0 + $0x6f0] sm:$0xff]
    %v247 = vld [vmem:[%s0 + $0x6f8] sm:$0xff]
    %v248 = vld [vmem:[%s0 + $0x700] sm:$0xff]
    %v249 = vld [vmem:[%s0 + $0x708] sm:$0xff]
    %v250 = vld [vmem:[%s0 + $0x710] sm:$0xff]
    %v251 = vld [vmem:[%s0 + $0x718] sm:$0xff]
    %v252 = vld [vmem:[%s0 + $0x720] sm:$0xff]
    %v253 = vld [vmem:[%s0 + $0x728] sm:$0xff]
    %v254 = vld [vmem:[%s0 + $0x730] sm:$0xff]
    %v255 = vld [vmem:[%s0 + $0x738] sm:$0xff]
    %v256 = vld [vmem:[%s0 + $0x740] sm:$0xff]
    %v257 = vld [vmem:[%s0 + $0x748] sm:$0xff]
    %v258 = vld [vmem:[%s0 + $0x750] sm:$0xff]
    %v259 = vld [vmem:[%s0 + $0x758] sm:$0xff]
    %v260 = vld [vmem:[%s0 + $0x760] sm:$0xff]
    %v261 = vld [vmem:[%s0 + $0x768] sm:$0xff]
    %v262 = vld [vmem:[%s0 + $0x770] sm:$0xff]
    %v263 = vld [vmem:[%s0 + $0x778] sm:$0xff]
    %v264 = vld [vmem:[%s0 + $0x780] sm:$0xff]
    %v265 = vld [vmem:[%s0 + $0x788] sm:$0xff]
    %v266 = vld [vmem:[%s0 + $0x790] sm:$0xff]
    %v267 = vld [vmem:[%s0 + $0x798] sm:$0xff]
    %v268 = vld [vmem:[%s0 + $0x7a0] sm:$0xff]
    %v269 = vld [vmem:[%s0 + $0x7a8] sm:$0xff]
    %v270 = vld [vmem:[%s0 + $0x7b0] sm:$0xff]
    %v271 = vld [vmem:[%s0 + $0x7b8] sm:$0xff]
    %v272 = vld [vmem:[%s0 + $0x7c0] sm:$0xff]
    %v273 = vld [vmem:[%s0 + $0x7c8] sm:$0xff]
    %v274 = vld [vmem:[%s0 + $0x7d0] sm:$0xff]
    %v275 = vld [vmem:[%s0 + $0x7d8] sm:$0xff]
    %v276 = vld [vmem:[%s0 + $0x7e0] sm:$0xff]
    %v277 = vld [vmem:[%s0 + $0x7e8] sm:$0xff]
    %v278 = vld [vmem:[%s0 + $0x7f0] sm:$0xff]
    %v279 = vld [vmem:[%s0 + $0x7f8] sm:$0xff]
    %v280 = vld [vmem:[%s1] sm:$0xff]
    %v281 = vld [vmem:[%s1 + $0x8] sm:$0xff]
    %v282 = vld [vmem:[%s1 + $0x10] sm:$0xff]
    %v283 = vld [vmem:[%s1 + $0x18] sm:$0xff]
    %v284 = vld [vmem:[%s1 + $0x20] sm:$0xff]
    %vm285 = vcmask 326656
    %v287 = vsel %vm285, %v24, 0
    %v290 = vsel %vm285, %v25, 0
    %v293 = vsel %vm285, %v26, 0
    %v296 = vsel %vm285, %v27, 0
    %v299 = vsel %vm285, %v28, 0
    %v302 = vsel %vm285, %v29, 0
    %v305 = vsel %vm285, %v30, 0
    %v308 = vsel %vm285, %v31, 0
    %v311 = vsel %vm285, %v32, 0
    %v314 = vsel %vm285, %v33, 0
    %v317 = vsel %vm285, %v34, 0
    %v320 = vsel %vm285, %v35, 0
    %v323 = vsel %vm285, %v36, 0
    %v326 = vsel %vm285, %v37, 0
    %v329 = vsel %vm285, %v38, 0
    %v332 = vsel %vm285, %v39, 0
    %v335 = vsel %vm285, %v40, 0
    %v338 = vsel %vm285, %v41, 0
    %v341 = vsel %vm285, %v42, 0
    %v344 = vsel %vm285, %v43, 0
    %v347 = vsel %vm285, %v44, 0
    %v350 = vsel %vm285, %v45, 0
    %v353 = vsel %vm285, %v46, 0
    %v356 = vsel %vm285, %v47, 0
    %v359 = vsel %vm285, %v48, 0
    %v362 = vsel %vm285, %v49, 0
    %v365 = vsel %vm285, %v50, 0
    %v368 = vsel %vm285, %v51, 0
    %v371 = vsel %vm285, %v52, 0
    %v374 = vsel %vm285, %v53, 0
    %v377 = vsel %vm285, %v54, 0
    %v380 = vsel %vm285, %v55, 0
    %v383 = vsel %vm285, %v56, 0
    %v386 = vsel %vm285, %v57, 0
    %v389 = vsel %vm285, %v58, 0
    %v392 = vsel %vm285, %v59, 0
    %v395 = vsel %vm285, %v60, 0
    %v398 = vsel %vm285, %v61, 0
    %v401 = vsel %vm285, %v62, 0
    %v404 = vsel %vm285, %v63, 0
    %v407 = vsel %vm285, %v64, 0
    %v410 = vsel %vm285, %v65, 0
    %v413 = vsel %vm285, %v66, 0
    %v416 = vsel %vm285, %v67, 0
    %v419 = vsel %vm285, %v68, 0
    %v422 = vsel %vm285, %v69, 0
    %v425 = vsel %vm285, %v70, 0
    %v428 = vsel %vm285, %v71, 0
    %v431 = vsel %vm285, %v72, 0
    %v434 = vsel %vm285, %v73, 0
    %v437 = vsel %vm285, %v74, 0
    %v440 = vsel %vm285, %v75, 0
    %v443 = vsel %vm285, %v76, 0
    %v446 = vsel %vm285, %v77, 0
    %v449 = vsel %vm285, %v78, 0
    %v452 = vsel %vm285, %v79, 0
    %v455 = vsel %vm285, %v80, 0
    %v458 = vsel %vm285, %v81, 0
    %v461 = vsel %vm285, %v82, 0
    %v464 = vsel %vm285, %v83, 0
    %v467 = vsel %vm285, %v84, 0
    %v470 = vsel %vm285, %v85, 0
    %v473 = vsel %vm285, %v86, 0
    %v476 = vsel %vm285, %v87, 0
    %v479 = vsel %vm285, %v88, 0
    %v482 = vsel %vm285, %v89, 0
    %v485 = vsel %vm285, %v90, 0
    %v488 = vsel %vm285, %v91, 0
    %v491 = vsel %vm285, %v92, 0
    %v494 = vsel %vm285, %v93, 0
    %v497 = vsel %vm285, %v94, 0
    %v500 = vsel %vm285, %v95, 0
    %v503 = vsel %vm285, %v96, 0
    %v506 = vsel %vm285, %v97, 0
    %v509 = vsel %vm285, %v98, 0
    %v512 = vsel %vm285, %v99, 0
    %v515 = vsel %vm285, %v100, 0
    %v518 = vsel %vm285, %v101, 0
    %v521 = vsel %vm285, %v102, 0
    %v524 = vsel %vm285, %v103, 0
    %v527 = vsel %vm285, %v104, 0
    %v530 = vsel %vm285, %v105, 0
    %v533 = vsel %vm285, %v106, 0
    %v536 = vsel %vm285, %v107, 0
    %v539 = vsel %vm285, %v108, 0
    %v542 = vsel %vm285, %v109, 0
    %v545 = vsel %vm285, %v110, 0
    %v548 = vsel %vm285, %v111, 0
    %v551 = vsel %vm285, %v112, 0
    %v554 = vsel %vm285, %v113, 0
    %v557 = vsel %vm285, %v114, 0
    %v560 = vsel %vm285, %v115, 0
    %v563 = vsel %vm285, %v116, 0
    %v566 = vsel %vm285, %v117, 0
    %v569 = vsel %vm285, %v118, 0
    %v572 = vsel %vm285, %v119, 0
    %v575 = vsel %vm285, %v120, 0
    %v578 = vsel %vm285, %v121, 0
    %v581 = vsel %vm285, %v122, 0
    %v584 = vsel %vm285, %v123, 0
    %v587 = vsel %vm285, %v124, 0
    %v590 = vsel %vm285, %v125, 0
    %v593 = vsel %vm285, %v126, 0
    %v596 = vsel %vm285, %v127, 0
    %v599 = vsel %vm285, %v128, 0
    %v602 = vsel %vm285, %v129, 0
    %v605 = vsel %vm285, %v130, 0
    %v608 = vsel %vm285, %v131, 0
    %v611 = vsel %vm285, %v132, 0
    %v614 = vsel %vm285, %v133, 0
    %v617 = vsel %vm285, %v134, 0
    %v620 = vsel %vm285, %v135, 0
    %v623 = vsel %vm285, %v136, 0
    %v626 = vsel %vm285, %v137, 0
    %v629 = vsel %vm285, %v138, 0
    %v632 = vsel %vm285, %v139, 0
    %v635 = vsel %vm285, %v140, 0
    %v638 = vsel %vm285, %v141, 0
    %v641 = vsel %vm285, %v142, 0
    %v644 = vsel %vm285, %v143, 0
    %v647 = vsel %vm285, %v144, 0
    %v650 = vsel %vm285, %v145, 0
    %v653 = vsel %vm285, %v146, 0
    %v656 = vsel %vm285, %v147, 0
    %v659 = vsel %vm285, %v148, 0
    %v662 = vsel %vm285, %v149, 0
    %v665 = vsel %vm285, %v150, 0
    %v668 = vsel %vm285, %v151, 0
    %v671 = vsel %vm285, %v152, 0
    %v674 = vsel %vm285, %v153, 0
    %v677 = vsel %vm285, %v154, 0
    %v680 = vsel %vm285, %v155, 0
    %v683 = vsel %vm285, %v156, 0
    %v686 = vsel %vm285, %v157, 0
    %v689 = vsel %vm285, %v158, 0
    %v692 = vsel %vm285, %v159, 0
    %v695 = vsel %vm285, %v160, 0
    %v698 = vsel %vm285, %v161, 0
    %v701 = vsel %vm285, %v162, 0
    %v704 = vsel %vm285, %v163, 0
    %v707 = vsel %vm285, %v164, 0
    %v710 = vsel %vm285, %v165, 0
    %v713 = vsel %vm285, %v166, 0
    %v716 = vsel %vm285, %v167, 0
    %v719 = vsel %vm285, %v168, 0
    %v722 = vsel %vm285, %v169, 0
    %v725 = vsel %vm285, %v170, 0
    %v728 = vsel %vm285, %v171, 0
    %v731 = vsel %vm285, %v172, 0
    %v734 = vsel %vm285, %v173, 0
    %v737 = vsel %vm285, %v174, 0
    %v740 = vsel %vm285, %v175, 0
    %v743 = vsel %vm285, %v176, 0
    %v746 = vsel %vm285, %v177, 0
    %v749 = vsel %vm285, %v178, 0
    %v752 = vsel %vm285, %v179, 0
    %v755 = vsel %vm285, %v180, 0
    %v758 = vsel %vm285, %v181, 0
    %v761 = vsel %vm285, %v182, 0
    %v764 = vsel %vm285, %v183, 0
    %v767 = vsel %vm285, %v184, 0
    %v770 = vsel %vm285, %v185, 0
    %v773 = vsel %vm285, %v186, 0
    %v776 = vsel %vm285, %v187, 0
    %v779 = vsel %vm285, %v188, 0
    %v782 = vsel %vm285, %v189, 0
    %v785 = vsel %vm285, %v190, 0
    %v788 = vsel %vm285, %v191, 0
    %v791 = vsel %vm285, %v192, 0
    %v794 = vsel %vm285, %v193, 0
    %v797 = vsel %vm285, %v194, 0
    %v800 = vsel %vm285, %v195, 0
    %v803 = vsel %vm285, %v196, 0
    %v806 = vsel %vm285, %v197, 0
    %v809 = vsel %vm285, %v198, 0
    %v812 = vsel %vm285, %v199, 0
    %v815 = vsel %vm285, %v200, 0
    %v818 = vsel %vm285, %v201, 0
    %v821 = vsel %vm285, %v202, 0
    %v824 = vsel %vm285, %v203, 0
    %v827 = vsel %vm285, %v204, 0
    %v830 = vsel %vm285, %v205, 0
    %v833 = vsel %vm285, %v206, 0
    %v836 = vsel %vm285, %v207, 0
    %v839 = vsel %vm285, %v208, 0
    %v842 = vsel %vm285, %v209, 0
    %v845 = vsel %vm285, %v210, 0
    %v848 = vsel %vm285, %v211, 0
    %v851 = vsel %vm285, %v212, 0
    %v854 = vsel %vm285, %v213, 0
    %v857 = vsel %vm285, %v214, 0
    %v860 = vsel %vm285, %v215, 0
    %v863 = vsel %vm285, %v216, 0
    %v866 = vsel %vm285, %v217, 0
    %v869 = vsel %vm285, %v218, 0
    %v872 = vsel %vm285, %v219, 0
    %v875 = vsel %vm285, %v220, 0
    %v878 = vsel %vm285, %v221, 0
    %v881 = vsel %vm285, %v222, 0
    %v884 = vsel %vm285, %v223, 0
    %v887 = vsel %vm285, %v224, 0
    %v890 = vsel %vm285, %v225, 0
    %v893 = vsel %vm285, %v226, 0
    %v896 = vsel %vm285, %v227, 0
    %v899 = vsel %vm285, %v228, 0
    %v902 = vsel %vm285, %v229, 0
    %v905 = vsel %vm285, %v230, 0
    %v908 = vsel %vm285, %v231, 0
    %v911 = vsel %vm285, %v232, 0
    %v914 = vsel %vm285, %v233, 0
    %v917 = vsel %vm285, %v234, 0
    %v920 = vsel %vm285, %v235, 0
    %v923 = vsel %vm285, %v236, 0
    %v926 = vsel %vm285, %v237, 0
    %v929 = vsel %vm285, %v238, 0
    %v932 = vsel %vm285, %v239, 0
    %v935 = vsel %vm285, %v240, 0
    %v938 = vsel %vm285, %v241, 0
    %v941 = vsel %vm285, %v242, 0
    %v944 = vsel %vm285, %v243, 0
    %v947 = vsel %vm285, %v244, 0
    %v950 = vsel %vm285, %v245, 0
    %v953 = vsel %vm285, %v246, 0
    %v956 = vsel %vm285, %v247, 0
    %v959 = vsel %vm285, %v248, 0
    %v962 = vsel %vm285, %v249, 0
    %v965 = vsel %vm285, %v250, 0
    %v968 = vsel %vm285, %v251, 0
    %v971 = vsel %vm285, %v252, 0
    %v974 = vsel %vm285, %v253, 0
    %v977 = vsel %vm285, %v254, 0
    %v980 = vsel %vm285, %v255, 0
    %v983 = vsel %vm285, %v256, 0
    %v986 = vsel %vm285, %v257, 0
    %v989 = vsel %vm285, %v258, 0
    %v992 = vsel %vm285, %v259, 0
    %v995 = vsel %vm285, %v260, 0
    %v998 = vsel %vm285, %v261, 0
    %v1001 = vsel %vm285, %v262, 0
    %v1004 = vsel %vm285, %v263, 0
    %v1007 = vsel %vm285, %v264, 0
    %v1010 = vsel %vm285, %v265, 0
    %v1013 = vsel %vm285, %v266, 0
    %v1016 = vsel %vm285, %v267, 0
    %v1019 = vsel %vm285, %v268, 0
    %v1022 = vsel %vm285, %v269, 0
    %v1025 = vsel %vm285, %v270, 0
    %v1028 = vsel %vm285, %v271, 0
    %v1031 = vsel %vm285, %v272, 0
    %v1034 = vsel %vm285, %v273, 0
    %v1037 = vsel %vm285, %v274, 0
    %v1040 = vsel %vm285, %v275, 0
    %v1043 = vsel %vm285, %v276, 0
    %v1046 = vsel %vm285, %v277, 0
    %v1049 = vsel %vm285, %v278, 0
    %v1052 = vsel %vm285, %v279, 0
    %1054 = vmatprep.subr.mxu0 0.0
    %1055 = vmatpush1.msra.mxu0 0.0
    %1056 = vmatprep.subr.mxu0 0.0
    %1057 = vmatpush1.msra.mxu0 0.0
    %1058 = vmatprep.subr.mxu0 0.0
    %1059 = vmatpush1.msra.mxu0 0.0
    %1060 = vmatprep.subr.mxu0 0.0
    %1061 = vmatpush1.msra.mxu0 0.0
    %1062 = vmatprep.subr.mxu0 0.0
    %1063 = vmatpush1.msra.mxu0 0.0
    %1064 = vmatprep.subr.mxu0 0.0
    %1065 = vmatpush1.msra.mxu0 0.0
    %1066 = vmatprep.subr.mxu0 0.0
    %1067 = vmatpush1.msra.mxu0 0.0
    %1068 = vmatprep.subr.mxu0 0.0
    %1069 = vmatpush1.msra.mxu0 0.0
    %1070 = vmatprep.subr.mxu0 0.0
    %1071 = vmatpush1.msra.mxu0 0.0
    %1072 = vmatprep.subr.mxu0 0.0
    %1073 = vmatpush1.msra.mxu0 0.0
    %1074 = vmatprep.subr.mxu0 0.0
    %1075 = vmatpush1.msra.mxu0 0.0
    %1076 = vmatprep.subr.mxu0 0.0
    %1077 = vmatpush1.msra.mxu0 %v284
    %1078 = vmatprep.subr.mxu0 0.0
    %1079 = vmatpush1.msra.mxu0 %v283
    %1080 = vmatprep.subr.mxu0 0.0
    %1081 = vmatpush1.msra.mxu0 %v282
    %1082 = vmatprep.subr.mxu0 0.0
    %1083 = vmatpush1.msra.mxu0 %v281
    %1084 = vmatprep.subr.mxu0 0.0
    %1085 = vmatpush1.msra.mxu0 %v280
    %1086 = vmatprep.subr.mxu0 0.0
    %1087 = vmatpush2.msra.mxu0 0.0
    %1088 = vmatprep.subr.mxu0 0.0
    %1089 = vmatpush2.msra.mxu0 0.0
    %1090 = vmatprep.subr.mxu0 0.0
    %1091 = vmatpush2.msra.mxu0 0.0
    %1092 = vmatprep.subr.mxu0 0.0
    %1093 = vmatpush2.msra.mxu0 0.0
    %1094 = vmatprep.subr.mxu0 0.0
    %1095 = vmatpush2.msra.mxu0 0.0
    %1096 = vmatprep.subr.mxu0 0.0
    %1097 = vmatpush2.msra.mxu0 0.0
    %1098 = vmatprep.subr.mxu0 0.0
    %1099 = vmatpush2.msra.mxu0 0.0
    %1100 = vmatprep.subr.mxu0 0.0
    %1101 = vmatpush2.msra.mxu0 0.0
    %1102 = vmatprep.subr.mxu0 0.0
    %1103 = vmatpush2.msra.mxu0 0.0
    %1104 = vmatprep.subr.mxu0 0.0
    %1105 = vmatpush2.msra.mxu0 0.0
    %1106 = vmatprep.subr.mxu0 0.0
    %1107 = vmatpush2.msra.mxu0 0.0
    %1108 = vmatprep.subr.mxu0 0.0
    %1109 = vmatpush2.msra.mxu0 0.0
    %1110 = vmatprep.subr.mxu0 0.0
    %1111 = vmatpush2.msra.mxu0 0.0
    %1112 = vmatprep.subr.mxu0 0.0
    %1113 = vmatpush2.msra.mxu0 0.0
    %1114 = vmatprep.subr.mxu0 0.0
    %1115 = vmatpush2.msra.mxu0 0.0
    %1116 = vmatprep.subr.mxu0 0.0
    %1117 = vmatpush2.msra.mxu0 0.0
    %1118 = vmatprep.mubr.f32.mxu0 0.0
    %1119 = vmatmul.mubr.f32.gmra.mxu0 %v287
    %v1120 = vpop.f32.mrf.mxu0
    %v1121 = vadd.f32 0.0, %v1120
    %v1122 = vpop.f32.mrf.mxu0
    %1123 = vmatprep.mubr.f32.mxu0 0.0
    %1124 = vmatmul.mubr.f32.gmra.mxu0 %v290
    %v1125 = vpop.f32.mrf.mxu0
    %v1126 = vadd.f32 0.0, %v1125
    %v1127 = vpop.f32.mrf.mxu0
    %1128 = vmatprep.mubr.f32.mxu0 0.0
    %1129 = vmatmul.mubr.f32.gmra.mxu0 %v293
    %v1130 = vpop.f32.mrf.mxu0
    %v1131 = vadd.f32 0.0, %v1130
    %v1132 = vpop.f32.mrf.mxu0
    %1133 = vmatprep.mubr.f32.mxu0 0.0
    %1134 = vmatmul.mubr.f32.gmra.mxu0 %v296
    %v1135 = vpop.f32.mrf.mxu0
    %v1136 = vadd.f32 0.0, %v1135
    %v1137 = vpop.f32.mrf.mxu0
    %1138 = vmatprep.mubr.f32.mxu0 0.0
    %1139 = vmatmul.mubr.f32.gmra.mxu0 %v299
    %v1140 = vpop.f32.mrf.mxu0
    %v1141 = vadd.f32 0.0, %v1140
    %v1142 = vpop.f32.mrf.mxu0
    %1143 = vmatprep.mubr.f32.mxu0 0.0
    %1144 = vmatmul.mubr.f32.gmra.mxu0 %v302
    %v1145 = vpop.f32.mrf.mxu0
    %v1146 = vadd.f32 0.0, %v1145
    %v1147 = vpop.f32.mrf.mxu0
    %1148 = vmatprep.mubr.f32.mxu0 0.0
    %1149 = vmatmul.mubr.f32.gmra.mxu0 %v305
    %v1150 = vpop.f32.mrf.mxu0
    %v1151 = vadd.f32 0.0, %v1150
    %v1152 = vpop.f32.mrf.mxu0
    %1153 = vmatprep.mubr.f32.mxu0 0.0
    %1154 = vmatmul.mubr.f32.gmra.mxu0 %v308
    %v1155 = vpop.f32.mrf.mxu0
    %v1156 = vadd.f32 0.0, %v1155
    %v1157 = vpop.f32.mrf.mxu0
    %1158 = vmatprep.mubr.f32.mxu0 0.0
    %1159 = vmatmul.mubr.f32.gmra.mxu0 %v311
    %v1160 = vpop.f32.mrf.mxu0
    %v1161 = vadd.f32 0.0, %v1160
    %v1162 = vpop.f32.mrf.mxu0
    %1163 = vmatprep.mubr.f32.mxu0 0.0
    %1164 = vmatmul.mubr.f32.gmra.mxu0 %v314
    %v1165 = vpop.f32.mrf.mxu0
    %v1166 = vadd.f32 0.0, %v1165
    %v1167 = vpop.f32.mrf.mxu0
    %1168 = vmatprep.mubr.f32.mxu0 0.0
    %1169 = vmatmul.mubr.f32.gmra.mxu0 %v317
    %v1170 = vpop.f32.mrf.mxu0
    %v1171 = vadd.f32 0.0, %v1170
    %v1172 = vpop.f32.mrf.mxu0
    %1173 = vmatprep.mubr.f32.mxu0 0.0
    %1174 = vmatmul.mubr.f32.gmra.mxu0 %v320
    %v1175 = vpop.f32.mrf.mxu0
    %v1176 = vadd.f32 0.0, %v1175
    %v1177 = vpop.f32.mrf.mxu0
    %1178 = vmatprep.mubr.f32.mxu0 0.0
    %1179 = vmatmul.mubr.f32.gmra.mxu0 %v323
    %v1180 = vpop.f32.mrf.mxu0
    %v1181 = vadd.f32 0.0, %v1180
    %v1182 = vpop.f32.mrf.mxu0
    %1183 = vmatprep.mubr.f32.mxu0 0.0
    %1184 = vmatmul.mubr.f32.gmra.mxu0 %v326
    %v1185 = vpop.f32.mrf.mxu0
    %v1186 = vadd.f32 0.0, %v1185
    %v1187 = vpop.f32.mrf.mxu0
    %1188 = vmatprep.mubr.f32.mxu0 0.0
    %1189 = vmatmul.mubr.f32.gmra.mxu0 %v329
    %v1190 = vpop.f32.mrf.mxu0
    %v1191 = vadd.f32 0.0, %v1190
    %v1192 = vpop.f32.mrf.mxu0
    %1193 = vmatprep.mubr.f32.mxu0 0.0
    %1194 = vmatmul.mubr.f32.gmra.mxu0 %v332
    %v1195 = vpop.f32.mrf.mxu0
    %v1196 = vadd.f32 0.0, %v1195
    %v1197 = vpop.f32.mrf.mxu0
    %1198 = vmatprep.mubr.f32.mxu0 0.0
    %1199 = vmatmul.mubr.f32.gmra.mxu0 %v335
    %v1200 = vpop.f32.mrf.mxu0
    %v1201 = vadd.f32 0.0, %v1200
    %v1202 = vpop.f32.mrf.mxu0
    %1203 = vmatprep.mubr.f32.mxu0 0.0
    %1204 = vmatmul.mubr.f32.gmra.mxu0 %v338
    %v1205 = vpop.f32.mrf.mxu0
    %v1206 = vadd.f32 0.0, %v1205
    %v1207 = vpop.f32.mrf.mxu0
    %1208 = vmatprep.mubr.f32.mxu0 0.0
    %1209 = vmatmul.mubr.f32.gmra.mxu0 %v341
    %v1210 = vpop.f32.mrf.mxu0
    %v1211 = vadd.f32 0.0, %v1210
    %v1212 = vpop.f32.mrf.mxu0
    %1213 = vmatprep.mubr.f32.mxu0 0.0
    %1214 = vmatmul.mubr.f32.gmra.mxu0 %v344
    %v1215 = vpop.f32.mrf.mxu0
    %v1216 = vadd.f32 0.0, %v1215
    %v1217 = vpop.f32.mrf.mxu0
    %1218 = vmatprep.mubr.f32.mxu0 0.0
    %1219 = vmatmul.mubr.f32.gmra.mxu0 %v347
    %v1220 = vpop.f32.mrf.mxu0
    %v1221 = vadd.f32 0.0, %v1220
    %v1222 = vpop.f32.mrf.mxu0
    %1223 = vmatprep.mubr.f32.mxu0 0.0
    %1224 = vmatmul.mubr.f32.gmra.mxu0 %v350
    %v1225 = vpop.f32.mrf.mxu0
    %v1226 = vadd.f32 0.0, %v1225
    %v1227 = vpop.f32.mrf.mxu0
    %1228 = vmatprep.mubr.f32.mxu0 0.0
    %1229 = vmatmul.mubr.f32.gmra.mxu0 %v353
    %v1230 = vpop.f32.mrf.mxu0
    %v1231 = vadd.f32 0.0, %v1230
    %v1232 = vpop.f32.mrf.mxu0
    %1233 = vmatprep.mubr.f32.mxu0 0.0
    %1234 = vmatmul.mubr.f32.gmra.mxu0 %v356
    %v1235 = vpop.f32.mrf.mxu0
    %v1236 = vadd.f32 0.0, %v1235
    %v1237 = vpop.f32.mrf.mxu0
    %1238 = vmatprep.mubr.f32.mxu0 0.0
    %1239 = vmatmul.mubr.f32.gmra.mxu0 %v359
    %v1240 = vpop.f32.mrf.mxu0
    %v1241 = vadd.f32 0.0, %v1240
    %v1242 = vpop.f32.mrf.mxu0
    %1243 = vmatprep.mubr.f32.mxu0 0.0
    %1244 = vmatmul.mubr.f32.gmra.mxu0 %v362
    %v1245 = vpop.f32.mrf.mxu0
    %v1246 = vadd.f32 0.0, %v1245
    %v1247 = vpop.f32.mrf.mxu0
    %1248 = vmatprep.mubr.f32.mxu0 0.0
    %1249 = vmatmul.mubr.f32.gmra.mxu0 %v365
    %v1250 = vpop.f32.mrf.mxu0
    %v1251 = vadd.f32 0.0, %v1250
    %v1252 = vpop.f32.mrf.mxu0
    %1253 = vmatprep.mubr.f32.mxu0 0.0
    %1254 = vmatmul.mubr.f32.gmra.mxu0 %v368
    %v1255 = vpop.f32.mrf.mxu0
    %v1256 = vadd.f32 0.0, %v1255
    %v1257 = vpop.f32.mrf.mxu0
    %1258 = vmatprep.mubr.f32.mxu0 0.0
    %1259 = vmatmul.mubr.f32.gmra.mxu0 %v371
    %v1260 = vpop.f32.mrf.mxu0
    %v1261 = vadd.f32 0.0, %v1260
    %v1262 = vpop.f32.mrf.mxu0
    %1263 = vmatprep.mubr.f32.mxu0 0.0
    %1264 = vmatmul.mubr.f32.gmra.mxu0 %v374
    %v1265 = vpop.f32.mrf.mxu0
    %v1266 = vadd.f32 0.0, %v1265
    %v1267 = vpop.f32.mrf.mxu0
    %1268 = vmatprep.mubr.f32.mxu0 0.0
    %1269 = vmatmul.mubr.f32.gmra.mxu0 %v377
    %v1270 = vpop.f32.mrf.mxu0
    %v1271 = vadd.f32 0.0, %v1270
    %v1272 = vpop.f32.mrf.mxu0
    %1273 = vmatprep.mubr.f32.mxu0 0.0
    %1274 = vmatmul.mubr.f32.gmra.mxu0 %v380
    %v1275 = vpop.f32.mrf.mxu0
    %v1276 = vadd.f32 0.0, %v1275
    %v1277 = vpop.f32.mrf.mxu0
    %1278 = vmatprep.mubr.f32.mxu0 0.0
    %1279 = vmatmul.mubr.f32.gmra.mxu0 %v383
    %v1280 = vpop.f32.mrf.mxu0
    %v1281 = vadd.f32 0.0, %v1280
    %v1282 = vpop.f32.mrf.mxu0
    %1283 = vmatprep.mubr.f32.mxu0 0.0
    %1284 = vmatmul.mubr.f32.gmra.mxu0 %v386
    %v1285 = vpop.f32.mrf.mxu0
    %v1286 = vadd.f32 0.0, %v1285
    %v1287 = vpop.f32.mrf.mxu0
    %1288 = vmatprep.mubr.f32.mxu0 0.0
    %1289 = vmatmul.mubr.f32.gmra.mxu0 %v389
    %v1290 = vpop.f32.mrf.mxu0
    %v1291 = vadd.f32 0.0, %v1290
    %v1292 = vpop.f32.mrf.mxu0
    %1293 = vmatprep.mubr.f32.mxu0 0.0
    %1294 = vmatmul.mubr.f32.gmra.mxu0 %v392
    %v1295 = vpop.f32.mrf.mxu0
    %v1296 = vadd.f32 0.0, %v1295
    %v1297 = vpop.f32.mrf.mxu0
    %1298 = vmatprep.mubr.f32.mxu0 0.0
    %1299 = vmatmul.mubr.f32.gmra.mxu0 %v395
    %v1300 = vpop.f32.mrf.mxu0
    %v1301 = vadd.f32 0.0, %v1300
    %v1302 = vpop.f32.mrf.mxu0
    %1303 = vmatprep.mubr.f32.mxu0 0.0
    %1304 = vmatmul.mubr.f32.gmra.mxu0 %v398
    %v1305 = vpop.f32.mrf.mxu0
    %v1306 = vadd.f32 0.0, %v1305
    %v1307 = vpop.f32.mrf.mxu0
    %1308 = vmatprep.mubr.f32.mxu0 0.0
    %1309 = vmatmul.mubr.f32.gmra.mxu0 %v401
    %v1310 = vpop.f32.mrf.mxu0
    %v1311 = vadd.f32 0.0, %v1310
    %v1312 = vpop.f32.mrf.mxu0
    %1313 = vmatprep.mubr.f32.mxu0 0.0
    %1314 = vmatmul.mubr.f32.gmra.mxu0 %v404
    %v1315 = vpop.f32.mrf.mxu0
    %v1316 = vadd.f32 0.0, %v1315
    %v1317 = vpop.f32.mrf.mxu0
    %1318 = vmatprep.mubr.f32.mxu0 0.0
    %1319 = vmatmul.mubr.f32.gmra.mxu0 %v407
    %v1320 = vpop.f32.mrf.mxu0
    %v1321 = vadd.f32 0.0, %v1320
    %v1322 = vpop.f32.mrf.mxu0
    %1323 = vmatprep.mubr.f32.mxu0 0.0
    %1324 = vmatmul.mubr.f32.gmra.mxu0 %v410
    %v1325 = vpop.f32.mrf.mxu0
    %v1326 = vadd.f32 0.0, %v1325
    %v1327 = vpop.f32.mrf.mxu0
    %1328 = vmatprep.mubr.f32.mxu0 0.0
    %1329 = vmatmul.mubr.f32.gmra.mxu0 %v413
    %v1330 = vpop.f32.mrf.mxu0
    %v1331 = vadd.f32 0.0, %v1330
    %v1332 = vpop.f32.mrf.mxu0
    %1333 = vmatprep.mubr.f32.mxu0 0.0
    %1334 = vmatmul.mubr.f32.gmra.mxu0 %v416
    %v1335 = vpop.f32.mrf.mxu0
    %v1336 = vadd.f32 0.0, %v1335
    %v1337 = vpop.f32.mrf.mxu0
    %1338 = vmatprep.mubr.f32.mxu0 0.0
    %1339 = vmatmul.mubr.f32.gmra.mxu0 %v419
    %v1340 = vpop.f32.mrf.mxu0
    %v1341 = vadd.f32 0.0, %v1340
    %v1342 = vpop.f32.mrf.mxu0
    %1343 = vmatprep.mubr.f32.mxu0 0.0
    %1344 = vmatmul.mubr.f32.gmra.mxu0 %v422
    %v1345 = vpop.f32.mrf.mxu0
    %v1346 = vadd.f32 0.0, %v1345
    %v1347 = vpop.f32.mrf.mxu0
    %1348 = vmatprep.mubr.f32.mxu0 0.0
    %1349 = vmatmul.mubr.f32.gmra.mxu0 %v425
    %v1350 = vpop.f32.mrf.mxu0
    %v1351 = vadd.f32 0.0, %v1350
    %v1352 = vpop.f32.mrf.mxu0
    %1353 = vmatprep.mubr.f32.mxu0 0.0
    %1354 = vmatmul.mubr.f32.gmra.mxu0 %v428
    %v1355 = vpop.f32.mrf.mxu0
    %v1356 = vadd.f32 0.0, %v1355
    %v1357 = vpop.f32.mrf.mxu0
    %1358 = vmatprep.mubr.f32.mxu0 0.0
    %1359 = vmatmul.mubr.f32.gmra.mxu0 %v431
    %v1360 = vpop.f32.mrf.mxu0
    %v1361 = vadd.f32 0.0, %v1360
    %v1362 = vpop.f32.mrf.mxu0
    %1363 = vmatprep.mubr.f32.mxu0 0.0
    %1364 = vmatmul.mubr.f32.gmra.mxu0 %v434
    %v1365 = vpop.f32.mrf.mxu0
    %v1366 = vadd.f32 0.0, %v1365
    %v1367 = vpop.f32.mrf.mxu0
    %1368 = vmatprep.mubr.f32.mxu0 0.0
    %1369 = vmatmul.mubr.f32.gmra.mxu0 %v437
    %v1370 = vpop.f32.mrf.mxu0
    %v1371 = vadd.f32 0.0, %v1370
    %v1372 = vpop.f32.mrf.mxu0
    %1373 = vmatprep.mubr.f32.mxu0 0.0
    %1374 = vmatmul.mubr.f32.gmra.mxu0 %v440
    %v1375 = vpop.f32.mrf.mxu0
    %v1376 = vadd.f32 0.0, %v1375
    %v1377 = vpop.f32.mrf.mxu0
    %1378 = vmatprep.mubr.f32.mxu0 0.0
    %1379 = vmatmul.mubr.f32.gmra.mxu0 %v443
    %v1380 = vpop.f32.mrf.mxu0
    %v1381 = vadd.f32 0.0, %v1380
    %v1382 = vpop.f32.mrf.mxu0
    %1383 = vmatprep.mubr.f32.mxu0 0.0
    %1384 = vmatmul.mubr.f32.gmra.mxu0 %v446
    %v1385 = vpop.f32.mrf.mxu0
    %v1386 = vadd.f32 0.0, %v1385
    %v1387 = vpop.f32.mrf.mxu0
    %1388 = vmatprep.mubr.f32.mxu0 0.0
    %1389 = vmatmul.mubr.f32.gmra.mxu0 %v449
    %v1390 = vpop.f32.mrf.mxu0
    %v1391 = vadd.f32 0.0, %v1390
    %v1392 = vpop.f32.mrf.mxu0
    %1393 = vmatprep.mubr.f32.mxu0 0.0
    %1394 = vmatmul.mubr.f32.gmra.mxu0 %v452
    %v1395 = vpop.f32.mrf.mxu0
    %v1396 = vadd.f32 0.0, %v1395
    %v1397 = vpop.f32.mrf.mxu0
    %1398 = vmatprep.mubr.f32.mxu0 0.0
    %1399 = vmatmul.mubr.f32.gmra.mxu0 %v455
    %v1400 = vpop.f32.mrf.mxu0
    %v1401 = vadd.f32 0.0, %v1400
    %v1402 = vpop.f32.mrf.mxu0
    %1403 = vmatprep.mubr.f32.mxu0 0.0
    %1404 = vmatmul.mubr.f32.gmra.mxu0 %v458
    %v1405 = vpop.f32.mrf.mxu0
    %v1406 = vadd.f32 0.0, %v1405
    %v1407 = vpop.f32.mrf.mxu0
    %1408 = vmatprep.mubr.f32.mxu0 0.0
    %1409 = vmatmul.mubr.f32.gmra.mxu0 %v461
    %v1410 = vpop.f32.mrf.mxu0
    %v1411 = vadd.f32 0.0, %v1410
    %v1412 = vpop.f32.mrf.mxu0
    %1413 = vmatprep.mubr.f32.mxu0 0.0
    %1414 = vmatmul.mubr.f32.gmra.mxu0 %v464
    %v1415 = vpop.f32.mrf.mxu0
    %v1416 = vadd.f32 0.0, %v1415
    %v1417 = vpop.f32.mrf.mxu0
    %1418 = vmatprep.mubr.f32.mxu0 0.0
    %1419 = vmatmul.mubr.f32.gmra.mxu0 %v467
    %v1420 = vpop.f32.mrf.mxu0
    %v1421 = vadd.f32 0.0, %v1420
    %v1422 = vpop.f32.mrf.mxu0
    %1423 = vmatprep.mubr.f32.mxu0 0.0
    %1424 = vmatmul.mubr.f32.gmra.mxu0 %v470
    %v1425 = vpop.f32.mrf.mxu0
    %v1426 = vadd.f32 0.0, %v1425
    %v1427 = vpop.f32.mrf.mxu0
    %1428 = vmatprep.mubr.f32.mxu0 0.0
    %1429 = vmatmul.mubr.f32.gmra.mxu0 %v473
    %v1430 = vpop.f32.mrf.mxu0
    %v1431 = vadd.f32 0.0, %v1430
    %v1432 = vpop.f32.mrf.mxu0
    %1433 = vmatprep.mubr.f32.mxu0 0.0
    %1434 = vmatmul.mubr.f32.gmra.mxu0 %v476
    %v1435 = vpop.f32.mrf.mxu0
    %v1436 = vadd.f32 0.0, %v1435
    %v1437 = vpop.f32.mrf.mxu0
    %1438 = vmatprep.mubr.f32.mxu0 0.0
    %1439 = vmatmul.mubr.f32.gmra.mxu0 %v479
    %v1440 = vpop.f32.mrf.mxu0
    %v1441 = vadd.f32 0.0, %v1440
    %v1442 = vpop.f32.mrf.mxu0
    %1443 = vmatprep.mubr.f32.mxu0 0.0
    %1444 = vmatmul.mubr.f32.gmra.mxu0 %v482
    %v1445 = vpop.f32.mrf.mxu0
    %v1446 = vadd.f32 0.0, %v1445
    %v1447 = vpop.f32.mrf.mxu0
    %1448 = vmatprep.mubr.f32.mxu0 0.0
    %1449 = vmatmul.mubr.f32.gmra.mxu0 %v485
    %v1450 = vpop.f32.mrf.mxu0
    %v1451 = vadd.f32 0.0, %v1450
    %v1452 = vpop.f32.mrf.mxu0
    %1453 = vmatprep.mubr.f32.mxu0 0.0
    %1454 = vmatmul.mubr.f32.gmra.mxu0 %v488
    %v1455 = vpop.f32.mrf.mxu0
    %v1456 = vadd.f32 0.0, %v1455
    %v1457 = vpop.f32.mrf.mxu0
    %1458 = vmatprep.mubr.f32.mxu0 0.0
    %1459 = vmatmul.mubr.f32.gmra.mxu0 %v491
    %v1460 = vpop.f32.mrf.mxu0
    %v1461 = vadd.f32 0.0, %v1460
    %v1462 = vpop.f32.mrf.mxu0
    %1463 = vmatprep.mubr.f32.mxu0 0.0
    %1464 = vmatmul.mubr.f32.gmra.mxu0 %v494
    %v1465 = vpop.f32.mrf.mxu0
    %v1466 = vadd.f32 0.0, %v1465
    %v1467 = vpop.f32.mrf.mxu0
    %1468 = vmatprep.mubr.f32.mxu0 0.0
    %1469 = vmatmul.mubr.f32.gmra.mxu0 %v497
    %v1470 = vpop.f32.mrf.mxu0
    %v1471 = vadd.f32 0.0, %v1470
    %v1472 = vpop.f32.mrf.mxu0
    %1473 = vmatprep.mubr.f32.mxu0 0.0
    %1474 = vmatmul.mubr.f32.gmra.mxu0 %v500
    %v1475 = vpop.f32.mrf.mxu0
    %v1476 = vadd.f32 0.0, %v1475
    %v1477 = vpop.f32.mrf.mxu0
    %1478 = vmatprep.mubr.f32.mxu0 0.0
    %1479 = vmatmul.mubr.f32.gmra.mxu0 %v503
    %v1480 = vpop.f32.mrf.mxu0
    %v1481 = vadd.f32 0.0, %v1480
    %v1482 = vpop.f32.mrf.mxu0
    %1483 = vmatprep.mubr.f32.mxu0 0.0
    %1484 = vmatmul.mubr.f32.gmra.mxu0 %v506
    %v1485 = vpop.f32.mrf.mxu0
    %v1486 = vadd.f32 0.0, %v1485
    %v1487 = vpop.f32.mrf.mxu0
    %1488 = vmatprep.mubr.f32.mxu0 0.0
    %1489 = vmatmul.mubr.f32.gmra.mxu0 %v509
    %v1490 = vpop.f32.mrf.mxu0
    %v1491 = vadd.f32 0.0, %v1490
    %v1492 = vpop.f32.mrf.mxu0
    %1493 = vmatprep.mubr.f32.mxu0 0.0
    %1494 = vmatmul.mubr.f32.gmra.mxu0 %v512
    %v1495 = vpop.f32.mrf.mxu0
    %v1496 = vadd.f32 0.0, %v1495
    %v1497 = vpop.f32.mrf.mxu0
    %1498 = vmatprep.mubr.f32.mxu0 0.0
    %1499 = vmatmul.mubr.f32.gmra.mxu0 %v515
    %v1500 = vpop.f32.mrf.mxu0
    %v1501 = vadd.f32 0.0, %v1500
    %v1502 = vpop.f32.mrf.mxu0
    %1503 = vmatprep.mubr.f32.mxu0 0.0
    %1504 = vmatmul.mubr.f32.gmra.mxu0 %v518
    %v1505 = vpop.f32.mrf.mxu0
    %v1506 = vadd.f32 0.0, %v1505
    %v1507 = vpop.f32.mrf.mxu0
    %1508 = vmatprep.mubr.f32.mxu0 0.0
    %1509 = vmatmul.mubr.f32.gmra.mxu0 %v521
    %v1510 = vpop.f32.mrf.mxu0
    %v1511 = vadd.f32 0.0, %v1510
    %v1512 = vpop.f32.mrf.mxu0
    %1513 = vmatprep.mubr.f32.mxu0 0.0
    %1514 = vmatmul.mubr.f32.gmra.mxu0 %v524
    %v1515 = vpop.f32.mrf.mxu0
    %v1516 = vadd.f32 0.0, %v1515
    %v1517 = vpop.f32.mrf.mxu0
    %1518 = vmatprep.mubr.f32.mxu0 0.0
    %1519 = vmatmul.mubr.f32.gmra.mxu0 %v527
    %v1520 = vpop.f32.mrf.mxu0
    %v1521 = vadd.f32 0.0, %v1520
    %v1522 = vpop.f32.mrf.mxu0
    %1523 = vmatprep.mubr.f32.mxu0 0.0
    %1524 = vmatmul.mubr.f32.gmra.mxu0 %v530
    %v1525 = vpop.f32.mrf.mxu0
    %v1526 = vadd.f32 0.0, %v1525
    %v1527 = vpop.f32.mrf.mxu0
    %1528 = vmatprep.mubr.f32.mxu0 0.0
    %1529 = vmatmul.mubr.f32.gmra.mxu0 %v533
    %v1530 = vpop.f32.mrf.mxu0
    %v1531 = vadd.f32 0.0, %v1530
    %v1532 = vpop.f32.mrf.mxu0
    %1533 = vmatprep.mubr.f32.mxu0 0.0
    %1534 = vmatmul.mubr.f32.gmra.mxu0 %v536
    %v1535 = vpop.f32.mrf.mxu0
    %v1536 = vadd.f32 0.0, %v1535
    %v1537 = vpop.f32.mrf.mxu0
    %1538 = vmatprep.mubr.f32.mxu0 0.0
    %1539 = vmatmul.mubr.f32.gmra.mxu0 %v539
    %v1540 = vpop.f32.mrf.mxu0
    %v1541 = vadd.f32 0.0, %v1540
    %v1542 = vpop.f32.mrf.mxu0
    %1543 = vmatprep.mubr.f32.mxu0 0.0
    %1544 = vmatmul.mubr.f32.gmra.mxu0 %v542
    %v1545 = vpop.f32.mrf.mxu0
    %v1546 = vadd.f32 0.0, %v1545
    %v1547 = vpop.f32.mrf.mxu0
    %1548 = vmatprep.mubr.f32.mxu0 0.0
    %1549 = vmatmul.mubr.f32.gmra.mxu0 %v545
    %v1550 = vpop.f32.mrf.mxu0
    %v1551 = vadd.f32 0.0, %v1550
    %v1552 = vpop.f32.mrf.mxu0
    %1553 = vmatprep.mubr.f32.mxu0 0.0
    %1554 = vmatmul.mubr.f32.gmra.mxu0 %v548
    %v1555 = vpop.f32.mrf.mxu0
    %v1556 = vadd.f32 0.0, %v1555
    %v1557 = vpop.f32.mrf.mxu0
    %1558 = vmatprep.mubr.f32.mxu0 0.0
    %1559 = vmatmul.mubr.f32.gmra.mxu0 %v551
    %v1560 = vpop.f32.mrf.mxu0
    %v1561 = vadd.f32 0.0, %v1560
    %v1562 = vpop.f32.mrf.mxu0
    %1563 = vmatprep.mubr.f32.mxu0 0.0
    %1564 = vmatmul.mubr.f32.gmra.mxu0 %v554
    %v1565 = vpop.f32.mrf.mxu0
    %v1566 = vadd.f32 0.0, %v1565
    %v1567 = vpop.f32.mrf.mxu0
    %1568 = vmatprep.mubr.f32.mxu0 0.0
    %1569 = vmatmul.mubr.f32.gmra.mxu0 %v557
    %v1570 = vpop.f32.mrf.mxu0
    %v1571 = vadd.f32 0.0, %v1570
    %v1572 = vpop.f32.mrf.mxu0
    %1573 = vmatprep.mubr.f32.mxu0 0.0
    %1574 = vmatmul.mubr.f32.gmra.mxu0 %v560
    %v1575 = vpop.f32.mrf.mxu0
    %v1576 = vadd.f32 0.0, %v1575
    %v1577 = vpop.f32.mrf.mxu0
    %1578 = vmatprep.mubr.f32.mxu0 0.0
    %1579 = vmatmul.mubr.f32.gmra.mxu0 %v563
    %v1580 = vpop.f32.mrf.mxu0
    %v1581 = vadd.f32 0.0, %v1580
    %v1582 = vpop.f32.mrf.mxu0
    %1583 = vmatprep.mubr.f32.mxu0 0.0
    %1584 = vmatmul.mubr.f32.gmra.mxu0 %v566
    %v1585 = vpop.f32.mrf.mxu0
    %v1586 = vadd.f32 0.0, %v1585
    %v1587 = vpop.f32.mrf.mxu0
    %1588 = vmatprep.mubr.f32.mxu0 0.0
    %1589 = vmatmul.mubr.f32.gmra.mxu0 %v569
    %v1590 = vpop.f32.mrf.mxu0
    %v1591 = vadd.f32 0.0, %v1590
    %v1592 = vpop.f32.mrf.mxu0
    %1593 = vmatprep.mubr.f32.mxu0 0.0
    %1594 = vmatmul.mubr.f32.gmra.mxu0 %v572
    %v1595 = vpop.f32.mrf.mxu0
    %v1596 = vadd.f32 0.0, %v1595
    %v1597 = vpop.f32.mrf.mxu0
    %1598 = vmatprep.mubr.f32.mxu0 0.0
    %1599 = vmatmul.mubr.f32.gmra.mxu0 %v575
    %v1600 = vpop.f32.mrf.mxu0
    %v1601 = vadd.f32 0.0, %v1600
    %v1602 = vpop.f32.mrf.mxu0
    %1603 = vmatprep.mubr.f32.mxu0 0.0
    %1604 = vmatmul.mubr.f32.gmra.mxu0 %v578
    %v1605 = vpop.f32.mrf.mxu0
    %v1606 = vadd.f32 0.0, %v1605
    %v1607 = vpop.f32.mrf.mxu0
    %1608 = vmatprep.mubr.f32.mxu0 0.0
    %1609 = vmatmul.mubr.f32.gmra.mxu0 %v581
    %v1610 = vpop.f32.mrf.mxu0
    %v1611 = vadd.f32 0.0, %v1610
    %v1612 = vpop.f32.mrf.mxu0
    %1613 = vmatprep.mubr.f32.mxu0 0.0
    %1614 = vmatmul.mubr.f32.gmra.mxu0 %v584
    %v1615 = vpop.f32.mrf.mxu0
    %v1616 = vadd.f32 0.0, %v1615
    %v1617 = vpop.f32.mrf.mxu0
    %1618 = vmatprep.mubr.f32.mxu0 0.0
    %1619 = vmatmul.mubr.f32.gmra.mxu0 %v587
    %v1620 = vpop.f32.mrf.mxu0
    %v1621 = vadd.f32 0.0, %v1620
    %v1622 = vpop.f32.mrf.mxu0
    %1623 = vmatprep.mubr.f32.mxu0 0.0
    %1624 = vmatmul.mubr.f32.gmra.mxu0 %v590
    %v1625 = vpop.f32.mrf.mxu0
    %v1626 = vadd.f32 0.0, %v1625
    %v1627 = vpop.f32.mrf.mxu0
    %1628 = vmatprep.mubr.f32.mxu0 0.0
    %1629 = vmatmul.mubr.f32.gmra.mxu0 %v593
    %v1630 = vpop.f32.mrf.mxu0
    %v1631 = vadd.f32 0.0, %v1630
    %v1632 = vpop.f32.mrf.mxu0
    %1633 = vmatprep.mubr.f32.mxu0 0.0
    %1634 = vmatmul.mubr.f32.gmra.mxu0 %v596
    %v1635 = vpop.f32.mrf.mxu0
    %v1636 = vadd.f32 0.0, %v1635
    %v1637 = vpop.f32.mrf.mxu0
    %1638 = vmatprep.mubr.f32.mxu0 0.0
    %1639 = vmatmul.mubr.f32.gmra.mxu0 %v599
    %v1640 = vpop.f32.mrf.mxu0
    %v1641 = vadd.f32 0.0, %v1640
    %v1642 = vpop.f32.mrf.mxu0
    %1643 = vmatprep.mubr.f32.mxu0 0.0
    %1644 = vmatmul.mubr.f32.gmra.mxu0 %v602
    %v1645 = vpop.f32.mrf.mxu0
    %v1646 = vadd.f32 0.0, %v1645
    %v1647 = vpop.f32.mrf.mxu0
    %1648 = vmatprep.mubr.f32.mxu0 0.0
    %1649 = vmatmul.mubr.f32.gmra.mxu0 %v605
    %v1650 = vpop.f32.mrf.mxu0
    %v1651 = vadd.f32 0.0, %v1650
    %v1652 = vpop.f32.mrf.mxu0
    %1653 = vmatprep.mubr.f32.mxu0 0.0
    %1654 = vmatmul.mubr.f32.gmra.mxu0 %v608
    %v1655 = vpop.f32.mrf.mxu0
    %v1656 = vadd.f32 0.0, %v1655
    %v1657 = vpop.f32.mrf.mxu0
    %1658 = vmatprep.mubr.f32.mxu0 0.0
    %1659 = vmatmul.mubr.f32.gmra.mxu0 %v611
    %v1660 = vpop.f32.mrf.mxu0
    %v1661 = vadd.f32 0.0, %v1660
    %v1662 = vpop.f32.mrf.mxu0
    %1663 = vmatprep.mubr.f32.mxu0 0.0
    %1664 = vmatmul.mubr.f32.gmra.mxu0 %v614
    %v1665 = vpop.f32.mrf.mxu0
    %v1666 = vadd.f32 0.0, %v1665
    %v1667 = vpop.f32.mrf.mxu0
    %1668 = vmatprep.mubr.f32.mxu0 0.0
    %1669 = vmatmul.mubr.f32.gmra.mxu0 %v617
    %v1670 = vpop.f32.mrf.mxu0
    %v1671 = vadd.f32 0.0, %v1670
    %v1672 = vpop.f32.mrf.mxu0
    %1673 = vmatprep.mubr.f32.mxu0 0.0
    %1674 = vmatmul.mubr.f32.gmra.mxu0 %v620
    %v1675 = vpop.f32.mrf.mxu0
    %v1676 = vadd.f32 0.0, %v1675
    %v1677 = vpop.f32.mrf.mxu0
    %1678 = vmatprep.mubr.f32.mxu0 0.0
    %1679 = vmatmul.mubr.f32.gmra.mxu0 %v623
    %v1680 = vpop.f32.mrf.mxu0
    %v1681 = vadd.f32 0.0, %v1680
    %v1682 = vpop.f32.mrf.mxu0
    %1683 = vmatprep.mubr.f32.mxu0 0.0
    %1684 = vmatmul.mubr.f32.gmra.mxu0 %v626
    %v1685 = vpop.f32.mrf.mxu0
    %v1686 = vadd.f32 0.0, %v1685
    %v1687 = vpop.f32.mrf.mxu0
    %1688 = vmatprep.mubr.f32.mxu0 0.0
    %1689 = vmatmul.mubr.f32.gmra.mxu0 %v629
    %v1690 = vpop.f32.mrf.mxu0
    %v1691 = vadd.f32 0.0, %v1690
    %v1692 = vpop.f32.mrf.mxu0
    %1693 = vmatprep.mubr.f32.mxu0 0.0
    %1694 = vmatmul.mubr.f32.gmra.mxu0 %v632
    %v1695 = vpop.f32.mrf.mxu0
    %v1696 = vadd.f32 0.0, %v1695
    %v1697 = vpop.f32.mrf.mxu0
    %1698 = vmatprep.mubr.f32.mxu0 0.0
    %1699 = vmatmul.mubr.f32.gmra.mxu0 %v635
    %v1700 = vpop.f32.mrf.mxu0
    %v1701 = vadd.f32 0.0, %v1700
    %v1702 = vpop.f32.mrf.mxu0
    %1703 = vmatprep.mubr.f32.mxu0 0.0
    %1704 = vmatmul.mubr.f32.gmra.mxu0 %v638
    %v1705 = vpop.f32.mrf.mxu0
    %v1706 = vadd.f32 0.0, %v1705
    %v1707 = vpop.f32.mrf.mxu0
    %1708 = vmatprep.mubr.f32.mxu0 0.0
    %1709 = vmatmul.mubr.f32.gmra.mxu0 %v641
    %v1710 = vpop.f32.mrf.mxu0
    %v1711 = vadd.f32 0.0, %v1710
    %v1712 = vpop.f32.mrf.mxu0
    %1713 = vmatprep.mubr.f32.mxu0 0.0
    %1714 = vmatmul.mubr.f32.gmra.mxu0 %v644
    %v1715 = vpop.f32.mrf.mxu0
    %v1716 = vadd.f32 0.0, %v1715
    %v1717 = vpop.f32.mrf.mxu0
    %1718 = vmatprep.mubr.f32.mxu0 0.0
    %1719 = vmatmul.mubr.f32.gmra.mxu0 %v647
    %v1720 = vpop.f32.mrf.mxu0
    %v1721 = vadd.f32 0.0, %v1720
    %v1722 = vpop.f32.mrf.mxu0
    %1723 = vmatprep.mubr.f32.mxu0 0.0
    %1724 = vmatmul.mubr.f32.gmra.mxu0 %v650
    %v1725 = vpop.f32.mrf.mxu0
    %v1726 = vadd.f32 0.0, %v1725
    %v1727 = vpop.f32.mrf.mxu0
    %1728 = vmatprep.mubr.f32.mxu0 0.0
    %1729 = vmatmul.mubr.f32.gmra.mxu0 %v653
    %v1730 = vpop.f32.mrf.mxu0
    %v1731 = vadd.f32 0.0, %v1730
    %v1732 = vpop.f32.mrf.mxu0
    %1733 = vmatprep.mubr.f32.mxu0 0.0
    %1734 = vmatmul.mubr.f32.gmra.mxu0 %v656
    %v1735 = vpop.f32.mrf.mxu0
    %v1736 = vadd.f32 0.0, %v1735
    %v1737 = vpop.f32.mrf.mxu0
    %1738 = vmatprep.mubr.f32.mxu0 0.0
    %1739 = vmatmul.mubr.f32.gmra.mxu0 %v659
    %v1740 = vpop.f32.mrf.mxu0
    %v1741 = vadd.f32 0.0, %v1740
    %v1742 = vpop.f32.mrf.mxu0
    %1743 = vmatprep.mubr.f32.mxu0 0.0
    %1744 = vmatmul.mubr.f32.gmra.mxu0 %v662
    %v1745 = vpop.f32.mrf.mxu0
    %v1746 = vadd.f32 0.0, %v1745
    %v1747 = vpop.f32.mrf.mxu0
    %1748 = vmatprep.mubr.f32.mxu0 0.0
    %1749 = vmatmul.mubr.f32.gmra.mxu0 %v665
    %v1750 = vpop.f32.mrf.mxu0
    %v1751 = vadd.f32 0.0, %v1750
    %v1752 = vpop.f32.mrf.mxu0
    %1753 = vmatprep.mubr.f32.mxu0 0.0
    %1754 = vmatmul.mubr.f32.gmra.mxu0 %v668
    %v1755 = vpop.f32.mrf.mxu0
    %v1756 = vadd.f32 0.0, %v1755
    %v1757 = vpop.f32.mrf.mxu0
    %1758 = vmatprep.mubr.f32.mxu0 0.0
    %1759 = vmatmul.mubr.f32.gmra.mxu0 %v671
    %v1760 = vpop.f32.mrf.mxu0
    %v1761 = vadd.f32 0.0, %v1760
    %v1762 = vpop.f32.mrf.mxu0
    %1763 = vmatprep.mubr.f32.mxu0 0.0
    %1764 = vmatmul.mubr.f32.gmra.mxu0 %v674
    %v1765 = vpop.f32.mrf.mxu0
    %v1766 = vadd.f32 0.0, %v1765
    %v1767 = vpop.f32.mrf.mxu0
    %1768 = vmatprep.mubr.f32.mxu0 0.0
    %1769 = vmatmul.mubr.f32.gmra.mxu0 %v677
    %v1770 = vpop.f32.mrf.mxu0
    %v1771 = vadd.f32 0.0, %v1770
    %v1772 = vpop.f32.mrf.mxu0
    %1773 = vmatprep.mubr.f32.mxu0 0.0
    %1774 = vmatmul.mubr.f32.gmra.mxu0 %v680
    %v1775 = vpop.f32.mrf.mxu0
    %v1776 = vadd.f32 0.0, %v1775
    %v1777 = vpop.f32.mrf.mxu0
    %1778 = vmatprep.mubr.f32.mxu0 0.0
    %1779 = vmatmul.mubr.f32.gmra.mxu0 %v683
    %v1780 = vpop.f32.mrf.mxu0
    %v1781 = vadd.f32 0.0, %v1780
    %v1782 = vpop.f32.mrf.mxu0
    %1783 = vmatprep.mubr.f32.mxu0 0.0
    %1784 = vmatmul.mubr.f32.gmra.mxu0 %v686
    %v1785 = vpop.f32.mrf.mxu0
    %v1786 = vadd.f32 0.0, %v1785
    %v1787 = vpop.f32.mrf.mxu0
    %1788 = vmatprep.mubr.f32.mxu0 0.0
    %1789 = vmatmul.mubr.f32.gmra.mxu0 %v689
    %v1790 = vpop.f32.mrf.mxu0
    %v1791 = vadd.f32 0.0, %v1790
    %v1792 = vpop.f32.mrf.mxu0
    %1793 = vmatprep.mubr.f32.mxu0 0.0
    %1794 = vmatmul.mubr.f32.gmra.mxu0 %v692
    %v1795 = vpop.f32.mrf.mxu0
    %v1796 = vadd.f32 0.0, %v1795
    %v1797 = vpop.f32.mrf.mxu0
    %1798 = vmatprep.mubr.f32.mxu0 0.0
    %1799 = vmatmul.mubr.f32.gmra.mxu0 %v695
    %v1800 = vpop.f32.mrf.mxu0
    %v1801 = vadd.f32 0.0, %v1800
    %v1802 = vpop.f32.mrf.mxu0
    %1803 = vmatprep.mubr.f32.mxu0 0.0
    %1804 = vmatmul.mubr.f32.gmra.mxu0 %v698
    %v1805 = vpop.f32.mrf.mxu0
    %v1806 = vadd.f32 0.0, %v1805
    %v1807 = vpop.f32.mrf.mxu0
    %1808 = vmatprep.mubr.f32.mxu0 0.0
    %1809 = vmatmul.mubr.f32.gmra.mxu0 %v701
    %v1810 = vpop.f32.mrf.mxu0
    %v1811 = vadd.f32 0.0, %v1810
    %v1812 = vpop.f32.mrf.mxu0
    %1813 = vmatprep.mubr.f32.mxu0 0.0
    %1814 = vmatmul.mubr.f32.gmra.mxu0 %v704
    %v1815 = vpop.f32.mrf.mxu0
    %v1816 = vadd.f32 0.0, %v1815
    %v1817 = vpop.f32.mrf.mxu0
    %1818 = vmatprep.mubr.f32.mxu0 0.0
    %1819 = vmatmul.mubr.f32.gmra.mxu0 %v707
    %v1820 = vpop.f32.mrf.mxu0
    %v1821 = vadd.f32 0.0, %v1820
    %v1822 = vpop.f32.mrf.mxu0
    %1823 = vmatprep.mubr.f32.mxu0 0.0
    %1824 = vmatmul.mubr.f32.gmra.mxu0 %v710
    %v1825 = vpop.f32.mrf.mxu0
    %v1826 = vadd.f32 0.0, %v1825
    %v1827 = vpop.f32.mrf.mxu0
    %1828 = vmatprep.mubr.f32.mxu0 0.0
    %1829 = vmatmul.mubr.f32.gmra.mxu0 %v713
    %v1830 = vpop.f32.mrf.mxu0
    %v1831 = vadd.f32 0.0, %v1830
    %v1832 = vpop.f32.mrf.mxu0
    %1833 = vmatprep.mubr.f32.mxu0 0.0
    %1834 = vmatmul.mubr.f32.gmra.mxu0 %v716
    %v1835 = vpop.f32.mrf.mxu0
    %v1836 = vadd.f32 0.0, %v1835
    %v1837 = vpop.f32.mrf.mxu0
    %1838 = vmatprep.mubr.f32.mxu0 0.0
    %1839 = vmatmul.mubr.f32.gmra.mxu0 %v719
    %v1840 = vpop.f32.mrf.mxu0
    %v1841 = vadd.f32 0.0, %v1840
    %v1842 = vpop.f32.mrf.mxu0
    %1843 = vmatprep.mubr.f32.mxu0 0.0
    %1844 = vmatmul.mubr.f32.gmra.mxu0 %v722
    %v1845 = vpop.f32.mrf.mxu0
    %v1846 = vadd.f32 0.0, %v1845
    %v1847 = vpop.f32.mrf.mxu0
    %1848 = vmatprep.mubr.f32.mxu0 0.0
    %1849 = vmatmul.mubr.f32.gmra.mxu0 %v725
    %v1850 = vpop.f32.mrf.mxu0
    %v1851 = vadd.f32 0.0, %v1850
    %v1852 = vpop.f32.mrf.mxu0
    %1853 = vmatprep.mubr.f32.mxu0 0.0
    %1854 = vmatmul.mubr.f32.gmra.mxu0 %v728
    %v1855 = vpop.f32.mrf.mxu0
    %v1856 = vadd.f32 0.0, %v1855
    %v1857 = vpop.f32.mrf.mxu0
    %1858 = vmatprep.mubr.f32.mxu0 0.0
    %1859 = vmatmul.mubr.f32.gmra.mxu0 %v731
    %v1860 = vpop.f32.mrf.mxu0
    %v1861 = vadd.f32 0.0, %v1860
    %v1862 = vpop.f32.mrf.mxu0
    %1863 = vmatprep.mubr.f32.mxu0 0.0
    %1864 = vmatmul.mubr.f32.gmra.mxu0 %v734
    %v1865 = vpop.f32.mrf.mxu0
    %v1866 = vadd.f32 0.0, %v1865
    %v1867 = vpop.f32.mrf.mxu0
    %1868 = vmatprep.mubr.f32.mxu0 0.0
    %1869 = vmatmul.mubr.f32.gmra.mxu0 %v737
    %v1870 = vpop.f32.mrf.mxu0
    %v1871 = vadd.f32 0.0, %v1870
    %v1872 = vpop.f32.mrf.mxu0
    %1873 = vmatprep.mubr.f32.mxu0 0.0
    %1874 = vmatmul.mubr.f32.gmra.mxu0 %v740
    %v1875 = vpop.f32.mrf.mxu0
    %v1876 = vadd.f32 0.0, %v1875
    %v1877 = vpop.f32.mrf.mxu0
    %1878 = vmatprep.mubr.f32.mxu0 0.0
    %1879 = vmatmul.mubr.f32.gmra.mxu0 %v743
    %v1880 = vpop.f32.mrf.mxu0
    %v1881 = vadd.f32 0.0, %v1880
    %v1882 = vpop.f32.mrf.mxu0
    %1883 = vmatprep.mubr.f32.mxu0 0.0
    %1884 = vmatmul.mubr.f32.gmra.mxu0 %v746
    %v1885 = vpop.f32.mrf.mxu0
    %v1886 = vadd.f32 0.0, %v1885
    %v1887 = vpop.f32.mrf.mxu0
    %1888 = vmatprep.mubr.f32.mxu0 0.0
    %1889 = vmatmul.mubr.f32.gmra.mxu0 %v749
    %v1890 = vpop.f32.mrf.mxu0
    %v1891 = vadd.f32 0.0, %v1890
    %v1892 = vpop.f32.mrf.mxu0
    %1893 = vmatprep.mubr.f32.mxu0 0.0
    %1894 = vmatmul.mubr.f32.gmra.mxu0 %v752
    %v1895 = vpop.f32.mrf.mxu0
    %v1896 = vadd.f32 0.0, %v1895
    %v1897 = vpop.f32.mrf.mxu0
    %1898 = vmatprep.mubr.f32.mxu0 0.0
    %1899 = vmatmul.mubr.f32.gmra.mxu0 %v755
    %v1900 = vpop.f32.mrf.mxu0
    %v1901 = vadd.f32 0.0, %v1900
    %v1902 = vpop.f32.mrf.mxu0
    %1903 = vmatprep.mubr.f32.mxu0 0.0
    %1904 = vmatmul.mubr.f32.gmra.mxu0 %v758
    %v1905 = vpop.f32.mrf.mxu0
    %v1906 = vadd.f32 0.0, %v1905
    %v1907 = vpop.f32.mrf.mxu0
    %1908 = vmatprep.mubr.f32.mxu0 0.0
    %1909 = vmatmul.mubr.f32.gmra.mxu0 %v761
    %v1910 = vpop.f32.mrf.mxu0
    %v1911 = vadd.f32 0.0, %v1910
    %v1912 = vpop.f32.mrf.mxu0
    %1913 = vmatprep.mubr.f32.mxu0 0.0
    %1914 = vmatmul.mubr.f32.gmra.mxu0 %v764
    %v1915 = vpop.f32.mrf.mxu0
    %v1916 = vadd.f32 0.0, %v1915
    %v1917 = vpop.f32.mrf.mxu0
    %1918 = vmatprep.mubr.f32.mxu0 0.0
    %1919 = vmatmul.mubr.f32.gmra.mxu0 %v767
    %v1920 = vpop.f32.mrf.mxu0
    %v1921 = vadd.f32 0.0, %v1920
    %v1922 = vpop.f32.mrf.mxu0
    %1923 = vmatprep.mubr.f32.mxu0 0.0
    %1924 = vmatmul.mubr.f32.gmra.mxu0 %v770
    %v1925 = vpop.f32.mrf.mxu0
    %v1926 = vadd.f32 0.0, %v1925
    %v1927 = vpop.f32.mrf.mxu0
    %1928 = vmatprep.mubr.f32.mxu0 0.0
    %1929 = vmatmul.mubr.f32.gmra.mxu0 %v773
    %v1930 = vpop.f32.mrf.mxu0
    %v1931 = vadd.f32 0.0, %v1930
    %v1932 = vpop.f32.mrf.mxu0
    %1933 = vmatprep.mubr.f32.mxu0 0.0
    %1934 = vmatmul.mubr.f32.gmra.mxu0 %v776
    %v1935 = vpop.f32.mrf.mxu0
    %v1936 = vadd.f32 0.0, %v1935
    %v1937 = vpop.f32.mrf.mxu0
    %1938 = vmatprep.mubr.f32.mxu0 0.0
    %1939 = vmatmul.mubr.f32.gmra.mxu0 %v779
    %v1940 = vpop.f32.mrf.mxu0
    %v1941 = vadd.f32 0.0, %v1940
    %v1942 = vpop.f32.mrf.mxu0
    %1943 = vmatprep.mubr.f32.mxu0 0.0
    %1944 = vmatmul.mubr.f32.gmra.mxu0 %v782
    %v1945 = vpop.f32.mrf.mxu0
    %v1946 = vadd.f32 0.0, %v1945
    %v1947 = vpop.f32.mrf.mxu0
    %1948 = vmatprep.mubr.f32.mxu0 0.0
    %1949 = vmatmul.mubr.f32.gmra.mxu0 %v785
    %v1950 = vpop.f32.mrf.mxu0
    %v1951 = vadd.f32 0.0, %v1950
    %v1952 = vpop.f32.mrf.mxu0
    %1953 = vmatprep.mubr.f32.mxu0 0.0
    %1954 = vmatmul.mubr.f32.gmra.mxu0 %v788
    %v1955 = vpop.f32.mrf.mxu0
    %v1956 = vadd.f32 0.0, %v1955
    %v1957 = vpop.f32.mrf.mxu0
    %1958 = vmatprep.mubr.f32.mxu0 0.0
    %1959 = vmatmul.mubr.f32.gmra.mxu0 %v791
    %v1960 = vpop.f32.mrf.mxu0
    %v1961 = vadd.f32 0.0, %v1960
    %v1962 = vpop.f32.mrf.mxu0
    %1963 = vmatprep.mubr.f32.mxu0 0.0
    %1964 = vmatmul.mubr.f32.gmra.mxu0 %v794
    %v1965 = vpop.f32.mrf.mxu0
    %v1966 = vadd.f32 0.0, %v1965
    %v1967 = vpop.f32.mrf.mxu0
    %1968 = vmatprep.mubr.f32.mxu0 0.0
    %1969 = vmatmul.mubr.f32.gmra.mxu0 %v797
    %v1970 = vpop.f32.mrf.mxu0
    %v1971 = vadd.f32 0.0, %v1970
    %v1972 = vpop.f32.mrf.mxu0
    %1973 = vmatprep.mubr.f32.mxu0 0.0
    %1974 = vmatmul.mubr.f32.gmra.mxu0 %v800
    %v1975 = vpop.f32.mrf.mxu0
    %v1976 = vadd.f32 0.0, %v1975
    %v1977 = vpop.f32.mrf.mxu0
    %1978 = vmatprep.mubr.f32.mxu0 0.0
    %1979 = vmatmul.mubr.f32.gmra.mxu0 %v803
    %v1980 = vpop.f32.mrf.mxu0
    %v1981 = vadd.f32 0.0, %v1980
    %v1982 = vpop.f32.mrf.mxu0
    %1983 = vmatprep.mubr.f32.mxu0 0.0
    %1984 = vmatmul.mubr.f32.gmra.mxu0 %v806
    %v1985 = vpop.f32.mrf.mxu0
    %v1986 = vadd.f32 0.0, %v1985
    %v1987 = vpop.f32.mrf.mxu0
    %1988 = vmatprep.mubr.f32.mxu0 0.0
    %1989 = vmatmul.mubr.f32.gmra.mxu0 %v809
    %v1990 = vpop.f32.mrf.mxu0
    %v1991 = vadd.f32 0.0, %v1990
    %v1992 = vpop.f32.mrf.mxu0
    %1993 = vmatprep.mubr.f32.mxu0 0.0
    %1994 = vmatmul.mubr.f32.gmra.mxu0 %v812
    %v1995 = vpop.f32.mrf.mxu0
    %v1996 = vadd.f32 0.0, %v1995
    %v1997 = vpop.f32.mrf.mxu0
    %1998 = vmatprep.mubr.f32.mxu0 0.0
    %1999 = vmatmul.mubr.f32.gmra.mxu0 %v815
    %v2000 = vpop.f32.mrf.mxu0
    %v2001 = vadd.f32 0.0, %v2000
    %v2002 = vpop.f32.mrf.mxu0
    %2003 = vmatprep.mubr.f32.mxu0 0.0
    %2004 = vmatmul.mubr.f32.gmra.mxu0 %v818
    %v2005 = vpop.f32.mrf.mxu0
    %v2006 = vadd.f32 0.0, %v2005
    %v2007 = vpop.f32.mrf.mxu0
    %2008 = vmatprep.mubr.f32.mxu0 0.0
    %2009 = vmatmul.mubr.f32.gmra.mxu0 %v821
    %v2010 = vpop.f32.mrf.mxu0
    %v2011 = vadd.f32 0.0, %v2010
    %v2012 = vpop.f32.mrf.mxu0
    %2013 = vmatprep.mubr.f32.mxu0 0.0
    %2014 = vmatmul.mubr.f32.gmra.mxu0 %v824
    %v2015 = vpop.f32.mrf.mxu0
    %v2016 = vadd.f32 0.0, %v2015
    %v2017 = vpop.f32.mrf.mxu0
    %2018 = vmatprep.mubr.f32.mxu0 0.0
    %2019 = vmatmul.mubr.f32.gmra.mxu0 %v827
    %v2020 = vpop.f32.mrf.mxu0
    %v2021 = vadd.f32 0.0, %v2020
    %v2022 = vpop.f32.mrf.mxu0
    %2023 = vmatprep.mubr.f32.mxu0 0.0
    %2024 = vmatmul.mubr.f32.gmra.mxu0 %v830
    %v2025 = vpop.f32.mrf.mxu0
    %v2026 = vadd.f32 0.0, %v2025
    %v2027 = vpop.f32.mrf.mxu0
    %2028 = vmatprep.mubr.f32.mxu0 0.0
    %2029 = vmatmul.mubr.f32.gmra.mxu0 %v833
    %v2030 = vpop.f32.mrf.mxu0
    %v2031 = vadd.f32 0.0, %v2030
    %v2032 = vpop.f32.mrf.mxu0
    %2033 = vmatprep.mubr.f32.mxu0 0.0
    %2034 = vmatmul.mubr.f32.gmra.mxu0 %v836
    %v2035 = vpop.f32.mrf.mxu0
    %v2036 = vadd.f32 0.0, %v2035
    %v2037 = vpop.f32.mrf.mxu0
    %2038 = vmatprep.mubr.f32.mxu0 0.0
    %2039 = vmatmul.mubr.f32.gmra.mxu0 %v839
    %v2040 = vpop.f32.mrf.mxu0
    %v2041 = vadd.f32 0.0, %v2040
    %v2042 = vpop.f32.mrf.mxu0
    %2043 = vmatprep.mubr.f32.mxu0 0.0
    %2044 = vmatmul.mubr.f32.gmra.mxu0 %v842
    %v2045 = vpop.f32.mrf.mxu0
    %v2046 = vadd.f32 0.0, %v2045
    %v2047 = vpop.f32.mrf.mxu0
    %2048 = vmatprep.mubr.f32.mxu0 0.0
    %2049 = vmatmul.mubr.f32.gmra.mxu0 %v845
    %v2050 = vpop.f32.mrf.mxu0
    %v2051 = vadd.f32 0.0, %v2050
    %v2052 = vpop.f32.mrf.mxu0
    %2053 = vmatprep.mubr.f32.mxu0 0.0
    %2054 = vmatmul.mubr.f32.gmra.mxu0 %v848
    %v2055 = vpop.f32.mrf.mxu0
    %v2056 = vadd.f32 0.0, %v2055
    %v2057 = vpop.f32.mrf.mxu0
    %2058 = vmatprep.mubr.f32.mxu0 0.0
    %2059 = vmatmul.mubr.f32.gmra.mxu0 %v851
    %v2060 = vpop.f32.mrf.mxu0
    %v2061 = vadd.f32 0.0, %v2060
    %v2062 = vpop.f32.mrf.mxu0
    %2063 = vmatprep.mubr.f32.mxu0 0.0
    %2064 = vmatmul.mubr.f32.gmra.mxu0 %v854
    %v2065 = vpop.f32.mrf.mxu0
    %v2066 = vadd.f32 0.0, %v2065
    %v2067 = vpop.f32.mrf.mxu0
    %2068 = vmatprep.mubr.f32.mxu0 0.0
    %2069 = vmatmul.mubr.f32.gmra.mxu0 %v857
    %v2070 = vpop.f32.mrf.mxu0
    %v2071 = vadd.f32 0.0, %v2070
    %v2072 = vpop.f32.mrf.mxu0
    %2073 = vmatprep.mubr.f32.mxu0 0.0
    %2074 = vmatmul.mubr.f32.gmra.mxu0 %v860
    %v2075 = vpop.f32.mrf.mxu0
    %v2076 = vadd.f32 0.0, %v2075
    %v2077 = vpop.f32.mrf.mxu0
    %2078 = vmatprep.mubr.f32.mxu0 0.0
    %2079 = vmatmul.mubr.f32.gmra.mxu0 %v863
    %v2080 = vpop.f32.mrf.mxu0
    %v2081 = vadd.f32 0.0, %v2080
    %v2082 = vpop.f32.mrf.mxu0
    %2083 = vmatprep.mubr.f32.mxu0 0.0
    %2084 = vmatmul.mubr.f32.gmra.mxu0 %v866
    %v2085 = vpop.f32.mrf.mxu0
    %v2086 = vadd.f32 0.0, %v2085
    %v2087 = vpop.f32.mrf.mxu0
    %2088 = vmatprep.mubr.f32.mxu0 0.0
    %2089 = vmatmul.mubr.f32.gmra.mxu0 %v869
    %v2090 = vpop.f32.mrf.mxu0
    %v2091 = vadd.f32 0.0, %v2090
    %v2092 = vpop.f32.mrf.mxu0
    %2093 = vmatprep.mubr.f32.mxu0 0.0
    %2094 = vmatmul.mubr.f32.gmra.mxu0 %v872
    %v2095 = vpop.f32.mrf.mxu0
    %v2096 = vadd.f32 0.0, %v2095
    %v2097 = vpop.f32.mrf.mxu0
    %2098 = vmatprep.mubr.f32.mxu0 0.0
    %2099 = vmatmul.mubr.f32.gmra.mxu0 %v875
    %v2100 = vpop.f32.mrf.mxu0
    %v2101 = vadd.f32 0.0, %v2100
    %v2102 = vpop.f32.mrf.mxu0
    %2103 = vmatprep.mubr.f32.mxu0 0.0
    %2104 = vmatmul.mubr.f32.gmra.mxu0 %v878
    %v2105 = vpop.f32.mrf.mxu0
    %v2106 = vadd.f32 0.0, %v2105
    %v2107 = vpop.f32.mrf.mxu0
    %2108 = vmatprep.mubr.f32.mxu0 0.0
    %2109 = vmatmul.mubr.f32.gmra.mxu0 %v881
    %v2110 = vpop.f32.mrf.mxu0
    %v2111 = vadd.f32 0.0, %v2110
    %v2112 = vpop.f32.mrf.mxu0
    %2113 = vmatprep.mubr.f32.mxu0 0.0
    %2114 = vmatmul.mubr.f32.gmra.mxu0 %v884
    %v2115 = vpop.f32.mrf.mxu0
    %v2116 = vadd.f32 0.0, %v2115
    %v2117 = vpop.f32.mrf.mxu0
    %2118 = vmatprep.mubr.f32.mxu0 0.0
    %2119 = vmatmul.mubr.f32.gmra.mxu0 %v887
    %v2120 = vpop.f32.mrf.mxu0
    %v2121 = vadd.f32 0.0, %v2120
    %v2122 = vpop.f32.mrf.mxu0
    %2123 = vmatprep.mubr.f32.mxu0 0.0
    %2124 = vmatmul.mubr.f32.gmra.mxu0 %v890
    %v2125 = vpop.f32.mrf.mxu0
    %v2126 = vadd.f32 0.0, %v2125
    %v2127 = vpop.f32.mrf.mxu0
    %2128 = vmatprep.mubr.f32.mxu0 0.0
    %2129 = vmatmul.mubr.f32.gmra.mxu0 %v893
    %v2130 = vpop.f32.mrf.mxu0
    %v2131 = vadd.f32 0.0, %v2130
    %v2132 = vpop.f32.mrf.mxu0
    %2133 = vmatprep.mubr.f32.mxu0 0.0
    %2134 = vmatmul.mubr.f32.gmra.mxu0 %v896
    %v2135 = vpop.f32.mrf.mxu0
    %v2136 = vadd.f32 0.0, %v2135
    %v2137 = vpop.f32.mrf.mxu0
    %2138 = vmatprep.mubr.f32.mxu0 0.0
    %2139 = vmatmul.mubr.f32.gmra.mxu0 %v899
    %v2140 = vpop.f32.mrf.mxu0
    %v2141 = vadd.f32 0.0, %v2140
    %v2142 = vpop.f32.mrf.mxu0
    %2143 = vmatprep.mubr.f32.mxu0 0.0
    %2144 = vmatmul.mubr.f32.gmra.mxu0 %v902
    %v2145 = vpop.f32.mrf.mxu0
    %v2146 = vadd.f32 0.0, %v2145
    %v2147 = vpop.f32.mrf.mxu0
    %2148 = vmatprep.mubr.f32.mxu0 0.0
    %2149 = vmatmul.mubr.f32.gmra.mxu0 %v905
    %v2150 = vpop.f32.mrf.mxu0
    %v2151 = vadd.f32 0.0, %v2150
    %v2152 = vpop.f32.mrf.mxu0
    %2153 = vmatprep.mubr.f32.mxu0 0.0
    %2154 = vmatmul.mubr.f32.gmra.mxu0 %v908
    %v2155 = vpop.f32.mrf.mxu0
    %v2156 = vadd.f32 0.0, %v2155
    %v2157 = vpop.f32.mrf.mxu0
    %2158 = vmatprep.mubr.f32.mxu0 0.0
    %2159 = vmatmul.mubr.f32.gmra.mxu0 %v911
    %v2160 = vpop.f32.mrf.mxu0
    %v2161 = vadd.f32 0.0, %v2160
    %v2162 = vpop.f32.mrf.mxu0
    %2163 = vmatprep.mubr.f32.mxu0 0.0
    %2164 = vmatmul.mubr.f32.gmra.mxu0 %v914
    %v2165 = vpop.f32.mrf.mxu0
    %v2166 = vadd.f32 0.0, %v2165
    %v2167 = vpop.f32.mrf.mxu0
    %2168 = vmatprep.mubr.f32.mxu0 0.0
    %2169 = vmatmul.mubr.f32.gmra.mxu0 %v917
    %v2170 = vpop.f32.mrf.mxu0
    %v2171 = vadd.f32 0.0, %v2170
    %v2172 = vpop.f32.mrf.mxu0
    %2173 = vmatprep.mubr.f32.mxu0 0.0
    %2174 = vmatmul.mubr.f32.gmra.mxu0 %v920
    %v2175 = vpop.f32.mrf.mxu0
    %v2176 = vadd.f32 0.0, %v2175
    %v2177 = vpop.f32.mrf.mxu0
    %2178 = vmatprep.mubr.f32.mxu0 0.0
    %2179 = vmatmul.mubr.f32.gmra.mxu0 %v923
    %v2180 = vpop.f32.mrf.mxu0
    %v2181 = vadd.f32 0.0, %v2180
    %v2182 = vpop.f32.mrf.mxu0
    %2183 = vmatprep.mubr.f32.mxu0 0.0
    %2184 = vmatmul.mubr.f32.gmra.mxu0 %v926
    %v2185 = vpop.f32.mrf.mxu0
    %v2186 = vadd.f32 0.0, %v2185
    %v2187 = vpop.f32.mrf.mxu0
    %2188 = vmatprep.mubr.f32.mxu0 0.0
    %2189 = vmatmul.mubr.f32.gmra.mxu0 %v929
    %v2190 = vpop.f32.mrf.mxu0
    %v2191 = vadd.f32 0.0, %v2190
    %v2192 = vpop.f32.mrf.mxu0
    %2193 = vmatprep.mubr.f32.mxu0 0.0
    %2194 = vmatmul.mubr.f32.gmra.mxu0 %v932
    %v2195 = vpop.f32.mrf.mxu0
    %v2196 = vadd.f32 0.0, %v2195
    %v2197 = vpop.f32.mrf.mxu0
    %2198 = vmatprep.mubr.f32.mxu0 0.0
    %2199 = vmatmul.mubr.f32.gmra.mxu0 %v935
    %v2200 = vpop.f32.mrf.mxu0
    %v2201 = vadd.f32 0.0, %v2200
    %v2202 = vpop.f32.mrf.mxu0
    %2203 = vmatprep.mubr.f32.mxu0 0.0
    %2204 = vmatmul.mubr.f32.gmra.mxu0 %v938
    %v2205 = vpop.f32.mrf.mxu0
    %v2206 = vadd.f32 0.0, %v2205
    %v2207 = vpop.f32.mrf.mxu0
    %2208 = vmatprep.mubr.f32.mxu0 0.0
    %2209 = vmatmul.mubr.f32.gmra.mxu0 %v941
    %v2210 = vpop.f32.mrf.mxu0
    %v2211 = vadd.f32 0.0, %v2210
    %v2212 = vpop.f32.mrf.mxu0
    %2213 = vmatprep.mubr.f32.mxu0 0.0
    %2214 = vmatmul.mubr.f32.gmra.mxu0 %v944
    %v2215 = vpop.f32.mrf.mxu0
    %v2216 = vadd.f32 0.0, %v2215
    %v2217 = vpop.f32.mrf.mxu0
    %2218 = vmatprep.mubr.f32.mxu0 0.0
    %2219 = vmatmul.mubr.f32.gmra.mxu0 %v947
    %v2220 = vpop.f32.mrf.mxu0
    %v2221 = vadd.f32 0.0, %v2220
    %v2222 = vpop.f32.mrf.mxu0
    %2223 = vmatprep.mubr.f32.mxu0 0.0
    %2224 = vmatmul.mubr.f32.gmra.mxu0 %v950
    %v2225 = vpop.f32.mrf.mxu0
    %v2226 = vadd.f32 0.0, %v2225
    %v2227 = vpop.f32.mrf.mxu0
    %2228 = vmatprep.mubr.f32.mxu0 0.0
    %2229 = vmatmul.mubr.f32.gmra.mxu0 %v953
    %v2230 = vpop.f32.mrf.mxu0
    %v2231 = vadd.f32 0.0, %v2230
    %v2232 = vpop.f32.mrf.mxu0
    %2233 = vmatprep.mubr.f32.mxu0 0.0
    %2234 = vmatmul.mubr.f32.gmra.mxu0 %v956
    %v2235 = vpop.f32.mrf.mxu0
    %v2236 = vadd.f32 0.0, %v2235
    %v2237 = vpop.f32.mrf.mxu0
    %2238 = vmatprep.mubr.f32.mxu0 0.0
    %2239 = vmatmul.mubr.f32.gmra.mxu0 %v959
    %v2240 = vpop.f32.mrf.mxu0
    %v2241 = vadd.f32 0.0, %v2240
    %v2242 = vpop.f32.mrf.mxu0
    %2243 = vmatprep.mubr.f32.mxu0 0.0
    %2244 = vmatmul.mubr.f32.gmra.mxu0 %v962
    %v2245 = vpop.f32.mrf.mxu0
    %v2246 = vadd.f32 0.0, %v2245
    %v2247 = vpop.f32.mrf.mxu0
    %2248 = vmatprep.mubr.f32.mxu0 0.0
    %2249 = vmatmul.mubr.f32.gmra.mxu0 %v965
    %v2250 = vpop.f32.mrf.mxu0
    %v2251 = vadd.f32 0.0, %v2250
    %v2252 = vpop.f32.mrf.mxu0
    %2253 = vmatprep.mubr.f32.mxu0 0.0
    %2254 = vmatmul.mubr.f32.gmra.mxu0 %v968
    %v2255 = vpop.f32.mrf.mxu0
    %v2256 = vadd.f32 0.0, %v2255
    %v2257 = vpop.f32.mrf.mxu0
    %2258 = vmatprep.mubr.f32.mxu0 0.0
    %2259 = vmatmul.mubr.f32.gmra.mxu0 %v971
    %v2260 = vpop.f32.mrf.mxu0
    %v2261 = vadd.f32 0.0, %v2260
    %v2262 = vpop.f32.mrf.mxu0
    %2263 = vmatprep.mubr.f32.mxu0 0.0
    %2264 = vmatmul.mubr.f32.gmra.mxu0 %v974
    %v2265 = vpop.f32.mrf.mxu0
    %v2266 = vadd.f32 0.0, %v2265
    %v2267 = vpop.f32.mrf.mxu0
    %2268 = vmatprep.mubr.f32.mxu0 0.0
    %2269 = vmatmul.mubr.f32.gmra.mxu0 %v977
    %v2270 = vpop.f32.mrf.mxu0
    %v2271 = vadd.f32 0.0, %v2270
    %v2272 = vpop.f32.mrf.mxu0
    %2273 = vmatprep.mubr.f32.mxu0 0.0
    %2274 = vmatmul.mubr.f32.gmra.mxu0 %v980
    %v2275 = vpop.f32.mrf.mxu0
    %v2276 = vadd.f32 0.0, %v2275
    %v2277 = vpop.f32.mrf.mxu0
    %2278 = vmatprep.mubr.f32.mxu0 0.0
    %2279 = vmatmul.mubr.f32.gmra.mxu0 %v983
    %v2280 = vpop.f32.mrf.mxu0
    %v2281 = vadd.f32 0.0, %v2280
    %v2282 = vpop.f32.mrf.mxu0
    %2283 = vmatprep.mubr.f32.mxu0 0.0
    %2284 = vmatmul.mubr.f32.gmra.mxu0 %v986
    %v2285 = vpop.f32.mrf.mxu0
    %v2286 = vadd.f32 0.0, %v2285
    %v2287 = vpop.f32.mrf.mxu0
    %2288 = vmatprep.mubr.f32.mxu0 0.0
    %2289 = vmatmul.mubr.f32.gmra.mxu0 %v989
    %v2290 = vpop.f32.mrf.mxu0
    %v2291 = vadd.f32 0.0, %v2290
    %v2292 = vpop.f32.mrf.mxu0
    %2293 = vmatprep.mubr.f32.mxu0 0.0
    %2294 = vmatmul.mubr.f32.gmra.mxu0 %v992
    %v2295 = vpop.f32.mrf.mxu0
    %v2296 = vadd.f32 0.0, %v2295
    %v2297 = vpop.f32.mrf.mxu0
    %2298 = vmatprep.mubr.f32.mxu0 0.0
    %2299 = vmatmul.mubr.f32.gmra.mxu0 %v995
    %v2300 = vpop.f32.mrf.mxu0
    %v2301 = vadd.f32 0.0, %v2300
    %v2302 = vpop.f32.mrf.mxu0
    %2303 = vmatprep.mubr.f32.mxu0 0.0
    %2304 = vmatmul.mubr.f32.gmra.mxu0 %v998
    %v2305 = vpop.f32.mrf.mxu0
    %v2306 = vadd.f32 0.0, %v2305
    %v2307 = vpop.f32.mrf.mxu0
    %2308 = vmatprep.mubr.f32.mxu0 0.0
    %2309 = vmatmul.mubr.f32.gmra.mxu0 %v1001
    %v2310 = vpop.f32.mrf.mxu0
    %v2311 = vadd.f32 0.0, %v2310
    %v2312 = vpop.f32.mrf.mxu0
    %2313 = vmatprep.mubr.f32.mxu0 0.0
    %2314 = vmatmul.mubr.f32.gmra.mxu0 %v1004
    %v2315 = vpop.f32.mrf.mxu0
    %v2316 = vadd.f32 0.0, %v2315
    %v2317 = vpop.f32.mrf.mxu0
    %2318 = vmatprep.mubr.f32.mxu0 0.0
    %2319 = vmatmul.mubr.f32.gmra.mxu0 %v1007
    %v2320 = vpop.f32.mrf.mxu0
    %v2321 = vadd.f32 0.0, %v2320
    %v2322 = vpop.f32.mrf.mxu0
    %2323 = vmatprep.mubr.f32.mxu0 0.0
    %2324 = vmatmul.mubr.f32.gmra.mxu0 %v1010
    %v2325 = vpop.f32.mrf.mxu0
    %v2326 = vadd.f32 0.0, %v2325
    %v2327 = vpop.f32.mrf.mxu0
    %2328 = vmatprep.mubr.f32.mxu0 0.0
    %2329 = vmatmul.mubr.f32.gmra.mxu0 %v1013
    %v2330 = vpop.f32.mrf.mxu0
    %v2331 = vadd.f32 0.0, %v2330
    %v2332 = vpop.f32.mrf.mxu0
    %2333 = vmatprep.mubr.f32.mxu0 0.0
    %2334 = vmatmul.mubr.f32.gmra.mxu0 %v1016
    %v2335 = vpop.f32.mrf.mxu0
    %v2336 = vadd.f32 0.0, %v2335
    %v2337 = vpop.f32.mrf.mxu0
    %2338 = vmatprep.mubr.f32.mxu0 0.0
    %2339 = vmatmul.mubr.f32.gmra.mxu0 %v1019
    %v2340 = vpop.f32.mrf.mxu0
    %v2341 = vadd.f32 0.0, %v2340
    %v2342 = vpop.f32.mrf.mxu0
    %2343 = vmatprep.mubr.f32.mxu0 0.0
    %2344 = vmatmul.mubr.f32.gmra.mxu0 %v1022
    %v2345 = vpop.f32.mrf.mxu0
    %v2346 = vadd.f32 0.0, %v2345
    %v2347 = vpop.f32.mrf.mxu0
    %2348 = vmatprep.mubr.f32.mxu0 0.0
    %2349 = vmatmul.mubr.f32.gmra.mxu0 %v1025
    %v2350 = vpop.f32.mrf.mxu0
    %v2351 = vadd.f32 0.0, %v2350
    %v2352 = vpop.f32.mrf.mxu0
    %2353 = vmatprep.mubr.f32.mxu0 0.0
    %2354 = vmatmul.mubr.f32.gmra.mxu0 %v1028
    %v2355 = vpop.f32.mrf.mxu0
    %v2356 = vadd.f32 0.0, %v2355
    %v2357 = vpop.f32.mrf.mxu0
    %2358 = vmatprep.mubr.f32.mxu0 0.0
    %2359 = vmatmul.mubr.f32.gmra.mxu0 %v1031
    %v2360 = vpop.f32.mrf.mxu0
    %v2361 = vadd.f32 0.0, %v2360
    %v2362 = vpop.f32.mrf.mxu0
    %2363 = vmatprep.mubr.f32.mxu0 0.0
    %2364 = vmatmul.mubr.f32.gmra.mxu0 %v1034
    %v2365 = vpop.f32.mrf.mxu0
    %v2366 = vadd.f32 0.0, %v2365
    %v2367 = vpop.f32.mrf.mxu0
    %2368 = vmatprep.mubr.f32.mxu0 0.0
    %2369 = vmatmul.mubr.f32.gmra.mxu0 %v1037
    %v2370 = vpop.f32.mrf.mxu0
    %v2371 = vadd.f32 0.0, %v2370
    %v2372 = vpop.f32.mrf.mxu0
    %2373 = vmatprep.mubr.f32.mxu0 0.0
    %2374 = vmatmul.mubr.f32.gmra.mxu0 %v1040
    %v2375 = vpop.f32.mrf.mxu0
    %v2376 = vadd.f32 0.0, %v2375
    %v2377 = vpop.f32.mrf.mxu0
    %2378 = vmatprep.mubr.f32.mxu0 0.0
    %2379 = vmatmul.mubr.f32.gmra.mxu0 %v1043
    %v2380 = vpop.f32.mrf.mxu0
    %v2381 = vadd.f32 0.0, %v2380
    %v2382 = vpop.f32.mrf.mxu0
    %2383 = vmatprep.mubr.f32.mxu0 0.0
    %2384 = vmatmul.mubr.f32.gmra.mxu0 %v1046
    %v2385 = vpop.f32.mrf.mxu0
    %v2386 = vadd.f32 0.0, %v2385
    %v2387 = vpop.f32.mrf.mxu0
    %2388 = vmatprep.mubr.f32.mxu0 0.0
    %2389 = vmatmul.mubr.f32.gmra.mxu0 %v1049
    %v2390 = vpop.f32.mrf.mxu0
    %v2391 = vadd.f32 0.0, %v2390
    %v2392 = vpop.f32.mrf.mxu0
    %2393 = vmatprep.mubr.f32.mxu0 0.0
    %2394 = vmatmul.mubr.f32.gmra.mxu0 %v1052
    %v2395 = vpop.f32.mrf.mxu0
    %v2396 = vadd.f32 0.0, %v2395
    %v2397 = vpop.f32.mrf.mxu0
    %2398 = vdwg.mxu0
    %v2399 = vld [vmem:[%s2] sm:$0xff]
    %v2400 = vld [vmem:[%s2 + $0x8] sm:$0xff]
    %vm2401 = vcmp.ne.f32.partialorder %v2399, 0.0
    %vm2402 = vcmp.ne.f32.partialorder %v2400, 0.0
    %v2403 = vsel %vm2401, 1, 0
    %v2404 = vsel %vm2402, 1, 0
    %vm2405 = vcmp.eq.s32.totalorder %v2403, 1
    %vm2406 = vcmp.eq.s32.totalorder %v2404, 1
    %v2407 = vsel %vm2405, %v1121, -3.4028235e+38
    %v2408 = vsel %vm2406, %v1126, -3.4028235e+38
    %v2409 = vsel %vm2405, %v1131, -3.4028235e+38
    %v2410 = vsel %vm2406, %v1136, -3.4028235e+38
    %v2411 = vsel %vm2405, %v1141, -3.4028235e+38
    %v2412 = vsel %vm2406, %v1146, -3.4028235e+38
    %v2413 = vsel %vm2405, %v1151, -3.4028235e+38
    %v2414 = vsel %vm2406, %v1156, -3.4028235e+38
    %v2415 = vsel %vm2405, %v1161, -3.4028235e+38
    %v2416 = vsel %vm2406, %v1166, -3.4028235e+38
    %v2417 = vsel %vm2405, %v1171, -3.4028235e+38
    %v2418 = vsel %vm2406, %v1176, -3.4028235e+38
    %v2419 = vsel %vm2405, %v1181, -3.4028235e+38
    %v2420 = vsel %vm2406, %v1186, -3.4028235e+38
    %v2421 = vsel %vm2405, %v1191, -3.4028235e+38
    %v2422 = vsel %vm2406, %v1196, -3.4028235e+38
    %v2423 = vsel %vm2405, %v1201, -3.4028235e+38
    %v2424 = vsel %vm2406, %v1206, -3.4028235e+38
    %v2425 = vsel %vm2405, %v1211, -3.4028235e+38
    %v2426 = vsel %vm2406, %v1216, -3.4028235e+38
    %v2427 = vsel %vm2405, %v1221, -3.4028235e+38
    %v2428 = vsel %vm2406, %v1226, -3.4028235e+38
    %v2429 = vsel %vm2405, %v1231, -3.4028235e+38
    %v2430 = vsel %vm2406, %v1236, -3.4028235e+38
    %v2431 = vsel %vm2405, %v1241, -3.4028235e+38
    %v2432 = vsel %vm2406, %v1246, -3.4028235e+38
    %v2433 = vsel %vm2405, %v1251, -3.4028235e+38
    %v2434 = vsel %vm2406, %v1256, -3.4028235e+38
    %v2435 = vsel %vm2405, %v1261, -3.4028235e+38
    %v2436 = vsel %vm2406, %v1266, -3.4028235e+38
    %v2437 = vsel %vm2405, %v1271, -3.4028235e+38
    %v2438 = vsel %vm2406, %v1276, -3.4028235e+38
    %v2439 = vsel %vm2405, %v1281, -3.4028235e+38
    %v2440 = vsel %vm2406, %v1286, -3.4028235e+38
    %v2441 = vsel %vm2405, %v1291, -3.4028235e+38
    %v2442 = vsel %vm2406, %v1296, -3.4028235e+38
    %v2443 = vsel %vm2405, %v1301, -3.4028235e+38
    %v2444 = vsel %vm2406, %v1306, -3.4028235e+38
    %v2445 = vsel %vm2405, %v1311, -3.4028235e+38
    %v2446 = vsel %vm2406, %v1316, -3.4028235e+38
    %v2447 = vsel %vm2405, %v1321, -3.4028235e+38
    %v2448 = vsel %vm2406, %v1326, -3.4028235e+38
    %v2449 = vsel %vm2405, %v1331, -3.4028235e+38
    %v2450 = vsel %vm2406, %v1336, -3.4028235e+38
    %v2451 = vsel %vm2405, %v1341, -3.4028235e+38
    %v2452 = vsel %vm2406, %v1346, -3.4028235e+38
    %v2453 = vsel %vm2405, %v1351, -3.4028235e+38
    %v2454 = vsel %vm2406, %v1356, -3.4028235e+38
    %v2455 = vsel %vm2405, %v1361, -3.4028235e+38
    %v2456 = vsel %vm2406, %v1366, -3.4028235e+38
    %v2457 = vsel %vm2405, %v1371, -3.4028235e+38
    %v2458 = vsel %vm2406, %v1376, -3.4028235e+38
    %v2459 = vsel %vm2405, %v1381, -3.4028235e+38
    %v2460 = vsel %vm2406, %v1386, -3.4028235e+38
    %v2461 = vsel %vm2405, %v1391, -3.4028235e+38
    %v2462 = vsel %vm2406, %v1396, -3.4028235e+38
    %v2463 = vsel %vm2405, %v1401, -3.4028235e+38
    %v2464 = vsel %vm2406, %v1406, -3.4028235e+38
    %v2465 = vsel %vm2405, %v1411, -3.4028235e+38
    %v2466 = vsel %vm2406, %v1416, -3.4028235e+38
    %v2467 = vsel %vm2405, %v1421, -3.4028235e+38
    %v2468 = vsel %vm2406, %v1426, -3.4028235e+38
    %v2469 = vsel %vm2405, %v1431, -3.4028235e+38
    %v2470 = vsel %vm2406, %v1436, -3.4028235e+38
    %v2471 = vsel %vm2405, %v1441, -3.4028235e+38
    %v2472 = vsel %vm2406, %v1446, -3.4028235e+38
    %v2473 = vsel %vm2405, %v1451, -3.4028235e+38
    %v2474 = vsel %vm2406, %v1456, -3.4028235e+38
    %v2475 = vsel %vm2405, %v1461, -3.4028235e+38
    %v2476 = vsel %vm2406, %v1466, -3.4028235e+38
    %v2477 = vsel %vm2405, %v1471, -3.4028235e+38
    %v2478 = vsel %vm2406, %v1476, -3.4028235e+38
    %v2479 = vsel %vm2405, %v1481, -3.4028235e+38
    %v2480 = vsel %vm2406, %v1486, -3.4028235e+38
    %v2481 = vsel %vm2405, %v1491, -3.4028235e+38
    %v2482 = vsel %vm2406, %v1496, -3.4028235e+38
    %v2483 = vsel %vm2405, %v1501, -3.4028235e+38
    %v2484 = vsel %vm2406, %v1506, -3.4028235e+38
    %v2485 = vsel %vm2405, %v1511, -3.4028235e+38
    %v2486 = vsel %vm2406, %v1516, -3.4028235e+38
    %v2487 = vsel %vm2405, %v1521, -3.4028235e+38
    %v2488 = vsel %vm2406, %v1526, -3.4028235e+38
    %v2489 = vsel %vm2405, %v1531, -3.4028235e+38
    %v2490 = vsel %vm2406, %v1536, -3.4028235e+38
    %v2491 = vsel %vm2405, %v1541, -3.4028235e+38
    %v2492 = vsel %vm2406, %v1546, -3.4028235e+38
    %v2493 = vsel %vm2405, %v1551, -3.4028235e+38
    %v2494 = vsel %vm2406, %v1556, -3.4028235e+38
    %v2495 = vsel %vm2405, %v1561, -3.4028235e+38
    %v2496 = vsel %vm2406, %v1566, -3.4028235e+38
    %v2497 = vsel %vm2405, %v1571, -3.4028235e+38
    %v2498 = vsel %vm2406, %v1576, -3.4028235e+38
    %v2499 = vsel %vm2405, %v1581, -3.4028235e+38
    %v2500 = vsel %vm2406, %v1586, -3.4028235e+38
    %v2501 = vsel %vm2405, %v1591, -3.4028235e+38
    %v2502 = vsel %vm2406, %v1596, -3.4028235e+38
    %v2503 = vsel %vm2405, %v1601, -3.4028235e+38
    %v2504 = vsel %vm2406, %v1606, -3.4028235e+38
    %v2505 = vsel %vm2405, %v1611, -3.4028235e+38
    %v2506 = vsel %vm2406, %v1616, -3.4028235e+38
    %v2507 = vsel %vm2405, %v1621, -3.4028235e+38
    %v2508 = vsel %vm2406, %v1626, -3.4028235e+38
    %v2509 = vsel %vm2405, %v1631, -3.4028235e+38
    %v2510 = vsel %vm2406, %v1636, -3.4028235e+38
    %v2511 = vsel %vm2405, %v1641, -3.4028235e+38
    %v2512 = vsel %vm2406, %v1646, -3.4028235e+38
    %v2513 = vsel %vm2405, %v1651, -3.4028235e+38
    %v2514 = vsel %vm2406, %v1656, -3.4028235e+38
    %v2515 = vsel %vm2405, %v1661, -3.4028235e+38
    %v2516 = vsel %vm2406, %v1666, -3.4028235e+38
    %v2517 = vsel %vm2405, %v1671, -3.4028235e+38
    %v2518 = vsel %vm2406, %v1676, -3.4028235e+38
    %v2519 = vsel %vm2405, %v1681, -3.4028235e+38
    %v2520 = vsel %vm2406, %v1686, -3.4028235e+38
    %v2521 = vsel %vm2405, %v1691, -3.4028235e+38
    %v2522 = vsel %vm2406, %v1696, -3.4028235e+38
    %v2523 = vsel %vm2405, %v1701, -3.4028235e+38
    %v2524 = vsel %vm2406, %v1706, -3.4028235e+38
    %v2525 = vsel %vm2405, %v1711, -3.4028235e+38
    %v2526 = vsel %vm2406, %v1716, -3.4028235e+38
    %v2527 = vsel %vm2405, %v1721, -3.4028235e+38
    %v2528 = vsel %vm2406, %v1726, -3.4028235e+38
    %v2529 = vsel %vm2405, %v1731, -3.4028235e+38
    %v2530 = vsel %vm2406, %v1736, -3.4028235e+38
    %v2531 = vsel %vm2405, %v1741, -3.4028235e+38
    %v2532 = vsel %vm2406, %v1746, -3.4028235e+38
    %v2533 = vsel %vm2405, %v1751, -3.4028235e+38
    %v2534 = vsel %vm2406, %v1756, -3.4028235e+38
    %v2535 = vsel %vm2405, %v1761, -3.4028235e+38
    %v2536 = vsel %vm2406, %v1766, -3.4028235e+38
    %v2537 = vsel %vm2405, %v1771, -3.4028235e+38
    %v2538 = vsel %vm2406, %v1776, -3.4028235e+38
    %v2539 = vsel %vm2405, %v1781, -3.4028235e+38
    %v2540 = vsel %vm2406, %v1786, -3.4028235e+38
    %v2541 = vsel %vm2405, %v1791, -3.4028235e+38
    %v2542 = vsel %vm2406, %v1796, -3.4028235e+38
    %v2543 = vsel %vm2405, %v1801, -3.4028235e+38
    %v2544 = vsel %vm2406, %v1806, -3.4028235e+38
    %v2545 = vsel %vm2405, %v1811, -3.4028235e+38
    %v2546 = vsel %vm2406, %v1816, -3.4028235e+38
    %v2547 = vsel %vm2405, %v1821, -3.4028235e+38
    %v2548 = vsel %vm2406, %v1826, -3.4028235e+38
    %v2549 = vsel %vm2405, %v1831, -3.4028235e+38
    %v2550 = vsel %vm2406, %v1836, -3.4028235e+38
    %v2551 = vsel %vm2405, %v1841, -3.4028235e+38
    %v2552 = vsel %vm2406, %v1846, -3.4028235e+38
    %v2553 = vsel %vm2405, %v1851, -3.4028235e+38
    %v2554 = vsel %vm2406, %v1856, -3.4028235e+38
    %v2555 = vsel %vm2405, %v1861, -3.4028235e+38
    %v2556 = vsel %vm2406, %v1866, -3.4028235e+38
    %v2557 = vsel %vm2405, %v1871, -3.4028235e+38
    %v2558 = vsel %vm2406, %v1876, -3.4028235e+38
    %v2559 = vsel %vm2405, %v1881, -3.4028235e+38
    %v2560 = vsel %vm2406, %v1886, -3.4028235e+38
    %v2561 = vsel %vm2405, %v1891, -3.4028235e+38
    %v2562 = vsel %vm2406, %v1896, -3.4028235e+38
    %v2563 = vsel %vm2405, %v1901, -3.4028235e+38
    %v2564 = vsel %vm2406, %v1906, -3.4028235e+38
    %v2565 = vsel %vm2405, %v1911, -3.4028235e+38
    %v2566 = vsel %vm2406, %v1916, -3.4028235e+38
    %v2567 = vsel %vm2405, %v1921, -3.4028235e+38
    %v2568 = vsel %vm2406, %v1926, -3.4028235e+38
    %v2569 = vsel %vm2405, %v1931, -3.4028235e+38
    %v2570 = vsel %vm2406, %v1936, -3.4028235e+38
    %v2571 = vsel %vm2405, %v1941, -3.4028235e+38
    %v2572 = vsel %vm2406, %v1946, -3.4028235e+38
    %v2573 = vsel %vm2405, %v1951, -3.4028235e+38
    %v2574 = vsel %vm2406, %v1956, -3.4028235e+38
    %v2575 = vsel %vm2405, %v1961, -3.4028235e+38
    %v2576 = vsel %vm2406, %v1966, -3.4028235e+38
    %v2577 = vsel %vm2405, %v1971, -3.4028235e+38
    %v2578 = vsel %vm2406, %v1976, -3.4028235e+38
    %v2579 = vsel %vm2405, %v1981, -3.4028235e+38
    %v2580 = vsel %vm2406, %v1986, -3.4028235e+38
    %v2581 = vsel %vm2405, %v1991, -3.4028235e+38
    %v2582 = vsel %vm2406, %v1996, -3.4028235e+38
    %v2583 = vsel %vm2405, %v2001, -3.4028235e+38
    %v2584 = vsel %vm2406, %v2006, -3.4028235e+38
    %v2585 = vsel %vm2405, %v2011, -3.4028235e+38
    %v2586 = vsel %vm2406, %v2016, -3.4028235e+38
    %v2587 = vsel %vm2405, %v2021, -3.4028235e+38
    %v2588 = vsel %vm2406, %v2026, -3.4028235e+38
    %v2589 = vsel %vm2405, %v2031, -3.4028235e+38
    %v2590 = vsel %vm2406, %v2036, -3.4028235e+38
    %v2591 = vsel %vm2405, %v2041, -3.4028235e+38
    %v2592 = vsel %vm2406, %v2046, -3.4028235e+38
    %v2593 = vsel %vm2405, %v2051, -3.4028235e+38
    %v2594 = vsel %vm2406, %v2056, -3.4028235e+38
    %v2595 = vsel %vm2405, %v2061, -3.4028235e+38
    %v2596 = vsel %vm2406, %v2066, -3.4028235e+38
    %v2597 = vsel %vm2405, %v2071, -3.4028235e+38
    %v2598 = vsel %vm2406, %v2076, -3.4028235e+38
    %v2599 = vsel %vm2405, %v2081, -3.4028235e+38
    %v2600 = vsel %vm2406, %v2086, -3.4028235e+38
    %v2601 = vsel %vm2405, %v2091, -3.4028235e+38
    %v2602 = vsel %vm2406, %v2096, -3.4028235e+38
    %v2603 = vsel %vm2405, %v2101, -3.4028235e+38
    %v2604 = vsel %vm2406, %v2106, -3.4028235e+38
    %v2605 = vsel %vm2405, %v2111, -3.4028235e+38
    %v2606 = vsel %vm2406, %v2116, -3.4028235e+38
    %v2607 = vsel %vm2405, %v2121, -3.4028235e+38
    %v2608 = vsel %vm2406, %v2126, -3.4028235e+38
    %v2609 = vsel %vm2405, %v2131, -3.4028235e+38
    %v2610 = vsel %vm2406, %v2136, -3.4028235e+38
    %v2611 = vsel %vm2405, %v2141, -3.4028235e+38
    %v2612 = vsel %vm2406, %v2146, -3.4028235e+38
    %v2613 = vsel %vm2405, %v2151, -3.4028235e+38
    %v2614 = vsel %vm2406, %v2156, -3.4028235e+38
    %v2615 = vsel %vm2405, %v2161, -3.4028235e+38
    %v2616 = vsel %vm2406, %v2166, -3.4028235e+38
    %v2617 = vsel %vm2405, %v2171, -3.4028235e+38
    %v2618 = vsel %vm2406, %v2176, -3.4028235e+38
    %v2619 = vsel %vm2405, %v2181, -3.4028235e+38
    %v2620 = vsel %vm2406, %v2186, -3.4028235e+38
    %v2621 = vsel %vm2405, %v2191, -3.4028235e+38
    %v2622 = vsel %vm2406, %v2196, -3.4028235e+38
    %v2623 = vsel %vm2405, %v2201, -3.4028235e+38
    %v2624 = vsel %vm2406, %v2206, -3.4028235e+38
    %v2625 = vsel %vm2405, %v2211, -3.4028235e+38
    %v2626 = vsel %vm2406, %v2216, -3.4028235e+38
    %v2627 = vsel %vm2405, %v2221, -3.4028235e+38
    %v2628 = vsel %vm2406, %v2226, -3.4028235e+38
    %v2629 = vsel %vm2405, %v2231, -3.4028235e+38
    %v2630 = vsel %vm2406, %v2236, -3.4028235e+38
    %v2631 = vsel %vm2405, %v2241, -3.4028235e+38
    %v2632 = vsel %vm2406, %v2246, -3.4028235e+38
    %v2633 = vsel %vm2405, %v2251, -3.4028235e+38
    %v2634 = vsel %vm2406, %v2256, -3.4028235e+38
    %v2635 = vsel %vm2405, %v2261, -3.4028235e+38
    %v2636 = vsel %vm2406, %v2266, -3.4028235e+38
    %v2637 = vsel %vm2405, %v2271, -3.4028235e+38
    %v2638 = vsel %vm2406, %v2276, -3.4028235e+38
    %v2639 = vsel %vm2405, %v2281, -3.4028235e+38
    %v2640 = vsel %vm2406, %v2286, -3.4028235e+38
    %v2641 = vsel %vm2405, %v2291, -3.4028235e+38
    %v2642 = vsel %vm2406, %v2296, -3.4028235e+38
    %v2643 = vsel %vm2405, %v2301, -3.4028235e+38
    %v2644 = vsel %vm2406, %v2306, -3.4028235e+38
    %v2645 = vsel %vm2405, %v2311, -3.4028235e+38
    %v2646 = vsel %vm2406, %v2316, -3.4028235e+38
    %v2647 = vsel %vm2405, %v2321, -3.4028235e+38
    %v2648 = vsel %vm2406, %v2326, -3.4028235e+38
    %v2649 = vsel %vm2405, %v2331, -3.4028235e+38
    %v2650 = vsel %vm2406, %v2336, -3.4028235e+38
    %v2651 = vsel %vm2405, %v2341, -3.4028235e+38
    %v2652 = vsel %vm2406, %v2346, -3.4028235e+38
    %v2653 = vsel %vm2405, %v2351, -3.4028235e+38
    %v2654 = vsel %vm2406, %v2356, -3.4028235e+38
    %v2655 = vsel %vm2405, %v2361, -3.4028235e+38
    %v2656 = vsel %vm2406, %v2366, -3.4028235e+38
    %v2657 = vsel %vm2405, %v2371, -3.4028235e+38
    %v2658 = vsel %vm2406, %v2376, -3.4028235e+38
    %v2659 = vsel %vm2405, %v2381, -3.4028235e+38
    %v2660 = vsel %vm2406, %v2386, -3.4028235e+38
    %v2661 = vsel %vm2405, %v2391, -3.4028235e+38
    %v2662 = vsel %vm2406, %v2396, -3.4028235e+38
    %v2663 = vmax.f32 %v2407, %v2408
    %v2664 = vrot.slane %v2663, 4
    %v2665 = vmax.f32 %v2663, %v2664
    %v2666 = vrot.slane %v2665, 2
    %v2667 = vmax.f32 %v2665, %v2666
    %v2668 = vrot.slane %v2667, 1
    %v2669 = vmax.f32 %v2667, %v2668
    %v2670 = vmax.f32 %v2409, %v2410
    %v2671 = vrot.slane %v2670, 4
    %v2672 = vmax.f32 %v2670, %v2671
    %v2673 = vrot.slane %v2672, 2
    %v2674 = vmax.f32 %v2672, %v2673
    %v2675 = vrot.slane %v2674, 1
    %v2676 = vmax.f32 %v2674, %v2675
    %v2677 = vmax.f32 %v2411, %v2412
    %v2678 = vrot.slane %v2677, 4
    %v2679 = vmax.f32 %v2677, %v2678
    %v2680 = vrot.slane %v2679, 2
    %v2681 = vmax.f32 %v2679, %v2680
    %v2682 = vrot.slane %v2681, 1
    %v2683 = vmax.f32 %v2681, %v2682
    %v2684 = vmax.f32 %v2413, %v2414
    %v2685 = vrot.slane %v2684, 4
    %v2686 = vmax.f32 %v2684, %v2685
    %v2687 = vrot.slane %v2686, 2
    %v2688 = vmax.f32 %v2686, %v2687
    %v2689 = vrot.slane %v2688, 1
    %v2690 = vmax.f32 %v2688, %v2689
    %v2691 = vmax.f32 %v2415, %v2416
    %v2692 = vrot.slane %v2691, 4
    %v2693 = vmax.f32 %v2691, %v2692
    %v2694 = vrot.slane %v2693, 2
    %v2695 = vmax.f32 %v2693, %v2694
    %v2696 = vrot.slane %v2695, 1
    %v2697 = vmax.f32 %v2695, %v2696
    %v2698 = vmax.f32 %v2417, %v2418
    %v2699 = vrot.slane %v2698, 4
    %v2700 = vmax.f32 %v2698, %v2699
    %v2701 = vrot.slane %v2700, 2
    %v2702 = vmax.f32 %v2700, %v2701
    %v2703 = vrot.slane %v2702, 1
    %v2704 = vmax.f32 %v2702, %v2703
    %v2705 = vmax.f32 %v2419, %v2420
    %v2706 = vrot.slane %v2705, 4
    %v2707 = vmax.f32 %v2705, %v2706
    %v2708 = vrot.slane %v2707, 2
    %v2709 = vmax.f32 %v2707, %v2708
    %v2710 = vrot.slane %v2709, 1
    %v2711 = vmax.f32 %v2709, %v2710
    %v2712 = vmax.f32 %v2421, %v2422
    %v2713 = vrot.slane %v2712, 4
    %v2714 = vmax.f32 %v2712, %v2713
    %v2715 = vrot.slane %v2714, 2
    %v2716 = vmax.f32 %v2714, %v2715
    %v2717 = vrot.slane %v2716, 1
    %v2718 = vmax.f32 %v2716, %v2717
    %v2719 = vmax.f32 %v2423, %v2424
    %v2720 = vrot.slane %v2719, 4
    %v2721 = vmax.f32 %v2719, %v2720
    %v2722 = vrot.slane %v2721, 2
    %v2723 = vmax.f32 %v2721, %v2722
    %v2724 = vrot.slane %v2723, 1
    %v2725 = vmax.f32 %v2723, %v2724
    %v2726 = vmax.f32 %v2425, %v2426
    %v2727 = vrot.slane %v2726, 4
    %v2728 = vmax.f32 %v2726, %v2727
    %v2729 = vrot.slane %v2728, 2
    %v2730 = vmax.f32 %v2728, %v2729
    %v2731 = vrot.slane %v2730, 1
    %v2732 = vmax.f32 %v2730, %v2731
    %v2733 = vmax.f32 %v2427, %v2428
    %v2734 = vrot.slane %v2733, 4
    %v2735 = vmax.f32 %v2733, %v2734
    %v2736 = vrot.slane %v2735, 2
    %v2737 = vmax.f32 %v2735, %v2736
    %v2738 = vrot.slane %v2737, 1
    %v2739 = vmax.f32 %v2737, %v2738
    %v2740 = vmax.f32 %v2429, %v2430
    %v2741 = vrot.slane %v2740, 4
    %v2742 = vmax.f32 %v2740, %v2741
    %v2743 = vrot.slane %v2742, 2
    %v2744 = vmax.f32 %v2742, %v2743
    %v2745 = vrot.slane %v2744, 1
    %v2746 = vmax.f32 %v2744, %v2745
    %v2747 = vmax.f32 %v2431, %v2432
    %v2748 = vrot.slane %v2747, 4
    %v2749 = vmax.f32 %v2747, %v2748
    %v2750 = vrot.slane %v2749, 2
    %v2751 = vmax.f32 %v2749, %v2750
    %v2752 = vrot.slane %v2751, 1
    %v2753 = vmax.f32 %v2751, %v2752
    %v2754 = vmax.f32 %v2433, %v2434
    %v2755 = vrot.slane %v2754, 4
    %v2756 = vmax.f32 %v2754, %v2755
    %v2757 = vrot.slane %v2756, 2
    %v2758 = vmax.f32 %v2756, %v2757
    %v2759 = vrot.slane %v2758, 1
    %v2760 = vmax.f32 %v2758, %v2759
    %v2761 = vmax.f32 %v2435, %v2436
    %v2762 = vrot.slane %v2761, 4
    %v2763 = vmax.f32 %v2761, %v2762
    %v2764 = vrot.slane %v2763, 2
    %v2765 = vmax.f32 %v2763, %v2764
    %v2766 = vrot.slane %v2765, 1
    %v2767 = vmax.f32 %v2765, %v2766
    %v2768 = vmax.f32 %v2437, %v2438
    %v2769 = vrot.slane %v2768, 4
    %v2770 = vmax.f32 %v2768, %v2769
    %v2771 = vrot.slane %v2770, 2
    %v2772 = vmax.f32 %v2770, %v2771
    %v2773 = vrot.slane %v2772, 1
    %v2774 = vmax.f32 %v2772, %v2773
    %v2775 = vmax.f32 %v2439, %v2440
    %v2776 = vrot.slane %v2775, 4
    %v2777 = vmax.f32 %v2775, %v2776
    %v2778 = vrot.slane %v2777, 2
    %v2779 = vmax.f32 %v2777, %v2778
    %v2780 = vrot.slane %v2779, 1
    %v2781 = vmax.f32 %v2779, %v2780
    %v2782 = vmax.f32 %v2441, %v2442
    %v2783 = vrot.slane %v2782, 4
    %v2784 = vmax.f32 %v2782, %v2783
    %v2785 = vrot.slane %v2784, 2
    %v2786 = vmax.f32 %v2784, %v2785
    %v2787 = vrot.slane %v2786, 1
    %v2788 = vmax.f32 %v2786, %v2787
    %v2789 = vmax.f32 %v2443, %v2444
    %v2790 = vrot.slane %v2789, 4
    %v2791 = vmax.f32 %v2789, %v2790
    %v2792 = vrot.slane %v2791, 2
    %v2793 = vmax.f32 %v2791, %v2792
    %v2794 = vrot.slane %v2793, 1
    %v2795 = vmax.f32 %v2793, %v2794
    %v2796 = vmax.f32 %v2445, %v2446
    %v2797 = vrot.slane %v2796, 4
    %v2798 = vmax.f32 %v2796, %v2797
    %v2799 = vrot.slane %v2798, 2
    %v2800 = vmax.f32 %v2798, %v2799
    %v2801 = vrot.slane %v2800, 1
    %v2802 = vmax.f32 %v2800, %v2801
    %v2803 = vmax.f32 %v2447, %v2448
    %v2804 = vrot.slane %v2803, 4
    %v2805 = vmax.f32 %v2803, %v2804
    %v2806 = vrot.slane %v2805, 2
    %v2807 = vmax.f32 %v2805, %v2806
    %v2808 = vrot.slane %v2807, 1
    %v2809 = vmax.f32 %v2807, %v2808
    %v2810 = vmax.f32 %v2449, %v2450
    %v2811 = vrot.slane %v2810, 4
    %v2812 = vmax.f32 %v2810, %v2811
    %v2813 = vrot.slane %v2812, 2
    %v2814 = vmax.f32 %v2812, %v2813
    %v2815 = vrot.slane %v2814, 1
    %v2816 = vmax.f32 %v2814, %v2815
    %v2817 = vmax.f32 %v2451, %v2452
    %v2818 = vrot.slane %v2817, 4
    %v2819 = vmax.f32 %v2817, %v2818
    %v2820 = vrot.slane %v2819, 2
    %v2821 = vmax.f32 %v2819, %v2820
    %v2822 = vrot.slane %v2821, 1
    %v2823 = vmax.f32 %v2821, %v2822
    %v2824 = vmax.f32 %v2453, %v2454
    %v2825 = vrot.slane %v2824, 4
    %v2826 = vmax.f32 %v2824, %v2825
    %v2827 = vrot.slane %v2826, 2
    %v2828 = vmax.f32 %v2826, %v2827
    %v2829 = vrot.slane %v2828, 1
    %v2830 = vmax.f32 %v2828, %v2829
    %v2831 = vmax.f32 %v2455, %v2456
    %v2832 = vrot.slane %v2831, 4
    %v2833 = vmax.f32 %v2831, %v2832
    %v2834 = vrot.slane %v2833, 2
    %v2835 = vmax.f32 %v2833, %v2834
    %v2836 = vrot.slane %v2835, 1
    %v2837 = vmax.f32 %v2835, %v2836
    %v2838 = vmax.f32 %v2457, %v2458
    %v2839 = vrot.slane %v2838, 4
    %v2840 = vmax.f32 %v2838, %v2839
    %v2841 = vrot.slane %v2840, 2
    %v2842 = vmax.f32 %v2840, %v2841
    %v2843 = vrot.slane %v2842, 1
    %v2844 = vmax.f32 %v2842, %v2843
    %v2845 = vmax.f32 %v2459, %v2460
    %v2846 = vrot.slane %v2845, 4
    %v2847 = vmax.f32 %v2845, %v2846
    %v2848 = vrot.slane %v2847, 2
    %v2849 = vmax.f32 %v2847, %v2848
    %v2850 = vrot.slane %v2849, 1
    %v2851 = vmax.f32 %v2849, %v2850
    %v2852 = vmax.f32 %v2461, %v2462
    %v2853 = vrot.slane %v2852, 4
    %v2854 = vmax.f32 %v2852, %v2853
    %v2855 = vrot.slane %v2854, 2
    %v2856 = vmax.f32 %v2854, %v2855
    %v2857 = vrot.slane %v2856, 1
    %v2858 = vmax.f32 %v2856, %v2857
    %v2859 = vmax.f32 %v2463, %v2464
    %v2860 = vrot.slane %v2859, 4
    %v2861 = vmax.f32 %v2859, %v2860
    %v2862 = vrot.slane %v2861, 2
    %v2863 = vmax.f32 %v2861, %v2862
    %v2864 = vrot.slane %v2863, 1
    %v2865 = vmax.f32 %v2863, %v2864
    %v2866 = vmax.f32 %v2465, %v2466
    %v2867 = vrot.slane %v2866, 4
    %v2868 = vmax.f32 %v2866, %v2867
    %v2869 = vrot.slane %v2868, 2
    %v2870 = vmax.f32 %v2868, %v2869
    %v2871 = vrot.slane %v2870, 1
    %v2872 = vmax.f32 %v2870, %v2871
    %v2873 = vmax.f32 %v2467, %v2468
    %v2874 = vrot.slane %v2873, 4
    %v2875 = vmax.f32 %v2873, %v2874
    %v2876 = vrot.slane %v2875, 2
    %v2877 = vmax.f32 %v2875, %v2876
    %v2878 = vrot.slane %v2877, 1
    %v2879 = vmax.f32 %v2877, %v2878
    %v2880 = vmax.f32 %v2469, %v2470
    %v2881 = vrot.slane %v2880, 4
    %v2882 = vmax.f32 %v2880, %v2881
    %v2883 = vrot.slane %v2882, 2
    %v2884 = vmax.f32 %v2882, %v2883
    %v2885 = vrot.slane %v2884, 1
    %v2886 = vmax.f32 %v2884, %v2885
    %v2887 = vmax.f32 %v2471, %v2472
    %v2888 = vrot.slane %v2887, 4
    %v2889 = vmax.f32 %v2887, %v2888
    %v2890 = vrot.slane %v2889, 2
    %v2891 = vmax.f32 %v2889, %v2890
    %v2892 = vrot.slane %v2891, 1
    %v2893 = vmax.f32 %v2891, %v2892
    %v2894 = vmax.f32 %v2473, %v2474
    %v2895 = vrot.slane %v2894, 4
    %v2896 = vmax.f32 %v2894, %v2895
    %v2897 = vrot.slane %v2896, 2
    %v2898 = vmax.f32 %v2896, %v2897
    %v2899 = vrot.slane %v2898, 1
    %v2900 = vmax.f32 %v2898, %v2899
    %v2901 = vmax.f32 %v2475, %v2476
    %v2902 = vrot.slane %v2901, 4
    %v2903 = vmax.f32 %v2901, %v2902
    %v2904 = vrot.slane %v2903, 2
    %v2905 = vmax.f32 %v2903, %v2904
    %v2906 = vrot.slane %v2905, 1
    %v2907 = vmax.f32 %v2905, %v2906
    %v2908 = vmax.f32 %v2477, %v2478
    %v2909 = vrot.slane %v2908, 4
    %v2910 = vmax.f32 %v2908, %v2909
    %v2911 = vrot.slane %v2910, 2
    %v2912 = vmax.f32 %v2910, %v2911
    %v2913 = vrot.slane %v2912, 1
    %v2914 = vmax.f32 %v2912, %v2913
    %v2915 = vmax.f32 %v2479, %v2480
    %v2916 = vrot.slane %v2915, 4
    %v2917 = vmax.f32 %v2915, %v2916
    %v2918 = vrot.slane %v2917, 2
    %v2919 = vmax.f32 %v2917, %v2918
    %v2920 = vrot.slane %v2919, 1
    %v2921 = vmax.f32 %v2919, %v2920
    %v2922 = vmax.f32 %v2481, %v2482
    %v2923 = vrot.slane %v2922, 4
    %v2924 = vmax.f32 %v2922, %v2923
    %v2925 = vrot.slane %v2924, 2
    %v2926 = vmax.f32 %v2924, %v2925
    %v2927 = vrot.slane %v2926, 1
    %v2928 = vmax.f32 %v2926, %v2927
    %v2929 = vmax.f32 %v2483, %v2484
    %v2930 = vrot.slane %v2929, 4
    %v2931 = vmax.f32 %v2929, %v2930
    %v2932 = vrot.slane %v2931, 2
    %v2933 = vmax.f32 %v2931, %v2932
    %v2934 = vrot.slane %v2933, 1
    %v2935 = vmax.f32 %v2933, %v2934
    %v2936 = vmax.f32 %v2485, %v2486
    %v2937 = vrot.slane %v2936, 4
    %v2938 = vmax.f32 %v2936, %v2937
    %v2939 = vrot.slane %v2938, 2
    %v2940 = vmax.f32 %v2938, %v2939
    %v2941 = vrot.slane %v2940, 1
    %v2942 = vmax.f32 %v2940, %v2941
    %v2943 = vmax.f32 %v2487, %v2488
    %v2944 = vrot.slane %v2943, 4
    %v2945 = vmax.f32 %v2943, %v2944
    %v2946 = vrot.slane %v2945, 2
    %v2947 = vmax.f32 %v2945, %v2946
    %v2948 = vrot.slane %v2947, 1
    %v2949 = vmax.f32 %v2947, %v2948
    %v2950 = vmax.f32 %v2489, %v2490
    %v2951 = vrot.slane %v2950, 4
    %v2952 = vmax.f32 %v2950, %v2951
    %v2953 = vrot.slane %v2952, 2
    %v2954 = vmax.f32 %v2952, %v2953
    %v2955 = vrot.slane %v2954, 1
    %v2956 = vmax.f32 %v2954, %v2955
    %v2957 = vmax.f32 %v2491, %v2492
    %v2958 = vrot.slane %v2957, 4
    %v2959 = vmax.f32 %v2957, %v2958
    %v2960 = vrot.slane %v2959, 2
    %v2961 = vmax.f32 %v2959, %v2960
    %v2962 = vrot.slane %v2961, 1
    %v2963 = vmax.f32 %v2961, %v2962
    %v2964 = vmax.f32 %v2493, %v2494
    %v2965 = vrot.slane %v2964, 4
    %v2966 = vmax.f32 %v2964, %v2965
    %v2967 = vrot.slane %v2966, 2
    %v2968 = vmax.f32 %v2966, %v2967
    %v2969 = vrot.slane %v2968, 1
    %v2970 = vmax.f32 %v2968, %v2969
    %v2971 = vmax.f32 %v2495, %v2496
    %v2972 = vrot.slane %v2971, 4
    %v2973 = vmax.f32 %v2971, %v2972
    %v2974 = vrot.slane %v2973, 2
    %v2975 = vmax.f32 %v2973, %v2974
    %v2976 = vrot.slane %v2975, 1
    %v2977 = vmax.f32 %v2975, %v2976
    %v2978 = vmax.f32 %v2497, %v2498
    %v2979 = vrot.slane %v2978, 4
    %v2980 = vmax.f32 %v2978, %v2979
    %v2981 = vrot.slane %v2980, 2
    %v2982 = vmax.f32 %v2980, %v2981
    %v2983 = vrot.slane %v2982, 1
    %v2984 = vmax.f32 %v2982, %v2983
    %v2985 = vmax.f32 %v2499, %v2500
    %v2986 = vrot.slane %v2985, 4
    %v2987 = vmax.f32 %v2985, %v2986
    %v2988 = vrot.slane %v2987, 2
    %v2989 = vmax.f32 %v2987, %v2988
    %v2990 = vrot.slane %v2989, 1
    %v2991 = vmax.f32 %v2989, %v2990
    %v2992 = vmax.f32 %v2501, %v2502
    %v2993 = vrot.slane %v2992, 4
    %v2994 = vmax.f32 %v2992, %v2993
    %v2995 = vrot.slane %v2994, 2
    %v2996 = vmax.f32 %v2994, %v2995
    %v2997 = vrot.slane %v2996, 1
    %v2998 = vmax.f32 %v2996, %v2997
    %v2999 = vmax.f32 %v2503, %v2504
    %v3000 = vrot.slane %v2999, 4
    %v3001 = vmax.f32 %v2999, %v3000
    %v3002 = vrot.slane %v3001, 2
    %v3003 = vmax.f32 %v3001, %v3002
    %v3004 = vrot.slane %v3003, 1
    %v3005 = vmax.f32 %v3003, %v3004
    %v3006 = vmax.f32 %v2505, %v2506
    %v3007 = vrot.slane %v3006, 4
    %v3008 = vmax.f32 %v3006, %v3007
    %v3009 = vrot.slane %v3008, 2
    %v3010 = vmax.f32 %v3008, %v3009
    %v3011 = vrot.slane %v3010, 1
    %v3012 = vmax.f32 %v3010, %v3011
    %v3013 = vmax.f32 %v2507, %v2508
    %v3014 = vrot.slane %v3013, 4
    %v3015 = vmax.f32 %v3013, %v3014
    %v3016 = vrot.slane %v3015, 2
    %v3017 = vmax.f32 %v3015, %v3016
    %v3018 = vrot.slane %v3017, 1
    %v3019 = vmax.f32 %v3017, %v3018
    %v3020 = vmax.f32 %v2509, %v2510
    %v3021 = vrot.slane %v3020, 4
    %v3022 = vmax.f32 %v3020, %v3021
    %v3023 = vrot.slane %v3022, 2
    %v3024 = vmax.f32 %v3022, %v3023
    %v3025 = vrot.slane %v3024, 1
    %v3026 = vmax.f32 %v3024, %v3025
    %v3027 = vmax.f32 %v2511, %v2512
    %v3028 = vrot.slane %v3027, 4
    %v3029 = vmax.f32 %v3027, %v3028
    %v3030 = vrot.slane %v3029, 2
    %v3031 = vmax.f32 %v3029, %v3030
    %v3032 = vrot.slane %v3031, 1
    %v3033 = vmax.f32 %v3031, %v3032
    %v3034 = vmax.f32 %v2513, %v2514
    %v3035 = vrot.slane %v3034, 4
    %v3036 = vmax.f32 %v3034, %v3035
    %v3037 = vrot.slane %v3036, 2
    %v3038 = vmax.f32 %v3036, %v3037
    %v3039 = vrot.slane %v3038, 1
    %v3040 = vmax.f32 %v3038, %v3039
    %v3041 = vmax.f32 %v2515, %v2516
    %v3042 = vrot.slane %v3041, 4
    %v3043 = vmax.f32 %v3041, %v3042
    %v3044 = vrot.slane %v3043, 2
    %v3045 = vmax.f32 %v3043, %v3044
    %v3046 = vrot.slane %v3045, 1
    %v3047 = vmax.f32 %v3045, %v3046
    %v3048 = vmax.f32 %v2517, %v2518
    %v3049 = vrot.slane %v3048, 4
    %v3050 = vmax.f32 %v3048, %v3049
    %v3051 = vrot.slane %v3050, 2
    %v3052 = vmax.f32 %v3050, %v3051
    %v3053 = vrot.slane %v3052, 1
    %v3054 = vmax.f32 %v3052, %v3053
    %v3055 = vmax.f32 %v2519, %v2520
    %v3056 = vrot.slane %v3055, 4
    %v3057 = vmax.f32 %v3055, %v3056
    %v3058 = vrot.slane %v3057, 2
    %v3059 = vmax.f32 %v3057, %v3058
    %v3060 = vrot.slane %v3059, 1
    %v3061 = vmax.f32 %v3059, %v3060
    %v3062 = vmax.f32 %v2521, %v2522
    %v3063 = vrot.slane %v3062, 4
    %v3064 = vmax.f32 %v3062, %v3063
    %v3065 = vrot.slane %v3064, 2
    %v3066 = vmax.f32 %v3064, %v3065
    %v3067 = vrot.slane %v3066, 1
    %v3068 = vmax.f32 %v3066, %v3067
    %v3069 = vmax.f32 %v2523, %v2524
    %v3070 = vrot.slane %v3069, 4
    %v3071 = vmax.f32 %v3069, %v3070
    %v3072 = vrot.slane %v3071, 2
    %v3073 = vmax.f32 %v3071, %v3072
    %v3074 = vrot.slane %v3073, 1
    %v3075 = vmax.f32 %v3073, %v3074
    %v3076 = vmax.f32 %v2525, %v2526
    %v3077 = vrot.slane %v3076, 4
    %v3078 = vmax.f32 %v3076, %v3077
    %v3079 = vrot.slane %v3078, 2
    %v3080 = vmax.f32 %v3078, %v3079
    %v3081 = vrot.slane %v3080, 1
    %v3082 = vmax.f32 %v3080, %v3081
    %v3083 = vmax.f32 %v2527, %v2528
    %v3084 = vrot.slane %v3083, 4
    %v3085 = vmax.f32 %v3083, %v3084
    %v3086 = vrot.slane %v3085, 2
    %v3087 = vmax.f32 %v3085, %v3086
    %v3088 = vrot.slane %v3087, 1
    %v3089 = vmax.f32 %v3087, %v3088
    %v3090 = vmax.f32 %v2529, %v2530
    %v3091 = vrot.slane %v3090, 4
    %v3092 = vmax.f32 %v3090, %v3091
    %v3093 = vrot.slane %v3092, 2
    %v3094 = vmax.f32 %v3092, %v3093
    %v3095 = vrot.slane %v3094, 1
    %v3096 = vmax.f32 %v3094, %v3095
    %v3097 = vmax.f32 %v2531, %v2532
    %v3098 = vrot.slane %v3097, 4
    %v3099 = vmax.f32 %v3097, %v3098
    %v3100 = vrot.slane %v3099, 2
    %v3101 = vmax.f32 %v3099, %v3100
    %v3102 = vrot.slane %v3101, 1
    %v3103 = vmax.f32 %v3101, %v3102
    %v3104 = vmax.f32 %v2533, %v2534
    %v3105 = vrot.slane %v3104, 4
    %v3106 = vmax.f32 %v3104, %v3105
    %v3107 = vrot.slane %v3106, 2
    %v3108 = vmax.f32 %v3106, %v3107
    %v3109 = vrot.slane %v3108, 1
    %v3110 = vmax.f32 %v3108, %v3109
    %v3111 = vmax.f32 %v2535, %v2536
    %v3112 = vrot.slane %v3111, 4
    %v3113 = vmax.f32 %v3111, %v3112
    %v3114 = vrot.slane %v3113, 2
    %v3115 = vmax.f32 %v3113, %v3114
    %v3116 = vrot.slane %v3115, 1
    %v3117 = vmax.f32 %v3115, %v3116
    %v3118 = vmax.f32 %v2537, %v2538
    %v3119 = vrot.slane %v3118, 4
    %v3120 = vmax.f32 %v3118, %v3119
    %v3121 = vrot.slane %v3120, 2
    %v3122 = vmax.f32 %v3120, %v3121
    %v3123 = vrot.slane %v3122, 1
    %v3124 = vmax.f32 %v3122, %v3123
    %v3125 = vmax.f32 %v2539, %v2540
    %v3126 = vrot.slane %v3125, 4
    %v3127 = vmax.f32 %v3125, %v3126
    %v3128 = vrot.slane %v3127, 2
    %v3129 = vmax.f32 %v3127, %v3128
    %v3130 = vrot.slane %v3129, 1
    %v3131 = vmax.f32 %v3129, %v3130
    %v3132 = vmax.f32 %v2541, %v2542
    %v3133 = vrot.slane %v3132, 4
    %v3134 = vmax.f32 %v3132, %v3133
    %v3135 = vrot.slane %v3134, 2
    %v3136 = vmax.f32 %v3134, %v3135
    %v3137 = vrot.slane %v3136, 1
    %v3138 = vmax.f32 %v3136, %v3137
    %v3139 = vmax.f32 %v2543, %v2544
    %v3140 = vrot.slane %v3139, 4
    %v3141 = vmax.f32 %v3139, %v3140
    %v3142 = vrot.slane %v3141, 2
    %v3143 = vmax.f32 %v3141, %v3142
    %v3144 = vrot.slane %v3143, 1
    %v3145 = vmax.f32 %v3143, %v3144
    %v3146 = vmax.f32 %v2545, %v2546
    %v3147 = vrot.slane %v3146, 4
    %v3148 = vmax.f32 %v3146, %v3147
    %v3149 = vrot.slane %v3148, 2
    %v3150 = vmax.f32 %v3148, %v3149
    %v3151 = vrot.slane %v3150, 1
    %v3152 = vmax.f32 %v3150, %v3151
    %v3153 = vmax.f32 %v2547, %v2548
    %v3154 = vrot.slane %v3153, 4
    %v3155 = vmax.f32 %v3153, %v3154
    %v3156 = vrot.slane %v3155, 2
    %v3157 = vmax.f32 %v3155, %v3156
    %v3158 = vrot.slane %v3157, 1
    %v3159 = vmax.f32 %v3157, %v3158
    %v3160 = vmax.f32 %v2549, %v2550
    %v3161 = vrot.slane %v3160, 4
    %v3162 = vmax.f32 %v3160, %v3161
    %v3163 = vrot.slane %v3162, 2
    %v3164 = vmax.f32 %v3162, %v3163
    %v3165 = vrot.slane %v3164, 1
    %v3166 = vmax.f32 %v3164, %v3165
    %v3167 = vmax.f32 %v2551, %v2552
    %v3168 = vrot.slane %v3167, 4
    %v3169 = vmax.f32 %v3167, %v3168
    %v3170 = vrot.slane %v3169, 2
    %v3171 = vmax.f32 %v3169, %v3170
    %v3172 = vrot.slane %v3171, 1
    %v3173 = vmax.f32 %v3171, %v3172
    %v3174 = vmax.f32 %v2553, %v2554
    %v3175 = vrot.slane %v3174, 4
    %v3176 = vmax.f32 %v3174, %v3175
    %v3177 = vrot.slane %v3176, 2
    %v3178 = vmax.f32 %v3176, %v3177
    %v3179 = vrot.slane %v3178, 1
    %v3180 = vmax.f32 %v3178, %v3179
    %v3181 = vmax.f32 %v2555, %v2556
    %v3182 = vrot.slane %v3181, 4
    %v3183 = vmax.f32 %v3181, %v3182
    %v3184 = vrot.slane %v3183, 2
    %v3185 = vmax.f32 %v3183, %v3184
    %v3186 = vrot.slane %v3185, 1
    %v3187 = vmax.f32 %v3185, %v3186
    %v3188 = vmax.f32 %v2557, %v2558
    %v3189 = vrot.slane %v3188, 4
    %v3190 = vmax.f32 %v3188, %v3189
    %v3191 = vrot.slane %v3190, 2
    %v3192 = vmax.f32 %v3190, %v3191
    %v3193 = vrot.slane %v3192, 1
    %v3194 = vmax.f32 %v3192, %v3193
    %v3195 = vmax.f32 %v2559, %v2560
    %v3196 = vrot.slane %v3195, 4
    %v3197 = vmax.f32 %v3195, %v3196
    %v3198 = vrot.slane %v3197, 2
    %v3199 = vmax.f32 %v3197, %v3198
    %v3200 = vrot.slane %v3199, 1
    %v3201 = vmax.f32 %v3199, %v3200
    %v3202 = vmax.f32 %v2561, %v2562
    %v3203 = vrot.slane %v3202, 4
    %v3204 = vmax.f32 %v3202, %v3203
    %v3205 = vrot.slane %v3204, 2
    %v3206 = vmax.f32 %v3204, %v3205
    %v3207 = vrot.slane %v3206, 1
    %v3208 = vmax.f32 %v3206, %v3207
    %v3209 = vmax.f32 %v2563, %v2564
    %v3210 = vrot.slane %v3209, 4
    %v3211 = vmax.f32 %v3209, %v3210
    %v3212 = vrot.slane %v3211, 2
    %v3213 = vmax.f32 %v3211, %v3212
    %v3214 = vrot.slane %v3213, 1
    %v3215 = vmax.f32 %v3213, %v3214
    %v3216 = vmax.f32 %v2565, %v2566
    %v3217 = vrot.slane %v3216, 4
    %v3218 = vmax.f32 %v3216, %v3217
    %v3219 = vrot.slane %v3218, 2
    %v3220 = vmax.f32 %v3218, %v3219
    %v3221 = vrot.slane %v3220, 1
    %v3222 = vmax.f32 %v3220, %v3221
    %v3223 = vmax.f32 %v2567, %v2568
    %v3224 = vrot.slane %v3223, 4
    %v3225 = vmax.f32 %v3223, %v3224
    %v3226 = vrot.slane %v3225, 2
    %v3227 = vmax.f32 %v3225, %v3226
    %v3228 = vrot.slane %v3227, 1
    %v3229 = vmax.f32 %v3227, %v3228
    %v3230 = vmax.f32 %v2569, %v2570
    %v3231 = vrot.slane %v3230, 4
    %v3232 = vmax.f32 %v3230, %v3231
    %v3233 = vrot.slane %v3232, 2
    %v3234 = vmax.f32 %v3232, %v3233
    %v3235 = vrot.slane %v3234, 1
    %v3236 = vmax.f32 %v3234, %v3235
    %v3237 = vmax.f32 %v2571, %v2572
    %v3238 = vrot.slane %v3237, 4
    %v3239 = vmax.f32 %v3237, %v3238
    %v3240 = vrot.slane %v3239, 2
    %v3241 = vmax.f32 %v3239, %v3240
    %v3242 = vrot.slane %v3241, 1
    %v3243 = vmax.f32 %v3241, %v3242
    %v3244 = vmax.f32 %v2573, %v2574
    %v3245 = vrot.slane %v3244, 4
    %v3246 = vmax.f32 %v3244, %v3245
    %v3247 = vrot.slane %v3246, 2
    %v3248 = vmax.f32 %v3246, %v3247
    %v3249 = vrot.slane %v3248, 1
    %v3250 = vmax.f32 %v3248, %v3249
    %v3251 = vmax.f32 %v2575, %v2576
    %v3252 = vrot.slane %v3251, 4
    %v3253 = vmax.f32 %v3251, %v3252
    %v3254 = vrot.slane %v3253, 2
    %v3255 = vmax.f32 %v3253, %v3254
    %v3256 = vrot.slane %v3255, 1
    %v3257 = vmax.f32 %v3255, %v3256
    %v3258 = vmax.f32 %v2577, %v2578
    %v3259 = vrot.slane %v3258, 4
    %v3260 = vmax.f32 %v3258, %v3259
    %v3261 = vrot.slane %v3260, 2
    %v3262 = vmax.f32 %v3260, %v3261
    %v3263 = vrot.slane %v3262, 1
    %v3264 = vmax.f32 %v3262, %v3263
    %v3265 = vmax.f32 %v2579, %v2580
    %v3266 = vrot.slane %v3265, 4
    %v3267 = vmax.f32 %v3265, %v3266
    %v3268 = vrot.slane %v3267, 2
    %v3269 = vmax.f32 %v3267, %v3268
    %v3270 = vrot.slane %v3269, 1
    %v3271 = vmax.f32 %v3269, %v3270
    %v3272 = vmax.f32 %v2581, %v2582
    %v3273 = vrot.slane %v3272, 4
    %v3274 = vmax.f32 %v3272, %v3273
    %v3275 = vrot.slane %v3274, 2
    %v3276 = vmax.f32 %v3274, %v3275
    %v3277 = vrot.slane %v3276, 1
    %v3278 = vmax.f32 %v3276, %v3277
    %v3279 = vmax.f32 %v2583, %v2584
    %v3280 = vrot.slane %v3279, 4
    %v3281 = vmax.f32 %v3279, %v3280
    %v3282 = vrot.slane %v3281, 2
    %v3283 = vmax.f32 %v3281, %v3282
    %v3284 = vrot.slane %v3283, 1
    %v3285 = vmax.f32 %v3283, %v3284
    %v3286 = vmax.f32 %v2585, %v2586
    %v3287 = vrot.slane %v3286, 4
    %v3288 = vmax.f32 %v3286, %v3287
    %v3289 = vrot.slane %v3288, 2
    %v3290 = vmax.f32 %v3288, %v3289
    %v3291 = vrot.slane %v3290, 1
    %v3292 = vmax.f32 %v3290, %v3291
    %v3293 = vmax.f32 %v2587, %v2588
    %v3294 = vrot.slane %v3293, 4
    %v3295 = vmax.f32 %v3293, %v3294
    %v3296 = vrot.slane %v3295, 2
    %v3297 = vmax.f32 %v3295, %v3296
    %v3298 = vrot.slane %v3297, 1
    %v3299 = vmax.f32 %v3297, %v3298
    %v3300 = vmax.f32 %v2589, %v2590
    %v3301 = vrot.slane %v3300, 4
    %v3302 = vmax.f32 %v3300, %v3301
    %v3303 = vrot.slane %v3302, 2
    %v3304 = vmax.f32 %v3302, %v3303
    %v3305 = vrot.slane %v3304, 1
    %v3306 = vmax.f32 %v3304, %v3305
    %v3307 = vmax.f32 %v2591, %v2592
    %v3308 = vrot.slane %v3307, 4
    %v3309 = vmax.f32 %v3307, %v3308
    %v3310 = vrot.slane %v3309, 2
    %v3311 = vmax.f32 %v3309, %v3310
    %v3312 = vrot.slane %v3311, 1
    %v3313 = vmax.f32 %v3311, %v3312
    %v3314 = vmax.f32 %v2593, %v2594
    %v3315 = vrot.slane %v3314, 4
    %v3316 = vmax.f32 %v3314, %v3315
    %v3317 = vrot.slane %v3316, 2
    %v3318 = vmax.f32 %v3316, %v3317
    %v3319 = vrot.slane %v3318, 1
    %v3320 = vmax.f32 %v3318, %v3319
    %v3321 = vmax.f32 %v2595, %v2596
    %v3322 = vrot.slane %v3321, 4
    %v3323 = vmax.f32 %v3321, %v3322
    %v3324 = vrot.slane %v3323, 2
    %v3325 = vmax.f32 %v3323, %v3324
    %v3326 = vrot.slane %v3325, 1
    %v3327 = vmax.f32 %v3325, %v3326
    %v3328 = vmax.f32 %v2597, %v2598
    %v3329 = vrot.slane %v3328, 4
    %v3330 = vmax.f32 %v3328, %v3329
    %v3331 = vrot.slane %v3330, 2
    %v3332 = vmax.f32 %v3330, %v3331
    %v3333 = vrot.slane %v3332, 1
    %v3334 = vmax.f32 %v3332, %v3333
    %v3335 = vmax.f32 %v2599, %v2600
    %v3336 = vrot.slane %v3335, 4
    %v3337 = vmax.f32 %v3335, %v3336
    %v3338 = vrot.slane %v3337, 2
    %v3339 = vmax.f32 %v3337, %v3338
    %v3340 = vrot.slane %v3339, 1
    %v3341 = vmax.f32 %v3339, %v3340
    %v3342 = vmax.f32 %v2601, %v2602
    %v3343 = vrot.slane %v3342, 4
    %v3344 = vmax.f32 %v3342, %v3343
    %v3345 = vrot.slane %v3344, 2
    %v3346 = vmax.f32 %v3344, %v3345
    %v3347 = vrot.slane %v3346, 1
    %v3348 = vmax.f32 %v3346, %v3347
    %v3349 = vmax.f32 %v2603, %v2604
    %v3350 = vrot.slane %v3349, 4
    %v3351 = vmax.f32 %v3349, %v3350
    %v3352 = vrot.slane %v3351, 2
    %v3353 = vmax.f32 %v3351, %v3352
    %v3354 = vrot.slane %v3353, 1
    %v3355 = vmax.f32 %v3353, %v3354
    %v3356 = vmax.f32 %v2605, %v2606
    %v3357 = vrot.slane %v3356, 4
    %v3358 = vmax.f32 %v3356, %v3357
    %v3359 = vrot.slane %v3358, 2
    %v3360 = vmax.f32 %v3358, %v3359
    %v3361 = vrot.slane %v3360, 1
    %v3362 = vmax.f32 %v3360, %v3361
    %v3363 = vmax.f32 %v2607, %v2608
    %v3364 = vrot.slane %v3363, 4
    %v3365 = vmax.f32 %v3363, %v3364
    %v3366 = vrot.slane %v3365, 2
    %v3367 = vmax.f32 %v3365, %v3366
    %v3368 = vrot.slane %v3367, 1
    %v3369 = vmax.f32 %v3367, %v3368
    %v3370 = vmax.f32 %v2609, %v2610
    %v3371 = vrot.slane %v3370, 4
    %v3372 = vmax.f32 %v3370, %v3371
    %v3373 = vrot.slane %v3372, 2
    %v3374 = vmax.f32 %v3372, %v3373
    %v3375 = vrot.slane %v3374, 1
    %v3376 = vmax.f32 %v3374, %v3375
    %v3377 = vmax.f32 %v2611, %v2612
    %v3378 = vrot.slane %v3377, 4
    %v3379 = vmax.f32 %v3377, %v3378
    %v3380 = vrot.slane %v3379, 2
    %v3381 = vmax.f32 %v3379, %v3380
    %v3382 = vrot.slane %v3381, 1
    %v3383 = vmax.f32 %v3381, %v3382
    %v3384 = vmax.f32 %v2613, %v2614
    %v3385 = vrot.slane %v3384, 4
    %v3386 = vmax.f32 %v3384, %v3385
    %v3387 = vrot.slane %v3386, 2
    %v3388 = vmax.f32 %v3386, %v3387
    %v3389 = vrot.slane %v3388, 1
    %v3390 = vmax.f32 %v3388, %v3389
    %v3391 = vmax.f32 %v2615, %v2616
    %v3392 = vrot.slane %v3391, 4
    %v3393 = vmax.f32 %v3391, %v3392
    %v3394 = vrot.slane %v3393, 2
    %v3395 = vmax.f32 %v3393, %v3394
    %v3396 = vrot.slane %v3395, 1
    %v3397 = vmax.f32 %v3395, %v3396
    %v3398 = vmax.f32 %v2617, %v2618
    %v3399 = vrot.slane %v3398, 4
    %v3400 = vmax.f32 %v3398, %v3399
    %v3401 = vrot.slane %v3400, 2
    %v3402 = vmax.f32 %v3400, %v3401
    %v3403 = vrot.slane %v3402, 1
    %v3404 = vmax.f32 %v3402, %v3403
    %v3405 = vmax.f32 %v2619, %v2620
    %v3406 = vrot.slane %v3405, 4
    %v3407 = vmax.f32 %v3405, %v3406
    %v3408 = vrot.slane %v3407, 2
    %v3409 = vmax.f32 %v3407, %v3408
    %v3410 = vrot.slane %v3409, 1
    %v3411 = vmax.f32 %v3409, %v3410
    %v3412 = vmax.f32 %v2621, %v2622
    %v3413 = vrot.slane %v3412, 4
    %v3414 = vmax.f32 %v3412, %v3413
    %v3415 = vrot.slane %v3414, 2
    %v3416 = vmax.f32 %v3414, %v3415
    %v3417 = vrot.slane %v3416, 1
    %v3418 = vmax.f32 %v3416, %v3417
    %v3419 = vmax.f32 %v2623, %v2624
    %v3420 = vrot.slane %v3419, 4
    %v3421 = vmax.f32 %v3419, %v3420
    %v3422 = vrot.slane %v3421, 2
    %v3423 = vmax.f32 %v3421, %v3422
    %v3424 = vrot.slane %v3423, 1
    %v3425 = vmax.f32 %v3423, %v3424
    %v3426 = vmax.f32 %v2625, %v2626
    %v3427 = vrot.slane %v3426, 4
    %v3428 = vmax.f32 %v3426, %v3427
    %v3429 = vrot.slane %v3428, 2
    %v3430 = vmax.f32 %v3428, %v3429
    %v3431 = vrot.slane %v3430, 1
    %v3432 = vmax.f32 %v3430, %v3431
    %v3433 = vmax.f32 %v2627, %v2628
    %v3434 = vrot.slane %v3433, 4
    %v3435 = vmax.f32 %v3433, %v3434
    %v3436 = vrot.slane %v3435, 2
    %v3437 = vmax.f32 %v3435, %v3436
    %v3438 = vrot.slane %v3437, 1
    %v3439 = vmax.f32 %v3437, %v3438
    %v3440 = vmax.f32 %v2629, %v2630
    %v3441 = vrot.slane %v3440, 4
    %v3442 = vmax.f32 %v3440, %v3441
    %v3443 = vrot.slane %v3442, 2
    %v3444 = vmax.f32 %v3442, %v3443
    %v3445 = vrot.slane %v3444, 1
    %v3446 = vmax.f32 %v3444, %v3445
    %v3447 = vmax.f32 %v2631, %v2632
    %v3448 = vrot.slane %v3447, 4
    %v3449 = vmax.f32 %v3447, %v3448
    %v3450 = vrot.slane %v3449, 2
    %v3451 = vmax.f32 %v3449, %v3450
    %v3452 = vrot.slane %v3451, 1
    %v3453 = vmax.f32 %v3451, %v3452
    %v3454 = vmax.f32 %v2633, %v2634
    %v3455 = vrot.slane %v3454, 4
    %v3456 = vmax.f32 %v3454, %v3455
    %v3457 = vrot.slane %v3456, 2
    %v3458 = vmax.f32 %v3456, %v3457
    %v3459 = vrot.slane %v3458, 1
    %v3460 = vmax.f32 %v3458, %v3459
    %v3461 = vmax.f32 %v2635, %v2636
    %v3462 = vrot.slane %v3461, 4
    %v3463 = vmax.f32 %v3461, %v3462
    %v3464 = vrot.slane %v3463, 2
    %v3465 = vmax.f32 %v3463, %v3464
    %v3466 = vrot.slane %v3465, 1
    %v3467 = vmax.f32 %v3465, %v3466
    %v3468 = vmax.f32 %v2637, %v2638
    %v3469 = vrot.slane %v3468, 4
    %v3470 = vmax.f32 %v3468, %v3469
    %v3471 = vrot.slane %v3470, 2
    %v3472 = vmax.f32 %v3470, %v3471
    %v3473 = vrot.slane %v3472, 1
    %v3474 = vmax.f32 %v3472, %v3473
    %v3475 = vmax.f32 %v2639, %v2640
    %v3476 = vrot.slane %v3475, 4
    %v3477 = vmax.f32 %v3475, %v3476
    %v3478 = vrot.slane %v3477, 2
    %v3479 = vmax.f32 %v3477, %v3478
    %v3480 = vrot.slane %v3479, 1
    %v3481 = vmax.f32 %v3479, %v3480
    %v3482 = vmax.f32 %v2641, %v2642
    %v3483 = vrot.slane %v3482, 4
    %v3484 = vmax.f32 %v3482, %v3483
    %v3485 = vrot.slane %v3484, 2
    %v3486 = vmax.f32 %v3484, %v3485
    %v3487 = vrot.slane %v3486, 1
    %v3488 = vmax.f32 %v3486, %v3487
    %v3489 = vmax.f32 %v2643, %v2644
    %v3490 = vrot.slane %v3489, 4
    %v3491 = vmax.f32 %v3489, %v3490
    %v3492 = vrot.slane %v3491, 2
    %v3493 = vmax.f32 %v3491, %v3492
    %v3494 = vrot.slane %v3493, 1
    %v3495 = vmax.f32 %v3493, %v3494
    %v3496 = vmax.f32 %v2645, %v2646
    %v3497 = vrot.slane %v3496, 4
    %v3498 = vmax.f32 %v3496, %v3497
    %v3499 = vrot.slane %v3498, 2
    %v3500 = vmax.f32 %v3498, %v3499
    %v3501 = vrot.slane %v3500, 1
    %v3502 = vmax.f32 %v3500, %v3501
    %v3503 = vmax.f32 %v2647, %v2648
    %v3504 = vrot.slane %v3503, 4
    %v3505 = vmax.f32 %v3503, %v3504
    %v3506 = vrot.slane %v3505, 2
    %v3507 = vmax.f32 %v3505, %v3506
    %v3508 = vrot.slane %v3507, 1
    %v3509 = vmax.f32 %v3507, %v3508
    %v3510 = vmax.f32 %v2649, %v2650
    %v3511 = vrot.slane %v3510, 4
    %v3512 = vmax.f32 %v3510, %v3511
    %v3513 = vrot.slane %v3512, 2
    %v3514 = vmax.f32 %v3512, %v3513
    %v3515 = vrot.slane %v3514, 1
    %v3516 = vmax.f32 %v3514, %v3515
    %v3517 = vmax.f32 %v2651, %v2652
    %v3518 = vrot.slane %v3517, 4
    %v3519 = vmax.f32 %v3517, %v3518
    %v3520 = vrot.slane %v3519, 2
    %v3521 = vmax.f32 %v3519, %v3520
    %v3522 = vrot.slane %v3521, 1
    %v3523 = vmax.f32 %v3521, %v3522
    %v3524 = vmax.f32 %v2653, %v2654
    %v3525 = vrot.slane %v3524, 4
    %v3526 = vmax.f32 %v3524, %v3525
    %v3527 = vrot.slane %v3526, 2
    %v3528 = vmax.f32 %v3526, %v3527
    %v3529 = vrot.slane %v3528, 1
    %v3530 = vmax.f32 %v3528, %v3529
    %v3531 = vmax.f32 %v2655, %v2656
    %v3532 = vrot.slane %v3531, 4
    %v3533 = vmax.f32 %v3531, %v3532
    %v3534 = vrot.slane %v3533, 2
    %v3535 = vmax.f32 %v3533, %v3534
    %v3536 = vrot.slane %v3535, 1
    %v3537 = vmax.f32 %v3535, %v3536
    %v3538 = vmax.f32 %v2657, %v2658
    %v3539 = vrot.slane %v3538, 4
    %v3540 = vmax.f32 %v3538, %v3539
    %v3541 = vrot.slane %v3540, 2
    %v3542 = vmax.f32 %v3540, %v3541
    %v3543 = vrot.slane %v3542, 1
    %v3544 = vmax.f32 %v3542, %v3543
    %v3545 = vmax.f32 %v2659, %v2660
    %v3546 = vrot.slane %v3545, 4
    %v3547 = vmax.f32 %v3545, %v3546
    %v3548 = vrot.slane %v3547, 2
    %v3549 = vmax.f32 %v3547, %v3548
    %v3550 = vrot.slane %v3549, 1
    %v3551 = vmax.f32 %v3549, %v3550
    %v3552 = vmax.f32 %v2661, %v2662
    %v3553 = vrot.slane %v3552, 4
    %v3554 = vmax.f32 %v3552, %v3553
    %v3555 = vrot.slane %v3554, 2
    %v3556 = vmax.f32 %v3554, %v3555
    %v3557 = vrot.slane %v3556, 1
    %v3558 = vmax.f32 %v3556, %v3557
    %v3559 = vld [vmem:[%s3] sm:$0x1]
    %v3561 = vlaneseq
    %v3562 = vshrl.u32 %v3561, 7
    %v3563 = vsub.s32 0, %v3562
    %v3564 = vrot.slane %v3559, %v3563
    %v3566 = vadd.f32 %v2669, %v3564
    %v3567 = vadd.f32 %v2676, %v3564
    %v3568 = vadd.f32 %v2683, %v3564
    %v3569 = vadd.f32 %v2690, %v3564
    %v3570 = vadd.f32 %v2697, %v3564
    %v3571 = vadd.f32 %v2704, %v3564
    %v3572 = vadd.f32 %v2711, %v3564
    %v3573 = vadd.f32 %v2718, %v3564
    %v3574 = vadd.f32 %v2725, %v3564
    %v3575 = vadd.f32 %v2732, %v3564
    %v3576 = vadd.f32 %v2739, %v3564
    %v3577 = vadd.f32 %v2746, %v3564
    %v3578 = vadd.f32 %v2753, %v3564
    %v3579 = vadd.f32 %v2760, %v3564
    %v3580 = vadd.f32 %v2767, %v3564
    %v3581 = vadd.f32 %v2774, %v3564
    %v3582 = vadd.f32 %v2781, %v3564
    %v3583 = vadd.f32 %v2788, %v3564
    %v3584 = vadd.f32 %v2795, %v3564
    %v3585 = vadd.f32 %v2802, %v3564
    %v3586 = vadd.f32 %v2809, %v3564
    %v3587 = vadd.f32 %v2816, %v3564
    %v3588 = vadd.f32 %v2823, %v3564
    %v3589 = vadd.f32 %v2830, %v3564
    %v3590 = vadd.f32 %v2837, %v3564
    %v3591 = vadd.f32 %v2844, %v3564
    %v3592 = vadd.f32 %v2851, %v3564
    %v3593 = vadd.f32 %v2858, %v3564
    %v3594 = vadd.f32 %v2865, %v3564
    %v3595 = vadd.f32 %v2872, %v3564
    %v3596 = vadd.f32 %v2879, %v3564
    %v3597 = vadd.f32 %v2886, %v3564
    %v3598 = vadd.f32 %v2893, %v3564
    %v3599 = vadd.f32 %v2900, %v3564
    %v3600 = vadd.f32 %v2907, %v3564
    %v3601 = vadd.f32 %v2914, %v3564
    %v3602 = vadd.f32 %v2921, %v3564
    %v3603 = vadd.f32 %v2928, %v3564
    %v3604 = vadd.f32 %v2935, %v3564
    %v3605 = vadd.f32 %v2942, %v3564
    %v3606 = vadd.f32 %v2949, %v3564
    %v3607 = vadd.f32 %v2956, %v3564
    %v3608 = vadd.f32 %v2963, %v3564
    %v3609 = vadd.f32 %v2970, %v3564
    %v3610 = vadd.f32 %v2977, %v3564
    %v3611 = vadd.f32 %v2984, %v3564
    %v3612 = vadd.f32 %v2991, %v3564
    %v3613 = vadd.f32 %v2998, %v3564
    %v3614 = vadd.f32 %v3005, %v3564
    %v3615 = vadd.f32 %v3012, %v3564
    %v3616 = vadd.f32 %v3019, %v3564
    %v3617 = vadd.f32 %v3026, %v3564
    %v3618 = vadd.f32 %v3033, %v3564
    %v3619 = vadd.f32 %v3040, %v3564
    %v3620 = vadd.f32 %v3047, %v3564
    %v3621 = vadd.f32 %v3054, %v3564
    %v3622 = vadd.f32 %v3061, %v3564
    %v3623 = vadd.f32 %v3068, %v3564
    %v3624 = vadd.f32 %v3075, %v3564
    %v3625 = vadd.f32 %v3082, %v3564
    %v3626 = vadd.f32 %v3089, %v3564
    %v3627 = vadd.f32 %v3096, %v3564
    %v3628 = vadd.f32 %v3103, %v3564
    %v3629 = vadd.f32 %v3110, %v3564
    %v3630 = vadd.f32 %v3117, %v3564
    %v3631 = vadd.f32 %v3124, %v3564
    %v3632 = vadd.f32 %v3131, %v3564
    %v3633 = vadd.f32 %v3138, %v3564
    %v3634 = vadd.f32 %v3145, %v3564
    %v3635 = vadd.f32 %v3152, %v3564
    %v3636 = vadd.f32 %v3159, %v3564
    %v3637 = vadd.f32 %v3166, %v3564
    %v3638 = vadd.f32 %v3173, %v3564
    %v3639 = vadd.f32 %v3180, %v3564
    %v3640 = vadd.f32 %v3187, %v3564
    %v3641 = vadd.f32 %v3194, %v3564
    %v3642 = vadd.f32 %v3201, %v3564
    %v3643 = vadd.f32 %v3208, %v3564
    %v3644 = vadd.f32 %v3215, %v3564
    %v3645 = vadd.f32 %v3222, %v3564
    %v3646 = vadd.f32 %v3229, %v3564
    %v3647 = vadd.f32 %v3236, %v3564
    %v3648 = vadd.f32 %v3243, %v3564
    %v3649 = vadd.f32 %v3250, %v3564
    %v3650 = vadd.f32 %v3257, %v3564
    %v3651 = vadd.f32 %v3264, %v3564
    %v3652 = vadd.f32 %v3271, %v3564
    %v3653 = vadd.f32 %v3278, %v3564
    %v3654 = vadd.f32 %v3285, %v3564
    %v3655 = vadd.f32 %v3292, %v3564
    %v3656 = vadd.f32 %v3299, %v3564
    %v3657 = vadd.f32 %v3306, %v3564
    %v3658 = vadd.f32 %v3313, %v3564
    %v3659 = vadd.f32 %v3320, %v3564
    %v3660 = vadd.f32 %v3327, %v3564
    %v3661 = vadd.f32 %v3334, %v3564
    %v3662 = vadd.f32 %v3341, %v3564
    %v3663 = vadd.f32 %v3348, %v3564
    %v3664 = vadd.f32 %v3355, %v3564
    %v3665 = vadd.f32 %v3362, %v3564
    %v3666 = vadd.f32 %v3369, %v3564
    %v3667 = vadd.f32 %v3376, %v3564
    %v3668 = vadd.f32 %v3383, %v3564
    %v3669 = vadd.f32 %v3390, %v3564
    %v3670 = vadd.f32 %v3397, %v3564
    %v3671 = vadd.f32 %v3404, %v3564
    %v3672 = vadd.f32 %v3411, %v3564
    %v3673 = vadd.f32 %v3418, %v3564
    %v3674 = vadd.f32 %v3425, %v3564
    %v3675 = vadd.f32 %v3432, %v3564
    %v3676 = vadd.f32 %v3439, %v3564
    %v3677 = vadd.f32 %v3446, %v3564
    %v3678 = vadd.f32 %v3453, %v3564
    %v3679 = vadd.f32 %v3460, %v3564
    %v3680 = vadd.f32 %v3467, %v3564
    %v3681 = vadd.f32 %v3474, %v3564
    %v3682 = vadd.f32 %v3481, %v3564
    %v3683 = vadd.f32 %v3488, %v3564
    %v3684 = vadd.f32 %v3495, %v3564
    %v3685 = vadd.f32 %v3502, %v3564
    %v3686 = vadd.f32 %v3509, %v3564
    %v3687 = vadd.f32 %v3516, %v3564
    %v3688 = vadd.f32 %v3523, %v3564
    %v3689 = vadd.f32 %v3530, %v3564
    %v3690 = vadd.f32 %v3537, %v3564
    %v3691 = vadd.f32 %v3544, %v3564
    %v3692 = vadd.f32 %v3551, %v3564
    %v3693 = vadd.f32 %v3558, %v3564
    %v3694 = vtanh.pop %v3566
    %v3695 = vtanh.pop %v3567
    %v3696 = vtanh.pop %v3568
    %v3697 = vtanh.pop %v3569
    %v3698 = vtanh.pop %v3570
    %v3699 = vtanh.pop %v3571
    %v3700 = vtanh.pop %v3572
    %v3701 = vtanh.pop %v3573
    %v3702 = vtanh.pop %v3574
    %v3703 = vtanh.pop %v3575
    %v3704 = vtanh.pop %v3576
    %v3705 = vtanh.pop %v3577
    %v3706 = vtanh.pop %v3578
    %v3707 = vtanh.pop %v3579
    %v3708 = vtanh.pop %v3580
    %v3709 = vtanh.pop %v3581
    %v3710 = vtanh.pop %v3582
    %v3711 = vtanh.pop %v3583
    %v3712 = vtanh.pop %v3584
    %v3713 = vtanh.pop %v3585
    %v3714 = vtanh.pop %v3586
    %v3715 = vtanh.pop %v3587
    %v3716 = vtanh.pop %v3588
    %v3717 = vtanh.pop %v3589
    %v3718 = vtanh.pop %v3590
    %v3719 = vtanh.pop %v3591
    %v3720 = vtanh.pop %v3592
    %v3721 = vtanh.pop %v3593
    %v3722 = vtanh.pop %v3594
    %v3723 = vtanh.pop %v3595
    %v3724 = vtanh.pop %v3596
    %v3725 = vtanh.pop %v3597
    %v3726 = vtanh.pop %v3598
    %v3727 = vtanh.pop %v3599
    %v3728 = vtanh.pop %v3600
    %v3729 = vtanh.pop %v3601
    %v3730 = vtanh.pop %v3602
    %v3731 = vtanh.pop %v3603
    %v3732 = vtanh.pop %v3604
    %v3733 = vtanh.pop %v3605
    %v3734 = vtanh.pop %v3606
    %v3735 = vtanh.pop %v3607
    %v3736 = vtanh.pop %v3608
    %v3737 = vtanh.pop %v3609
    %v3738 = vtanh.pop %v3610
    %v3739 = vtanh.pop %v3611
    %v3740 = vtanh.pop %v3612
    %v3741 = vtanh.pop %v3613
    %v3742 = vtanh.pop %v3614
    %v3743 = vtanh.pop %v3615
    %v3744 = vtanh.pop %v3616
    %v3745 = vtanh.pop %v3617
    %v3746 = vtanh.pop %v3618
    %v3747 = vtanh.pop %v3619
    %v3748 = vtanh.pop %v3620
    %v3749 = vtanh.pop %v3621
    %v3750 = vtanh.pop %v3622
    %v3751 = vtanh.pop %v3623
    %v3752 = vtanh.pop %v3624
    %v3753 = vtanh.pop %v3625
    %v3754 = vtanh.pop %v3626
    %v3755 = vtanh.pop %v3627
    %v3756 = vtanh.pop %v3628
    %v3757 = vtanh.pop %v3629
    %v3758 = vtanh.pop %v3630
    %v3759 = vtanh.pop %v3631
    %v3760 = vtanh.pop %v3632
    %v3761 = vtanh.pop %v3633
    %v3762 = vtanh.pop %v3634
    %v3763 = vtanh.pop %v3635
    %v3764 = vtanh.pop %v3636
    %v3765 = vtanh.pop %v3637
    %v3766 = vtanh.pop %v3638
    %v3767 = vtanh.pop %v3639
    %v3768 = vtanh.pop %v3640
    %v3769 = vtanh.pop %v3641
    %v3770 = vtanh.pop %v3642
    %v3771 = vtanh.pop %v3643
    %v3772 = vtanh.pop %v3644
    %v3773 = vtanh.pop %v3645
    %v3774 = vtanh.pop %v3646
    %v3775 = vtanh.pop %v3647
    %v3776 = vtanh.pop %v3648
    %v3777 = vtanh.pop %v3649
    %v3778 = vtanh.pop %v3650
    %v3779 = vtanh.pop %v3651
    %v3780 = vtanh.pop %v3652
    %v3781 = vtanh.pop %v3653
    %v3782 = vtanh.pop %v3654
    %v3783 = vtanh.pop %v3655
    %v3784 = vtanh.pop %v3656
    %v3785 = vtanh.pop %v3657
    %v3786 = vtanh.pop %v3658
    %v3787 = vtanh.pop %v3659
    %v3788 = vtanh.pop %v3660
    %v3789 = vtanh.pop %v3661
    %v3790 = vtanh.pop %v3662
    %v3791 = vtanh.pop %v3663
    %v3792 = vtanh.pop %v3664
    %v3793 = vtanh.pop %v3665
    %v3794 = vtanh.pop %v3666
    %v3795 = vtanh.pop %v3667
    %v3796 = vtanh.pop %v3668
    %v3797 = vtanh.pop %v3669
    %v3798 = vtanh.pop %v3670
    %v3799 = vtanh.pop %v3671
    %v3800 = vtanh.pop %v3672
    %v3801 = vtanh.pop %v3673
    %v3802 = vtanh.pop %v3674
    %v3803 = vtanh.pop %v3675
    %v3804 = vtanh.pop %v3676
    %v3805 = vtanh.pop %v3677
    %v3806 = vtanh.pop %v3678
    %v3807 = vtanh.pop %v3679
    %v3808 = vtanh.pop %v3680
    %v3809 = vtanh.pop %v3681
    %v3810 = vtanh.pop %v3682
    %v3811 = vtanh.pop %v3683
    %v3812 = vtanh.pop %v3684
    %v3813 = vtanh.pop %v3685
    %v3814 = vtanh.pop %v3686
    %v3815 = vtanh.pop %v3687
    %v3816 = vtanh.pop %v3688
    %v3817 = vtanh.pop %v3689
    %v3818 = vtanh.pop %v3690
    %v3819 = vtanh.pop %v3691
    %v3820 = vtanh.pop %v3692
    %v3821 = vtanh.pop %v3693
    %v3822 = vld [vmem:[%s4] sm:$0xff]
    %v3823 = vld [vmem:[%s4 + $0x8] sm:$0xff]
    %v3824 = vld [vmem:[%s4 + $0x10] sm:$0xff]
    %v3825 = vld [vmem:[%s4 + $0x18] sm:$0xff]
    %v3826 = vld [vmem:[%s4 + $0x20] sm:$0xff]
    %v3827 = vld [vmem:[%s4 + $0x28] sm:$0xff]
    %v3828 = vld [vmem:[%s4 + $0x30] sm:$0xff]
    %v3829 = vld [vmem:[%s4 + $0x38] sm:$0xff]
    %v3830 = vld [vmem:[%s4 + $0x40] sm:$0xff]
    %v3831 = vld [vmem:[%s4 + $0x48] sm:$0xff]
    %v3832 = vld [vmem:[%s4 + $0x50] sm:$0xff]
    %v3833 = vld [vmem:[%s4 + $0x58] sm:$0xff]
    %v3834 = vld [vmem:[%s4 + $0x60] sm:$0xff]
    %v3835 = vld [vmem:[%s4 + $0x68] sm:$0xff]
    %v3836 = vld [vmem:[%s4 + $0x70] sm:$0xff]
    %v3837 = vld [vmem:[%s4 + $0x78] sm:$0xff]
    %v3838 = vld [vmem:[%s4 + $0x80] sm:$0xff]
    %v3839 = vld [vmem:[%s4 + $0x88] sm:$0xff]
    %v3840 = vld [vmem:[%s4 + $0x90] sm:$0xff]
    %v3841 = vld [vmem:[%s4 + $0x98] sm:$0xff]
    %v3842 = vld [vmem:[%s4 + $0xa0] sm:$0xff]
    %v3843 = vld [vmem:[%s4 + $0xa8] sm:$0xff]
    %v3844 = vld [vmem:[%s4 + $0xb0] sm:$0xff]
    %v3845 = vld [vmem:[%s4 + $0xb8] sm:$0xff]
    %v3846 = vld [vmem:[%s4 + $0xc0] sm:$0xff]
    %v3847 = vld [vmem:[%s4 + $0xc8] sm:$0xff]
    %v3848 = vld [vmem:[%s4 + $0xd0] sm:$0xff]
    %v3849 = vld [vmem:[%s4 + $0xd8] sm:$0xff]
    %v3850 = vld [vmem:[%s4 + $0xe0] sm:$0xff]
    %v3851 = vld [vmem:[%s4 + $0xe8] sm:$0xff]
    %v3852 = vld [vmem:[%s4 + $0xf0] sm:$0xff]
    %v3853 = vld [vmem:[%s4 + $0xf8] sm:$0xff]
    %v3854 = vld [vmem:[%s5] sm:$0x3]
    %v3856 = vlaneseq
    %v3857 = vshrl.u32 %v3856, 7
    %v3858 = vsub.s32 0, %v3857
    %v3859 = vrot.slane %v3854, %v3858
    %v3860 = vlaneseq
    %v3861 = vshrl.u32 %v3860, 7
    %v3862 = vsub.s32 1, %v3861
    %v3863 = vrot.slane %v3854, %v3862
    %v3994 = vrot.slane %v3695, 7
    %vm3995 = vcmask 1041409
    %v3996 = vsel %vm3995, %v3994, %v3694
    %v3997 = vrot.slane %v3696, 6
    %vm3998 = vcmask 1042434
    %v3999 = vsel %vm3998, %v3997, %v3996
    %v4000 = vrot.slane %v3697, 5
    %vm4001 = vcmask 1043459
    %v4002 = vsel %vm4001, %v4000, %v3999
    %v4003 = vrot.slane %v3698, 4
    %vm4004 = vcmask 1044484
    %v4005 = vsel %vm4004, %v4003, %v4002
    %v4006 = vrot.slane %v3699, 3
    %vm4007 = vcmask 1045509
    %v4008 = vsel %vm4007, %v4006, %v4005
    %v4009 = vrot.slane %v3700, 2
    %vm4010 = vcmask 1046534
    %v4011 = vsel %vm4010, %v4009, %v4008
    %v4012 = vrot.slane %v3701, 1
    %vm4013 = vcmask 1047559
    %v4014 = vsel %vm4013, %v4012, %v4011
    %v4015 = vrot.slane %v3703, 7
    %v4016 = vsel %vm3995, %v4015, %v3702
    %v4017 = vrot.slane %v3704, 6
    %v4018 = vsel %vm3998, %v4017, %v4016
    %v4019 = vrot.slane %v3705, 5
    %v4020 = vsel %vm4001, %v4019, %v4018
    %v4021 = vrot.slane %v3706, 4
    %v4022 = vsel %vm4004, %v4021, %v4020
    %v4023 = vrot.slane %v3707, 3
    %v4024 = vsel %vm4007, %v4023, %v4022
    %v4025 = vrot.slane %v3708, 2
    %v4026 = vsel %vm4010, %v4025, %v4024
    %v4027 = vrot.slane %v3709, 1
    %v4028 = vsel %vm4013, %v4027, %v4026
    %v4029 = vrot.slane %v3711, 7
    %v4030 = vsel %vm3995, %v4029, %v3710
    %v4031 = vrot.slane %v3712, 6
    %v4032 = vsel %vm3998, %v4031, %v4030
    %v4033 = vrot.slane %v3713, 5
    %v4034 = vsel %vm4001, %v4033, %v4032
    %v4035 = vrot.slane %v3714, 4
    %v4036 = vsel %vm4004, %v4035, %v4034
    %v4037 = vrot.slane %v3715, 3
    %v4038 = vsel %vm4007, %v4037, %v4036
    %v4039 = vrot.slane %v3716, 2
    %v4040 = vsel %vm4010, %v4039, %v4038
    %v4041 = vrot.slane %v3717, 1
    %v4042 = vsel %vm4013, %v4041, %v4040
    %v4043 = vrot.slane %v3719, 7
    %v4044 = vsel %vm3995, %v4043, %v3718
    %v4045 = vrot.slane %v3720, 6
    %v4046 = vsel %vm3998, %v4045, %v4044
    %v4047 = vrot.slane %v3721, 5
    %v4048 = vsel %vm4001, %v4047, %v4046
    %v4049 = vrot.slane %v3722, 4
    %v4050 = vsel %vm4004, %v4049, %v4048
    %v4051 = vrot.slane %v3723, 3
    %v4052 = vsel %vm4007, %v4051, %v4050
    %v4053 = vrot.slane %v3724, 2
    %v4054 = vsel %vm4010, %v4053, %v4052
    %v4055 = vrot.slane %v3725, 1
    %v4056 = vsel %vm4013, %v4055, %v4054
    %v4057 = vrot.slane %v3727, 7
    %v4058 = vsel %vm3995, %v4057, %v3726
    %v4059 = vrot.slane %v3728, 6
    %v4060 = vsel %vm3998, %v4059, %v4058
    %v4061 = vrot.slane %v3729, 5
    %v4062 = vsel %vm4001, %v4061, %v4060
    %v4063 = vrot.slane %v3730, 4
    %v4064 = vsel %vm4004, %v4063, %v4062
    %v4065 = vrot.slane %v3731, 3
    %v4066 = vsel %vm4007, %v4065, %v4064
    %v4067 = vrot.slane %v3732, 2
    %v4068 = vsel %vm4010, %v4067, %v4066
    %v4069 = vrot.slane %v3733, 1
    %v4070 = vsel %vm4013, %v4069, %v4068
    %v4071 = vrot.slane %v3735, 7
    %v4072 = vsel %vm3995, %v4071, %v3734
    %v4073 = vrot.slane %v3736, 6
    %v4074 = vsel %vm3998, %v4073, %v4072
    %v4075 = vrot.slane %v3737, 5
    %v4076 = vsel %vm4001, %v4075, %v4074
    %v4077 = vrot.slane %v3738, 4
    %v4078 = vsel %vm4004, %v4077, %v4076
    %v4079 = vrot.slane %v3739, 3
    %v4080 = vsel %vm4007, %v4079, %v4078
    %v4081 = vrot.slane %v3740, 2
    %v4082 = vsel %vm4010, %v4081, %v4080
    %v4083 = vrot.slane %v3741, 1
    %v4084 = vsel %vm4013, %v4083, %v4082
    %v4085 = vrot.slane %v3743, 7
    %v4086 = vsel %vm3995, %v4085, %v3742
    %v4087 = vrot.slane %v3744, 6
    %v4088 = vsel %vm3998, %v4087, %v4086
    %v4089 = vrot.slane %v3745, 5
    %v4090 = vsel %vm4001, %v4089, %v4088
    %v4091 = vrot.slane %v3746, 4
    %v4092 = vsel %vm4004, %v4091, %v4090
    %v4093 = vrot.slane %v3747, 3
    %v4094 = vsel %vm4007, %v4093, %v4092
    %v4095 = vrot.slane %v3748, 2
    %v4096 = vsel %vm4010, %v4095, %v4094
    %v4097 = vrot.slane %v3749, 1
    %v4098 = vsel %vm4013, %v4097, %v4096
    %v4099 = vrot.slane %v3751, 7
    %v4100 = vsel %vm3995, %v4099, %v3750
    %v4101 = vrot.slane %v3752, 6
    %v4102 = vsel %vm3998, %v4101, %v4100
    %v4103 = vrot.slane %v3753, 5
    %v4104 = vsel %vm4001, %v4103, %v4102
    %v4105 = vrot.slane %v3754, 4
    %v4106 = vsel %vm4004, %v4105, %v4104
    %v4107 = vrot.slane %v3755, 3
    %v4108 = vsel %vm4007, %v4107, %v4106
    %v4109 = vrot.slane %v3756, 2
    %v4110 = vsel %vm4010, %v4109, %v4108
    %v4111 = vrot.slane %v3757, 1
    %v4112 = vsel %vm4013, %v4111, %v4110
    %v4113 = vrot.slane %v3759, 7
    %v4114 = vsel %vm3995, %v4113, %v3758
    %v4115 = vrot.slane %v3760, 6
    %v4116 = vsel %vm3998, %v4115, %v4114
    %v4117 = vrot.slane %v3761, 5
    %v4118 = vsel %vm4001, %v4117, %v4116
    %v4119 = vrot.slane %v3762, 4
    %v4120 = vsel %vm4004, %v4119, %v4118
    %v4121 = vrot.slane %v3763, 3
    %v4122 = vsel %vm4007, %v4121, %v4120
    %v4123 = vrot.slane %v3764, 2
    %v4124 = vsel %vm4010, %v4123, %v4122
    %v4125 = vrot.slane %v3765, 1
    %v4126 = vsel %vm4013, %v4125, %v4124
    %v4127 = vrot.slane %v3767, 7
    %v4128 = vsel %vm3995, %v4127, %v3766
    %v4129 = vrot.slane %v3768, 6
    %v4130 = vsel %vm3998, %v4129, %v4128
    %v4131 = vrot.slane %v3769, 5
    %v4132 = vsel %vm4001, %v4131, %v4130
    %v4133 = vrot.slane %v3770, 4
    %v4134 = vsel %vm4004, %v4133, %v4132
    %v4135 = vrot.slane %v3771, 3
    %v4136 = vsel %vm4007, %v4135, %v4134
    %v4137 = vrot.slane %v3772, 2
    %v4138 = vsel %vm4010, %v4137, %v4136
    %v4139 = vrot.slane %v3773, 1
    %v4140 = vsel %vm4013, %v4139, %v4138
    %v4141 = vrot.slane %v3775, 7
    %v4142 = vsel %vm3995, %v4141, %v3774
    %v4143 = vrot.slane %v3776, 6
    %v4144 = vsel %vm3998, %v4143, %v4142
    %v4145 = vrot.slane %v3777, 5
    %v4146 = vsel %vm4001, %v4145, %v4144
    %v4147 = vrot.slane %v3778, 4
    %v4148 = vsel %vm4004, %v4147, %v4146
    %v4149 = vrot.slane %v3779, 3
    %v4150 = vsel %vm4007, %v4149, %v4148
    %v4151 = vrot.slane %v3780, 2
    %v4152 = vsel %vm4010, %v4151, %v4150
    %v4153 = vrot.slane %v3781, 1
    %v4154 = vsel %vm4013, %v4153, %v4152
    %v4155 = vrot.slane %v3783, 7
    %v4156 = vsel %vm3995, %v4155, %v3782
    %v4157 = vrot.slane %v3784, 6
    %v4158 = vsel %vm3998, %v4157, %v4156
    %v4159 = vrot.slane %v3785, 5
    %v4160 = vsel %vm4001, %v4159, %v4158
    %v4161 = vrot.slane %v3786, 4
    %v4162 = vsel %vm4004, %v4161, %v4160
    %v4163 = vrot.slane %v3787, 3
    %v4164 = vsel %vm4007, %v4163, %v4162
    %v4165 = vrot.slane %v3788, 2
    %v4166 = vsel %vm4010, %v4165, %v4164
    %v4167 = vrot.slane %v3789, 1
    %v4168 = vsel %vm4013, %v4167, %v4166
    %v4169 = vrot.slane %v3791, 7
    %v4170 = vsel %vm3995, %v4169, %v3790
    %v4171 = vrot.slane %v3792, 6
    %v4172 = vsel %vm3998, %v4171, %v4170
    %v4173 = vrot.slane %v3793, 5
    %v4174 = vsel %vm4001, %v4173, %v4172
    %v4175 = vrot.slane %v3794, 4
    %v4176 = vsel %vm4004, %v4175, %v4174
    %v4177 = vrot.slane %v3795, 3
    %v4178 = vsel %vm4007, %v4177, %v4176
    %v4179 = vrot.slane %v3796, 2
    %v4180 = vsel %vm4010, %v4179, %v4178
    %v4181 = vrot.slane %v3797, 1
    %v4182 = vsel %vm4013, %v4181, %v4180
    %v4183 = vrot.slane %v3799, 7
    %v4184 = vsel %vm3995, %v4183, %v3798
    %v4185 = vrot.slane %v3800, 6
    %v4186 = vsel %vm3998, %v4185, %v4184
    %v4187 = vrot.slane %v3801, 5
    %v4188 = vsel %vm4001, %v4187, %v4186
    %v4189 = vrot.slane %v3802, 4
    %v4190 = vsel %vm4004, %v4189, %v4188
    %v4191 = vrot.slane %v3803, 3
    %v4192 = vsel %vm4007, %v4191, %v4190
    %v4193 = vrot.slane %v3804, 2
    %v4194 = vsel %vm4010, %v4193, %v4192
    %v4195 = vrot.slane %v3805, 1
    %v4196 = vsel %vm4013, %v4195, %v4194
    %v4197 = vrot.slane %v3807, 7
    %v4198 = vsel %vm3995, %v4197, %v3806
    %v4199 = vrot.slane %v3808, 6
    %v4200 = vsel %vm3998, %v4199, %v4198
    %v4201 = vrot.slane %v3809, 5
    %v4202 = vsel %vm4001, %v4201, %v4200
    %v4203 = vrot.slane %v3810, 4
    %v4204 = vsel %vm4004, %v4203, %v4202
    %v4205 = vrot.slane %v3811, 3
    %v4206 = vsel %vm4007, %v4205, %v4204
    %v4207 = vrot.slane %v3812, 2
    %v4208 = vsel %vm4010, %v4207, %v4206
    %v4209 = vrot.slane %v3813, 1
    %v4210 = vsel %vm4013, %v4209, %v4208
    %v4211 = vrot.slane %v3815, 7
    %v4212 = vsel %vm3995, %v4211, %v3814
    %v4213 = vrot.slane %v3816, 6
    %v4214 = vsel %vm3998, %v4213, %v4212
    %v4215 = vrot.slane %v3817, 5
    %v4216 = vsel %vm4001, %v4215, %v4214
    %v4217 = vrot.slane %v3818, 4
    %v4218 = vsel %vm4004, %v4217, %v4216
    %v4219 = vrot.slane %v3819, 3
    %v4220 = vsel %vm4007, %v4219, %v4218
    %v4221 = vrot.slane %v3820, 2
    %v4222 = vsel %vm4010, %v4221, %v4220
    %v4223 = vrot.slane %v3821, 1
    %v4224 = vsel %vm4013, %v4223, %v4222
    %4241 = vmatprep.subr.mxu0 %v3853
    %4242 = vmatpush1.msra.mxu0 %v3852
    %4243 = vmatprep.subr.mxu0 %v3851
    %4244 = vmatpush1.msra.mxu0 %v3850
    %4245 = vmatprep.subr.mxu0 %v3849
    %4246 = vmatpush1.msra.mxu0 %v3848
    %4247 = vmatprep.subr.mxu0 %v3847
    %4248 = vmatpush1.msra.mxu0 %v3846
    %4249 = vmatprep.subr.mxu0 %v3845
    %4250 = vmatpush1.msra.mxu0 %v3844
    %4251 = vmatprep.subr.mxu0 %v3843
    %4252 = vmatpush1.msra.mxu0 %v3842
    %4253 = vmatprep.subr.mxu0 %v3841
    %4254 = vmatpush1.msra.mxu0 %v3840
    %4255 = vmatprep.subr.mxu0 %v3839
    %4256 = vmatpush1.msra.mxu0 %v3838
    %4257 = vmatprep.subr.mxu0 %v3837
    %4258 = vmatpush1.msra.mxu0 %v3836
    %4259 = vmatprep.subr.mxu0 %v3835
    %4260 = vmatpush1.msra.mxu0 %v3834
    %4261 = vmatprep.subr.mxu0 %v3833
    %4262 = vmatpush1.msra.mxu0 %v3832
    %4263 = vmatprep.subr.mxu0 %v3831
    %4264 = vmatpush1.msra.mxu0 %v3830
    %4265 = vmatprep.subr.mxu0 %v3829
    %4266 = vmatpush1.msra.mxu0 %v3828
    %4267 = vmatprep.subr.mxu0 %v3827
    %4268 = vmatpush1.msra.mxu0 %v3826
    %4269 = vmatprep.subr.mxu0 %v3825
    %4270 = vmatpush1.msra.mxu0 %v3824
    %4271 = vmatprep.subr.mxu0 %v3823
    %4272 = vmatpush1.msra.mxu0 %v3822
    %4273 = vmatprep.subr.mxu0 0.0
    %4274 = vmatpush2.msra.mxu0 0.0
    %4275 = vmatprep.subr.mxu0 0.0
    %4276 = vmatpush2.msra.mxu0 0.0
    %4277 = vmatprep.subr.mxu0 0.0
    %4278 = vmatpush2.msra.mxu0 0.0
    %4279 = vmatprep.subr.mxu0 0.0
    %4280 = vmatpush2.msra.mxu0 0.0
    %4281 = vmatprep.subr.mxu0 0.0
    %4282 = vmatpush2.msra.mxu0 0.0
    %4283 = vmatprep.subr.mxu0 0.0
    %4284 = vmatpush2.msra.mxu0 0.0
    %4285 = vmatprep.subr.mxu0 0.0
    %4286 = vmatpush2.msra.mxu0 0.0
    %4287 = vmatprep.subr.mxu0 0.0
    %4288 = vmatpush2.msra.mxu0 0.0
    %4289 = vmatprep.subr.mxu0 0.0
    %4290 = vmatpush2.msra.mxu0 0.0
    %4291 = vmatprep.subr.mxu0 0.0
    %4292 = vmatpush2.msra.mxu0 0.0
    %4293 = vmatprep.subr.mxu0 0.0
    %4294 = vmatpush2.msra.mxu0 0.0
    %4295 = vmatprep.subr.mxu0 0.0
    %4296 = vmatpush2.msra.mxu0 0.0
    %4297 = vmatprep.subr.mxu0 0.0
    %4298 = vmatpush2.msra.mxu0 0.0
    %4299 = vmatprep.subr.mxu0 0.0
    %4300 = vmatpush2.msra.mxu0 0.0
    %4301 = vmatprep.subr.mxu0 0.0
    %4302 = vmatpush2.msra.mxu0 0.0
    %4303 = vmatprep.subr.mxu0 0.0
    %4304 = vmatpush2.msra.mxu0 0.0
    %4305 = vmatprep.mubr.f32.mxu0 0.0
    %4306 = vmatmul.mubr.f32.gmra.mxu0 %v4014
    %v4307 = vpop.f32.mrf.mxu0
    %v4308 = vadd.f32 %v3859, %v4307
    %v4309 = vpop.f32.mrf.mxu0
    %v4310 = vadd.f32 %v3863, %v4309
    %4311 = vmatprep.mubr.f32.mxu0 0.0
    %4312 = vmatmul.mubr.f32.gmra.mxu0 %v4028
    %v4313 = vpop.f32.mrf.mxu0
    %v4314 = vadd.f32 %v3859, %v4313
    %v4315 = vpop.f32.mrf.mxu0
    %v4316 = vadd.f32 %v3863, %v4315
    %4317 = vmatprep.mubr.f32.mxu0 0.0
    %4318 = vmatmul.mubr.f32.gmra.mxu0 %v4042
    %v4319 = vpop.f32.mrf.mxu0
    %v4320 = vadd.f32 %v3859, %v4319
    %v4321 = vpop.f32.mrf.mxu0
    %v4322 = vadd.f32 %v3863, %v4321
    %4323 = vmatprep.mubr.f32.mxu0 0.0
    %4324 = vmatmul.mubr.f32.gmra.mxu0 %v4056
    %v4325 = vpop.f32.mrf.mxu0
    %v4326 = vadd.f32 %v3859, %v4325
    %v4327 = vpop.f32.mrf.mxu0
    %v4328 = vadd.f32 %v3863, %v4327
    %4329 = vmatprep.mubr.f32.mxu0 0.0
    %4330 = vmatmul.mubr.f32.gmra.mxu0 %v4070
    %v4331 = vpop.f32.mrf.mxu0
    %v4332 = vadd.f32 %v3859, %v4331
    %v4333 = vpop.f32.mrf.mxu0
    %v4334 = vadd.f32 %v3863, %v4333
    %4335 = vmatprep.mubr.f32.mxu0 0.0
    %4336 = vmatmul.mubr.f32.gmra.mxu0 %v4084
    %v4337 = vpop.f32.mrf.mxu0
    %v4338 = vadd.f32 %v3859, %v4337
    %v4339 = vpop.f32.mrf.mxu0
    %v4340 = vadd.f32 %v3863, %v4339
    %4341 = vmatprep.mubr.f32.mxu0 0.0
    %4342 = vmatmul.mubr.f32.gmra.mxu0 %v4098
    %v4343 = vpop.f32.mrf.mxu0
    %v4344 = vadd.f32 %v3859, %v4343
    %v4345 = vpop.f32.mrf.mxu0
    %v4346 = vadd.f32 %v3863, %v4345
    %4347 = vmatprep.mubr.f32.mxu0 0.0
    %4348 = vmatmul.mubr.f32.gmra.mxu0 %v4112
    %v4349 = vpop.f32.mrf.mxu0
    %v4350 = vadd.f32 %v3859, %v4349
    %v4351 = vpop.f32.mrf.mxu0
    %v4352 = vadd.f32 %v3863, %v4351
    %4353 = vmatprep.mubr.f32.mxu0 0.0
    %4354 = vmatmul.mubr.f32.gmra.mxu0 %v4126
    %v4355 = vpop.f32.mrf.mxu0
    %v4356 = vadd.f32 %v3859, %v4355
    %v4357 = vpop.f32.mrf.mxu0
    %v4358 = vadd.f32 %v3863, %v4357
    %4359 = vmatprep.mubr.f32.mxu0 0.0
    %4360 = vmatmul.mubr.f32.gmra.mxu0 %v4140
    %v4361 = vpop.f32.mrf.mxu0
    %v4362 = vadd.f32 %v3859, %v4361
    %v4363 = vpop.f32.mrf.mxu0
    %v4364 = vadd.f32 %v3863, %v4363
    %4365 = vmatprep.mubr.f32.mxu0 0.0
    %4366 = vmatmul.mubr.f32.gmra.mxu0 %v4154
    %v4367 = vpop.f32.mrf.mxu0
    %v4368 = vadd.f32 %v3859, %v4367
    %v4369 = vpop.f32.mrf.mxu0
    %v4370 = vadd.f32 %v3863, %v4369
    %4371 = vmatprep.mubr.f32.mxu0 0.0
    %4372 = vmatmul.mubr.f32.gmra.mxu0 %v4168
    %v4373 = vpop.f32.mrf.mxu0
    %v4374 = vadd.f32 %v3859, %v4373
    %v4375 = vpop.f32.mrf.mxu0
    %v4376 = vadd.f32 %v3863, %v4375
    %4377 = vmatprep.mubr.f32.mxu0 0.0
    %4378 = vmatmul.mubr.f32.gmra.mxu0 %v4182
    %v4379 = vpop.f32.mrf.mxu0
    %v4380 = vadd.f32 %v3859, %v4379
    %v4381 = vpop.f32.mrf.mxu0
    %v4382 = vadd.f32 %v3863, %v4381
    %4383 = vmatprep.mubr.f32.mxu0 0.0
    %4384 = vmatmul.mubr.f32.gmra.mxu0 %v4196
    %v4385 = vpop.f32.mrf.mxu0
    %v4386 = vadd.f32 %v3859, %v4385
    %v4387 = vpop.f32.mrf.mxu0
    %v4388 = vadd.f32 %v3863, %v4387
    %4389 = vmatprep.mubr.f32.mxu0 0.0
    %4390 = vmatmul.mubr.f32.gmra.mxu0 %v4210
    %v4391 = vpop.f32.mrf.mxu0
    %v4392 = vadd.f32 %v3859, %v4391
    %v4393 = vpop.f32.mrf.mxu0
    %v4394 = vadd.f32 %v3863, %v4393
    %4395 = vmatprep.mubr.f32.mxu0 0.0
    %4396 = vmatmul.mubr.f32.gmra.mxu0 %v4224
    %v4397 = vpop.f32.mrf.mxu0
    %v4398 = vadd.f32 %v3859, %v4397
    %v4399 = vpop.f32.mrf.mxu0
    %v4400 = vadd.f32 %v3863, %v4399
    %4401 = vdwg.mxu0
    %v4402 = vxor.u32 %v4308, 2147483648
    %v4403 = vxor.u32 %v4314, 2147483648
    %v4404 = vxor.u32 %v4320, 2147483648
    %v4405 = vxor.u32 %v4326, 2147483648
    %v4406 = vxor.u32 %v4332, 2147483648
    %v4407 = vxor.u32 %v4338, 2147483648
    %v4408 = vxor.u32 %v4344, 2147483648
    %v4409 = vxor.u32 %v4350, 2147483648
    %v4410 = vxor.u32 %v4356, 2147483648
    %v4411 = vxor.u32 %v4362, 2147483648
    %v4412 = vxor.u32 %v4368, 2147483648
    %v4413 = vxor.u32 %v4374, 2147483648
    %v4414 = vxor.u32 %v4380, 2147483648
    %v4415 = vxor.u32 %v4386, 2147483648
    %v4416 = vxor.u32 %v4392, 2147483648
    %v4417 = vxor.u32 %v4398, 2147483648
    %v4418 = vmul.f32 %v4402, 1.442695
    %v4419 = vpow.pop %v4418
    %v4420 = vmul.f32 %v4403, 1.442695
    %v4421 = vpow.pop %v4420
    %v4422 = vmul.f32 %v4404, 1.442695
    %v4423 = vpow.pop %v4422
    %v4424 = vmul.f32 %v4405, 1.442695
    %v4425 = vpow.pop %v4424
    %v4426 = vmul.f32 %v4406, 1.442695
    %v4427 = vpow.pop %v4426
    %v4428 = vmul.f32 %v4407, 1.442695
    %v4429 = vpow.pop %v4428
    %v4430 = vmul.f32 %v4408, 1.442695
    %v4431 = vpow.pop %v4430
    %v4432 = vmul.f32 %v4409, 1.442695
    %v4433 = vpow.pop %v4432
    %v4434 = vmul.f32 %v4410, 1.442695
    %v4435 = vpow.pop %v4434
    %v4436 = vmul.f32 %v4411, 1.442695
    %v4437 = vpow.pop %v4436
    %v4438 = vmul.f32 %v4412, 1.442695
    %v4439 = vpow.pop %v4438
    %v4440 = vmul.f32 %v4413, 1.442695
    %v4441 = vpow.pop %v4440
    %v4442 = vmul.f32 %v4414, 1.442695
    %v4443 = vpow.pop %v4442
    %v4444 = vmul.f32 %v4415, 1.442695
    %v4445 = vpow.pop %v4444
    %v4446 = vmul.f32 %v4416, 1.442695
    %v4447 = vpow.pop %v4446
    %v4448 = vmul.f32 %v4417, 1.442695
    %v4449 = vpow.pop %v4448
    %v4450 = vadd.f32 %v4419, 1.0
    %v4451 = vadd.f32 %v4421, 1.0
    %v4452 = vadd.f32 %v4423, 1.0
    %v4453 = vadd.f32 %v4425, 1.0
    %v4454 = vadd.f32 %v4427, 1.0
    %v4455 = vadd.f32 %v4429, 1.0
    %v4456 = vadd.f32 %v4431, 1.0
    %v4457 = vadd.f32 %v4433, 1.0
    %v4458 = vadd.f32 %v4435, 1.0
    %v4459 = vadd.f32 %v4437, 1.0
    %v4460 = vadd.f32 %v4439, 1.0
    %v4461 = vadd.f32 %v4441, 1.0
    %v4462 = vadd.f32 %v4443, 1.0
    %v4463 = vadd.f32 %v4445, 1.0
    %v4464 = vadd.f32 %v4447, 1.0
    %v4465 = vadd.f32 %v4449, 1.0
    %v4466 = vrcp.pop %v4450
    %v4467 = vmul.f32 1.0, %v4466
    %v4468 = vrcp.pop %v4451
    %v4469 = vmul.f32 1.0, %v4468
    %v4470 = vrcp.pop %v4452
    %v4471 = vmul.f32 1.0, %v4470
    %v4472 = vrcp.pop %v4453
    %v4473 = vmul.f32 1.0, %v4472
    %v4474 = vrcp.pop %v4454
    %v4475 = vmul.f32 1.0, %v4474
    %v4476 = vrcp.pop %v4455
    %v4477 = vmul.f32 1.0, %v4476
    %v4478 = vrcp.pop %v4456
    %v4479 = vmul.f32 1.0, %v4478
    %v4480 = vrcp.pop %v4457
    %v4481 = vmul.f32 1.0, %v4480
    %v4482 = vrcp.pop %v4458
    %v4483 = vmul.f32 1.0, %v4482
    %v4484 = vrcp.pop %v4459
    %v4485 = vmul.f32 1.0, %v4484
    %v4486 = vrcp.pop %v4460
    %v4487 = vmul.f32 1.0, %v4486
    %v4488 = vrcp.pop %v4461
    %v4489 = vmul.f32 1.0, %v4488
    %v4490 = vrcp.pop %v4462
    %v4491 = vmul.f32 1.0, %v4490
    %v4492 = vrcp.pop %v4463
    %v4493 = vmul.f32 1.0, %v4492
    %v4494 = vrcp.pop %v4464
    %v4495 = vmul.f32 1.0, %v4494
    %v4496 = vrcp.pop %v4465
    %v4497 = vmul.f32 1.0, %v4496
    %v4498 = vmax.f32 %v4310, 0.0
    %v4499 = vmax.f32 %v4316, 0.0
    %v4500 = vmax.f32 %v4322, 0.0
    %v4501 = vmax.f32 %v4328, 0.0
    %v4502 = vmax.f32 %v4334, 0.0
    %v4503 = vmax.f32 %v4340, 0.0
    %v4504 = vmax.f32 %v4346, 0.0
    %v4505 = vmax.f32 %v4352, 0.0
    %v4506 = vmax.f32 %v4358, 0.0
    %v4507 = vmax.f32 %v4364, 0.0
    %v4508 = vmax.f32 %v4370, 0.0
    %v4509 = vmax.f32 %v4376, 0.0
    %v4510 = vmax.f32 %v4382, 0.0
    %v4511 = vmax.f32 %v4388, 0.0
    %v4512 = vmax.f32 %v4394, 0.0
    %v4513 = vmax.f32 %v4400, 0.0
    %v4514 = vmul.f32 %v4467, %v4498
    %v4515 = vmul.f32 %v4469, %v4499
    %v4516 = vmul.f32 %v4471, %v4500
    %v4517 = vmul.f32 %v4473, %v4501
    %v4518 = vmul.f32 %v4475, %v4502
    %v4519 = vmul.f32 %v4477, %v4503
    %v4520 = vmul.f32 %v4479, %v4504
    %v4521 = vmul.f32 %v4481, %v4505
    %v4522 = vmul.f32 %v4483, %v4506
    %v4523 = vmul.f32 %v4485, %v4507
    %v4524 = vmul.f32 %v4487, %v4508
    %v4525 = vmul.f32 %v4489, %v4509
    %v4526 = vmul.f32 %v4491, %v4510
    %v4527 = vmul.f32 %v4493, %v4511
    %v4528 = vmul.f32 %v4495, %v4512
    %v4529 = vmul.f32 %v4497, %v4513
    %v4530 = vsub.f32 1.0, %v4467
    %v4531 = vsub.f32 1.0, %v4469
    %v4532 = vsub.f32 1.0, %v4471
    %v4533 = vsub.f32 1.0, %v4473
    %v4534 = vsub.f32 1.0, %v4475
    %v4535 = vsub.f32 1.0, %v4477
    %v4536 = vsub.f32 1.0, %v4479
    %v4537 = vsub.f32 1.0, %v4481
    %v4538 = vsub.f32 1.0, %v4483
    %v4539 = vsub.f32 1.0, %v4485
    %v4540 = vsub.f32 1.0, %v4487
    %v4541 = vsub.f32 1.0, %v4489
    %v4542 = vsub.f32 1.0, %v4491
    %v4543 = vsub.f32 1.0, %v4493
    %v4544 = vsub.f32 1.0, %v4495
    %v4545 = vsub.f32 1.0, %v4497
    %v4546 = vmul.f32 %v4530, %v4014
    %v4547 = vmul.f32 %v4531, %v4028
    %v4548 = vmul.f32 %v4532, %v4042
    %v4549 = vmul.f32 %v4533, %v4056
    %v4550 = vmul.f32 %v4534, %v4070
    %v4551 = vmul.f32 %v4535, %v4084
    %v4552 = vmul.f32 %v4536, %v4098
    %v4553 = vmul.f32 %v4537, %v4112
    %v4554 = vmul.f32 %v4538, %v4126
    %v4555 = vmul.f32 %v4539, %v4140
    %v4556 = vmul.f32 %v4540, %v4154
    %v4557 = vmul.f32 %v4541, %v4168
    %v4558 = vmul.f32 %v4542, %v4182
    %v4559 = vmul.f32 %v4543, %v4196
    %v4560 = vmul.f32 %v4544, %v4210
    %v4561 = vmul.f32 %v4545, %v4224
    %v4562 = vadd.f32 %v4514, %v4546
    %v4563 = vadd.f32 %v4515, %v4547
    %v4564 = vadd.f32 %v4516, %v4548
    %v4565 = vadd.f32 %v4517, %v4549
    %v4566 = vadd.f32 %v4518, %v4550
    %v4567 = vadd.f32 %v4519, %v4551
    %v4568 = vadd.f32 %v4520, %v4552
    %v4569 = vadd.f32 %v4521, %v4553
    %v4570 = vadd.f32 %v4522, %v4554
    %v4571 = vadd.f32 %v4523, %v4555
    %v4572 = vadd.f32 %v4524, %v4556
    %v4573 = vadd.f32 %v4525, %v4557
    %v4574 = vadd.f32 %v4526, %v4558
    %v4575 = vadd.f32 %v4527, %v4559
    %v4576 = vadd.f32 %v4528, %v4560
    %v4577 = vadd.f32 %v4529, %v4561
    %4578 = vst [vmem:[#allocation2] sm:$0xff] %v4562
    %4579 = vst [vmem:[#allocation2 + $0x8] sm:$0xff] %v4563
    %4580 = vst [vmem:[#allocation2 + $0x10] sm:$0xff] %v4564
    %4581 = vst [vmem:[#allocation2 + $0x18] sm:$0xff] %v4565
    %4582 = vst [vmem:[#allocation2 + $0x20] sm:$0xff] %v4566
    %4583 = vst [vmem:[#allocation2 + $0x28] sm:$0xff] %v4567
    %4584 = vst [vmem:[#allocation2 + $0x30] sm:$0xff] %v4568
    %4585 = vst [vmem:[#allocation2 + $0x38] sm:$0xff] %v4569
    %4586 = vst [vmem:[#allocation2 + $0x40] sm:$0xff] %v4570
    %4587 = vst [vmem:[#allocation2 + $0x48] sm:$0xff] %v4571
    %4588 = vst [vmem:[#allocation2 + $0x50] sm:$0xff] %v4572
    %4589 = vst [vmem:[#allocation2 + $0x58] sm:$0xff] %v4573
    %4590 = vst [vmem:[#allocation2 + $0x60] sm:$0xff] %v4574
    %4591 = vst [vmem:[#allocation2 + $0x68] sm:$0xff] %v4575
    %4592 = vst [vmem:[#allocation2 + $0x70] sm:$0xff] %v4576
    %4593 = vst [vmem:[#allocation2 + $0x78] sm:$0xff] %v4577
    // Predicated region
    $region26: #{tpu_custom_call.1} parent=1 // pred_check
      _
    $region27: #{tpu_custom_call.1} parent=1 // pred_check_branch
      %4595 = sbr.rel (0) target = $region29
    $region28: #{tpu_custom_call.1} parent=1 // pred_region
      %s4597 = ssub.s32 2048, 2048
      %4598 = vsyncadd [#allocation3], %s4597
      %s4599 = sshll.u32 [#allocation2], 4
      %s4600 = int_to_ptr.vmem [resolvable:$true] %s4599
      %4605 = dma.vmem_to_hbm [thread:$0]  %s4600, 2048, %s6, [#allocation3], 128, 128, 8
    $region29: #{tpu_custom_call.1} parent=1 // pred_fallthru
      _
    // Predicated region
    $region30: #{tpu_custom_call.1} parent=1 // pred_check
      _
    $region31: #{tpu_custom_call.1} parent=1 // pred_check_branch
      %4607 = sbr.rel (0) target = $region33
    $region32: #{tpu_custom_call.1} parent=1 // pred_region
      %4608 = dma.done [#allocation3], 2048
    $region33: #{tpu_custom_call.1} parent=1 // pred_fallthru
      _
    %4609 = vsyncpa [#allocation3], 1

</llo_original>
